<compile_context>
chip_gen: v6e
topology: v6e:2x2x1
jax: 0.10.0
libtpu: 0.0.40
codegen_flags: <defaults>
</compile_context>

<pallas_src>
import jax
import jax.numpy as jnp
from jax.experimental import pallas as pl
from jax.experimental.pallas import tpu as pltpu


# ----------------------------- fused Pallas kernel -----------------------------

def _decoder_fused_kernel(v_ref, wlin_ref, blin_ref, a1_ref, b1_ref,
                          a2_ref, b2_ref, w3_ref, b3_ref, o_ref,
                          u_scr, p2_scr):
    f32 = jnp.float32
    bsz = u_scr.shape[0]

    # ---- stage 0: linear(128->512) + tanh as ONE GEMM [B,128] x [128,1024].
    #      The aligned slice y*128:(y+1)*128 of the result is exactly the
    #      zero-dilated conv1 input row 2+2y (dilation + NCHW->row-flat
    #      permutation folded into wlin; dilated/pad lanes have exactly-zero
    #      weight AND bias so tanh(0)==0 keeps them zero).
    u_scr[...] = jnp.zeros(u_scr.shape, f32)                        # [B, 18, 128]
    h = jnp.tanh(jnp.dot(v_ref[...], wlin_ref[...],
                         preferred_element_type=f32) + blin_ref[...])   # [B, 1024]
    for b in range(bsz):
        for y in range(8):
            u_scr[b:b + 1, 2 + 2 * y, :] = h[b:b + 1, 128 * y:128 * (y + 1)]

    def rows(scr, ky):                      # [B,16,128] window -> [B*16,128]
        return scr[:, ky:ky + 16, :].reshape(bsz * 16, 128)

    # ---- stage 1: conv1 = ConvTranspose2d(8,8,3,stride=2), relu, crop[:-1,:-1]
    #      -> three row-shifted banded GEMMs at M = B*16 (batch stacked).
    y1 = jnp.dot(rows(u_scr, 0), a1_ref[0, :, :], preferred_element_type=f32)
    y1 = y1 + jnp.dot(rows(u_scr, 1), a1_ref[1, :, :], preferred_element_type=f32)
    y1 = y1 + jnp.dot(rows(u_scr, 2), a1_ref[2, :, :], preferred_element_type=f32)
    y1 = jnp.maximum(y1 + b1_ref[...], 0.0)                         # [B*16, 128]

    # ---- stage 2: conv2 = ConvTranspose2d(8,8,3,stride=1,padding=1), relu, +res.
    #      Only the two H-padding rows are zeroed; data rows are overwritten.
    zrow = jnp.zeros((bsz, 128), f32)
    p2_scr[:, 0, :] = zrow
    p2_scr[:, 17, :] = zrow
    p2_scr[:, 1:17, :] = y1.reshape(bsz, 16, 128)
    y2 = jnp.dot(rows(p2_scr, 0), a2_ref[0, :, :], preferred_element_type=f32)
    y2 = y2 + jnp.dot(y1, a2_ref[1, :, :], preferred_element_type=f32)
    y2 = y2 + jnp.dot(rows(p2_scr, 2), a2_ref[2, :, :], preferred_element_type=f32)
    y2 = jnp.maximum(y2 + b2_ref[...], 0.0) + y1                    # [B*16, 128]

    # ---- stage 3: conv3 = ConvTranspose2d(8,3,(10,7),stride=(10,7)), relu.
    #      One block-diagonal GEMM per output channel (keeps every output
    #      store lane-dense and vreg-aligned); the column ordering makes the
    #      wrapper NCHW reshape a pure bitcast.
    for oc in range(3):
        y3 = jnp.dot(y2, w3_ref[oc, :, :],
                     preferred_element_type=f32) + b3_ref[oc, :, :]
        y3 = jnp.maximum(y3, 0.0)                                   # [B*16, 1120]
        for b in range(bsz):
            o_ref[b, oc, :, :] = y3[b * 16:(b + 1) * 16, :]


def decoder_forward(v, prep):
    wlin, blin, a1, b1row, a2, b2row, w3m, b3c = prep
    bsz = v.shape[0]
    out = pl.pallas_call(
        _decoder_fused_kernel,
        grid=(1,),
        out_shape=jax.ShapeDtypeStruct((bsz, 3, 16, 1120), jnp.float32),
        in_specs=[
            pl.BlockSpec((bsz, 128), lambda i: (0, 0)),          # v (whole batch)
            pl.BlockSpec((128, 1024), lambda i: (0, 0)),         # fused linear W
            pl.BlockSpec((1, 1024), lambda i: (0, 0)),           # fused linear b
            pl.BlockSpec((3, 128, 128), lambda i: (0, 0, 0)),    # conv1 band mats
            pl.BlockSpec((1, 128), lambda i: (0, 0)),            # conv1 bias row
            pl.BlockSpec((3, 128, 128), lambda i: (0, 0, 0)),    # conv2 band mats
            pl.BlockSpec((1, 128), lambda i: (0, 0)),            # conv2 bias row
            pl.BlockSpec((3, 128, 1120), lambda i: (0, 0, 0)),   # conv3 per-oc GEMM
            pl.BlockSpec((3, 1, 1), lambda i: (0, 0, 0)),        # conv3 bias
        ],
        out_specs=pl.BlockSpec((bsz, 3, 16, 1120), lambda i: (0, 0, 0, 0)),
        scratch_shapes=[pltpu.VMEM((bsz, 18, 128), jnp.float32),  # dilated conv1 in
                        pltpu.VMEM((bsz, 18, 128), jnp.float32)], # H-padded conv2 in
        compiler_params=pltpu.CompilerParams(
            dimension_semantics=("arbitrary",)),
    )(v, wlin, blin, a1, b1row, a2, b2row, w3m, b3c)
    # (b, oc, iy, ky*112 + 7*ix + kx) is already NCHW memory order -> bitcast reshape.
    return out.reshape(bsz, 3, 160, 112)


# ---------------- one-time parameter preparation (hoisted out of forward) ----------------

def prepare_params(params):
    wl, bl, w1, b1, w2, b2, w3, b3 = params
    f32 = jnp.float32

    # linear: fold NCHW->row-flat permutation + stride-2 zero-dilation of the
    # conv1 input into ONE [128, 8*128] weight matrix, columns ordered
    # (output row y, dilated x position q, channel c).  Dilated/pad positions
    # get exactly-zero weight AND bias so tanh(0)==0 keeps them zero.
    wl_r = jnp.transpose(wl.reshape(128, 8, 8, 8), (2, 0, 3, 1))    # [y, in, x, c]
    wlin4 = jnp.zeros((8, 128, 16, 8), f32).at[:, :, 0:15:2, :].set(wl_r)
    wlin = jnp.transpose(wlin4, (1, 0, 2, 3)).reshape(128, 8 * 128)  # [in,(y,q,c)]
    bl_r = jnp.transpose(bl.reshape(8, 8, 8), (1, 2, 0))            # [y, x, c]
    blin = jnp.zeros((8, 16, 8), f32).at[:, 0:15:2, :].set(bl_r).reshape(1, 8 * 128)

    # conv1 / conv2: banded "row GEMM" matrices, one per kernel row ky.  Width
    # padding of both convs is folded into the bands so LHS rows are 128-lane
    # dense (16 x-positions x 8 channels).
    kxs = jnp.arange(3)
    oxs = jnp.arange(16)
    w1f = jnp.transpose(jnp.flip(w1, axis=(2, 3)), (2, 3, 0, 1))    # [ky, kx, ic, oc]
    t1 = oxs[None, None, :] + kxs[None, :, None] - 2                # dilated-x tap
    ind1 = ((jnp.arange(16)[:, None, None] == t1) &
            (t1 >= 0) & (t1 <= 14)).astype(f32)                     # [16, 3, 16]
    a1 = jnp.einsum('jkx,ykio->yjixo', ind1, w1f).reshape(3, 128, 128)

    w2f = jnp.transpose(jnp.flip(w2, axis=(2, 3)), (2, 3, 0, 1))    # [ky, kx, ic, oc]
    t2 = oxs[None, None, :] + kxs[None, :, None] - 1
    ind2 = ((jnp.arange(16)[:, None, None] == t2) &
            (t2 >= 0) & (t2 <= 15)).astype(f32)                     # [16, 3, 16]
    a2 = jnp.einsum('jkx,ykio->yjixo', ind2, w2f).reshape(3, 128, 128)

    b1row = jnp.tile(b1, 16).reshape(1, 128)
    b2row = jnp.tile(b2, 16).reshape(1, 128)

    # conv3 (stride == kernel): per-output-channel block-diagonal GEMM matrix.
    w3m = jnp.einsum('coyk,ij->oicyjk', w3,
                     jnp.eye(16, dtype=f32)).reshape(3, 128, 1120)
    b3c = b3.reshape(3, 1, 1)

    return (wlin, blin, a1, b1row, a2, b2row, w3m, b3c)


# ---------------- independent reference (direct ConvTranspose2d semantics) ----------------

def _conv_transpose2d_ref(x, w, b, stride, padding):
    # x: [B, IC, H, W];  w: [IC, OC, KH, KW]  (PyTorch ConvTranspose2d layout)
    bsz, _, H, W = x.shape
    _, OC, KH, KW = w.shape
    sh, sw = stride
    ph, pw = padding
    Hf = (H - 1) * sh + KH
    Wf = (W - 1) * sw + KW
    contrib = jnp.einsum('bihw,iokl->boklhw', x, w,
                         precision=jax.lax.Precision.HIGHEST)
    out = jnp.zeros((bsz, OC, Hf, Wf), jnp.float32)
    for ky in range(KH):
        for kx in range(KW):
            out = out.at[:, :, ky:ky + sh * (H - 1) + 1:sh,
                               kx:kx + sw * (W - 1) + 1:sw].add(contrib[:, :, ky, kx])
    return out[:, :, ph:Hf - ph, pw:Wf - pw] + b[None, :, None, None]


def reference_forward(v, params):
    wl, bl, w1, b1, w2, b2, w3, b3 = params
    h = jnp.tanh(jnp.dot(v, wl, precision=jax.lax.Precision.HIGHEST) + bl[None, :])
    x = h.reshape(-1, 8, 8, 8)                                       # NCHW
    y = jax.nn.relu(_conv_transpose2d_ref(x, w1, b1, (2, 2), (0, 0)))[:, :, :-1, :-1]
    y = jax.nn.relu(_conv_transpose2d_ref(y, w2, b2, (1, 1), (1, 1))) + y
    y = jax.nn.relu(_conv_transpose2d_ref(y, w3, b3, (10, 7), (0, 0)))
    return y


# ---------------- deterministic parameter init (mirrors the PyTorch module) ----------------

def init_params(key):
    ks = jax.random.split(key, 8)
    wl = jax.random.normal(ks[0], (128, 512), jnp.float32) * 0.2    # linear (in, out)
    bl = jax.random.uniform(ks[1], (512,), jnp.float32, minval=-0.08, maxval=0.08)
    w1 = jax.random.normal(ks[2], (8, 8, 3, 3), jnp.float32) * 0.2  # [IC, OC, kh, kw]
    b1 = jax.random.uniform(ks[3], (8,), jnp.float32, minval=-0.1, maxval=0.1)
    w2 = jax.random.normal(ks[4], (8, 8, 3, 3), jnp.float32) * 0.2
    b2 = jax.random.uniform(ks[5], (8,), jnp.float32, minval=-0.1, maxval=0.1)
    w3 = jax.random.normal(ks[6], (8, 3, 10, 7), jnp.float32) * 0.2
    b3 = jax.random.uniform(ks[7], (3,), jnp.float32, minval=-0.1, maxval=0.1)
    return (wl, bl, w1, b1, w2, b2, w3, b3)


if __name__ == "__main__":
    key = jax.random.PRNGKey(0)
    pkey, xkey = jax.random.split(key)
    params = init_params(pkey)
    prep = prepare_params(params)        # one-time weight preprocessing (hoisted)

    B = 2
    v = jax.random.normal(xkey, (B, 128), jnp.float32)

    fwd = jax.jit(lambda vv: decoder_forward(vv, prep))
    out = jax.block_until_ready(fwd(v))

    ref = jax.jit(lambda vv: reference_forward(vv, params))(v)
    assert out.shape == (B, 3, 160, 112), out.shape
    assert bool(jnp.all(jnp.isfinite(out)))
    # Tolerance budget (per review): kernel matmuls run at the default TPU MXU
    # precision (bf16 inputs, f32 accumulation, K<=128) while the reference
    # uses Precision.HIGHEST; with O(1) activations this keeps |err| << 2e-3.
    assert bool(jnp.allclose(out, ref, atol=2e-3, rtol=2e-3)), float(
        jnp.max(jnp.abs(out - ref)))
    print("KERNEL_OK")
</pallas_src>

<mosaic_0001>
module attributes {stable_mosaic.version = 11 : i64} {
  func.func @_decoder_fused_kernel(%arg0: i32, %arg1: memref<2x128xf32, #tpu.memory_space<vmem>>, %arg2: memref<128x1024xf32, #tpu.memory_space<vmem>>, %arg3: memref<1x1024xf32, #tpu.memory_space<vmem>>, %arg4: memref<3x128x128xf32, #tpu.memory_space<vmem>>, %arg5: memref<1x128xf32, #tpu.memory_space<vmem>>, %arg6: memref<3x128x128xf32, #tpu.memory_space<vmem>>, %arg7: memref<1x128xf32, #tpu.memory_space<vmem>>, %arg8: memref<3x128x1120xf32, #tpu.memory_space<vmem>>, %arg9: memref<3x1x1xf32, #tpu.memory_space<vmem>>, %arg10: memref<2x3x16x1120xf32, #tpu.memory_space<vmem>>, %arg11: memref<2x18x128xf32, #tpu.memory_space<vmem>>, %arg12: memref<2x18x128xf32, #tpu.memory_space<vmem>>) attributes {dimension_semantics = [#tpu.dimension_semantics<arbitrary>], iteration_bounds = array<i64: 1>, scalar_prefetch = 0 : i64, scratch_operands = 2 : i64, tpu.core_type = #tpu.core_type<tc>, window_params = [{pipeline_mode = #tpu.pipeline_mode<synchronous>, transform_indices = @transform_0, window_bounds = array<i64: 2, 128>}, {pipeline_mode = #tpu.pipeline_mode<synchronous>, transform_indices = @transform_1, window_bounds = array<i64: 128, 1024>}, {pipeline_mode = #tpu.pipeline_mode<synchronous>, transform_indices = @transform_2, window_bounds = array<i64: 1, 1024>}, {pipeline_mode = #tpu.pipeline_mode<synchronous>, transform_indices = @transform_3, window_bounds = array<i64: 3, 128, 128>}, {pipeline_mode = #tpu.pipeline_mode<synchronous>, transform_indices = @transform_4, window_bounds = array<i64: 1, 128>}, {pipeline_mode = #tpu.pipeline_mode<synchronous>, transform_indices = @transform_5, window_bounds = array<i64: 3, 128, 128>}, {pipeline_mode = #tpu.pipeline_mode<synchronous>, transform_indices = @transform_6, window_bounds = array<i64: 1, 128>}, {pipeline_mode = #tpu.pipeline_mode<synchronous>, transform_indices = @transform_7, window_bounds = array<i64: 3, 128, 1120>}, {pipeline_mode = #tpu.pipeline_mode<synchronous>, transform_indices = @transform_8, window_bounds = array<i64: 3, 1, 1>}, {pipeline_mode = #tpu.pipeline_mode<synchronous>, transform_indices = @transform_9, window_bounds = array<i64: 2, 3, 16, 1120>}]} {
    %cst = arith.constant 0.000000e+00 : f32
    %0 = vector.broadcast %cst : f32 to vector<2x18x128xf32>
    %c0 = arith.constant 0 : index
    %c0_0 = arith.constant 0 : index
    %c0_1 = arith.constant 0 : index
    %1 = vector.load %arg11[%c0, %c0_0, %c0_1] : memref<2x18x128xf32, #tpu.memory_space<vmem>>, vector<2x18x128xf32>
    tpu.vector_store %arg11[%c0, %c0_0, %c0_1], %0 {strides = array<i32>} : memref<2x18x128xf32, #tpu.memory_space<vmem>>, vector<2x18x128xf32>,
    %c0_2 = arith.constant 0 : index
    %c0_3 = arith.constant 0 : index
    %2 = vector.load %arg1[%c0_2, %c0_3] : memref<2x128xf32, #tpu.memory_space<vmem>>, vector<2x128xf32>
    %c0_4 = arith.constant 0 : index
    %c0_5 = arith.constant 0 : index
    %3 = vector.load %arg2[%c0_4, %c0_5] : memref<128x1024xf32, #tpu.memory_space<vmem>>, vector<128x1024xf32>
    %cst_6 = arith.constant dense<0.000000e+00> : vector<2x1024xf32>
    %4 = tpu.matmul %2, %3, %cst_6 {dimension_numbers = #tpu.dot_dimension_numbers<[1], [0], [0], [1], [0, 0, 1, 1], [], []>} : vector<2x128xf32>, vector<128x1024xf32>, vector<2x1024xf32> -> vector<2x1024xf32>
    %c0_7 = arith.constant 0 : index
    %c0_8 = arith.constant 0 : index
    %5 = vector.load %arg3[%c0_7, %c0_8] : memref<1x1024xf32, #tpu.memory_space<vmem>>, vector<1x1024xf32>
    %6 = vector.broadcast %5 : vector<1x1024xf32> to vector<2x1024xf32>
    %7 = arith.addf %4, %6 : vector<2x1024xf32>
    %8 = math.tanh %7 : vector<2x1024xf32>
    %9 = vector.extract_strided_slice %8 {offsets = [0, 0], sizes = [1, 128], strides = [1, 1]} : vector<2x1024xf32> to vector<1x128xf32>
    %c0_9 = arith.constant 0 : index
    %c2 = arith.constant 2 : index
    %c0_10 = arith.constant 0 : index
    %10 = vector.load %arg11[%c0_9, %c2, %c0_10] : memref<2x18x128xf32, #tpu.memory_space<vmem>>, vector<1x1x128xf32>
    %11 = vector.shape_cast %10 : vector<1x1x128xf32> to vector<1x128xf32>
    %12 = vector.shape_cast %9 : vector<1x128xf32> to vector<1x1x128xf32>
    tpu.vector_store %arg11[%c0_9, %c2, %c0_10], %12 {strides = array<i32>} : memref<2x18x128xf32, #tpu.memory_space<vmem>>, vector<1x1x128xf32>,
    %13 = vector.extract_strided_slice %8 {offsets = [0, 128], sizes = [1, 128], strides = [1, 1]} : vector<2x1024xf32> to vector<1x128xf32>
    %c0_11 = arith.constant 0 : index
    %c4 = arith.constant 4 : index
    %c0_12 = arith.constant 0 : index
    %14 = vector.load %arg11[%c0_11, %c4, %c0_12] : memref<2x18x128xf32, #tpu.memory_space<vmem>>, vector<1x1x128xf32>
    %15 = vector.shape_cast %14 : vector<1x1x128xf32> to vector<1x128xf32>
    %16 = vector.shape_cast %13 : vector<1x128xf32> to vector<1x1x128xf32>
    tpu.vector_store %arg11[%c0_11, %c4, %c0_12], %16 {strides = array<i32>} : memref<2x18x128xf32, #tpu.memory_space<vmem>>, vector<1x1x128xf32>,
    %17 = vector.extract_strided_slice %8 {offsets = [0, 256], sizes = [1, 128], strides = [1, 1]} : vector<2x1024xf32> to vector<1x128xf32>
    %c0_13 = arith.constant 0 : index
    %c6 = arith.constant 6 : index
    %c0_14 = arith.constant 0 : index
    %18 = vector.load %arg11[%c0_13, %c6, %c0_14] : memref<2x18x128xf32, #tpu.memory_space<vmem>>, vector<1x1x128xf32>
    %19 = vector.shape_cast %18 : vector<1x1x128xf32> to vector<1x128xf32>
    %20 = vector.shape_cast %17 : vector<1x128xf32> to vector<1x1x128xf32>
    tpu.vector_store %arg11[%c0_13, %c6, %c0_14], %20 {strides = array<i32>} : memref<2x18x128xf32, #tpu.memory_space<vmem>>, vector<1x1x128xf32>,
    %21 = vector.extract_strided_slice %8 {offsets = [0, 384], sizes = [1, 128], strides = [1, 1]} : vector<2x1024xf32> to vector<1x128xf32>
    %c0_15 = arith.constant 0 : index
    %c8 = arith.constant 8 : index
    %c0_16 = arith.constant 0 : index
    %22 = vector.load %arg11[%c0_15, %c8, %c0_16] : memref<2x18x128xf32, #tpu.memory_space<vmem>>, vector<1x1x128xf32>
    %23 = vector.shape_cast %22 : vector<1x1x128xf32> to vector<1x128xf32>
    %24 = vector.shape_cast %21 : vector<1x128xf32> to vector<1x1x128xf32>
    tpu.vector_store %arg11[%c0_15, %c8, %c0_16], %24 {strides = array<i32>} : memref<2x18x128xf32, #tpu.memory_space<vmem>>, vector<1x1x128xf32>,
    %25 = vector.extract_strided_slice %8 {offsets = [0, 512], sizes = [1, 128], strides = [1, 1]} : vector<2x1024xf32> to vector<1x128xf32>
    %c0_17 = arith.constant 0 : index
    %c10 = arith.constant 10 : index
    %c0_18 = arith.constant 0 : index
    %26 = vector.load %arg11[%c0_17, %c10, %c0_18] : memref<2x18x128xf32, #tpu.memory_space<vmem>>, vector<1x1x128xf32>
    %27 = vector.shape_cast %26 : vector<1x1x128xf32> to vector<1x128xf32>
    %28 = vector.shape_cast %25 : vector<1x128xf32> to vector<1x1x128xf32>
    tpu.vector_store %arg11[%c0_17, %c10, %c0_18], %28 {strides = array<i32>} : memref<2x18x128xf32, #tpu.memory_space<vmem>>, vector<1x1x128xf32>,
    %29 = vector.extract_strided_slice %8 {offsets = [0, 640], sizes = [1, 128], strides = [1, 1]} : vector<2x1024xf32> to vector<1x128xf32>
    %c0_19 = arith.constant 0 : index
    %c12 = arith.constant 12 : index
    %c0_20 = arith.constant 0 : index
    %30 = vector.load %arg11[%c0_19, %c12, %c0_20] : memref<2x18x128xf32, #tpu.memory_space<vmem>>, vector<1x1x128xf32>
    %31 = vector.shape_cast %30 : vector<1x1x128xf32> to vector<1x128xf32>
    %32 = vector.shape_cast %29 : vector<1x128xf32> to vector<1x1x128xf32>
    tpu.vector_store %arg11[%c0_19, %c12, %c0_20], %32 {strides = array<i32>} : memref<2x18x128xf32, #tpu.memory_space<vmem>>, vector<1x1x128xf32>,
    %33 = vector.extract_strided_slice %8 {offsets = [0, 768], sizes = [1, 128], strides = [1, 1]} : vector<2x1024xf32> to vector<1x128xf32>
    %c0_21 = arith.constant 0 : index
    %c14 = arith.constant 14 : index
    %c0_22 = arith.constant 0 : index
    %34 = vector.load %arg11[%c0_21, %c14, %c0_22] : memref<2x18x128xf32, #tpu.memory_space<vmem>>, vector<1x1x128xf32>
    %35 = vector.shape_cast %34 : vector<1x1x128xf32> to vector<1x128xf32>
    %36 = vector.shape_cast %33 : vector<1x128xf32> to vector<1x1x128xf32>
    tpu.vector_store %arg11[%c0_21, %c14, %c0_22], %36 {strides = array<i32>} : memref<2x18x128xf32, #tpu.memory_space<vmem>>, vector<1x1x128xf32>,
    %37 = vector.extract_strided_slice %8 {offsets = [0, 896], sizes = [1, 128], strides = [1, 1]} : vector<2x1024xf32> to vector<1x128xf32>
    %c0_23 = arith.constant 0 : index
    %c16 = arith.constant 16 : index
    %c0_24 = arith.constant 0 : index
    %38 = vector.load %arg11[%c0_23, %c16, %c0_24] : memref<2x18x128xf32, #tpu.memory_space<vmem>>, vector<1x1x128xf32>
    %39 = vector.shape_cast %38 : vector<1x1x128xf32> to vector<1x128xf32>
    %40 = vector.shape_cast %37 : vector<1x128xf32> to vector<1x1x128xf32>
    tpu.vector_store %arg11[%c0_23, %c16, %c0_24], %40 {strides = array<i32>} : memref<2x18x128xf32, #tpu.memory_space<vmem>>, vector<1x1x128xf32>,
    %41 = vector.extract_strided_slice %8 {offsets = [1, 0], sizes = [1, 128], strides = [1, 1]} : vector<2x1024xf32> to vector<1x128xf32>
    %c1 = arith.constant 1 : index
    %c2_25 = arith.constant 2 : index
    %c0_26 = arith.constant 0 : index
    %42 = vector.load %arg11[%c1, %c2_25, %c0_26] : memref<2x18x128xf32, #tpu.memory_space<vmem>>, vector<1x1x128xf32>
    %43 = vector.shape_cast %42 : vector<1x1x128xf32> to vector<1x128xf32>
    %44 = vector.shape_cast %41 : vector<1x128xf32> to vector<1x1x128xf32>
    tpu.vector_store %arg11[%c1, %c2_25, %c0_26], %44 {strides = array<i32>} : memref<2x18x128xf32, #tpu.memory_space<vmem>>, vector<1x1x128xf32>,
    %45 = vector.extract_strided_slice %8 {offsets = [1, 128], sizes = [1, 128], strides = [1, 1]} : vector<2x1024xf32> to vector<1x128xf32>
    %c1_27 = arith.constant 1 : index
    %c4_28 = arith.constant 4 : index
    %c0_29 = arith.constant 0 : index
    %46 = vector.load %arg11[%c1_27, %c4_28, %c0_29] : memref<2x18x128xf32, #tpu.memory_space<vmem>>, vector<1x1x128xf32>
    %47 = vector.shape_cast %46 : vector<1x1x128xf32> to vector<1x128xf32>
    %48 = vector.shape_cast %45 : vector<1x128xf32> to vector<1x1x128xf32>
    tpu.vector_store %arg11[%c1_27, %c4_28, %c0_29], %48 {strides = array<i32>} : memref<2x18x128xf32, #tpu.memory_space<vmem>>, vector<1x1x128xf32>,
    %49 = vector.extract_strided_slice %8 {offsets = [1, 256], sizes = [1, 128], strides = [1, 1]} : vector<2x1024xf32> to vector<1x128xf32>
    %c1_30 = arith.constant 1 : index
    %c6_31 = arith.constant 6 : index
    %c0_32 = arith.constant 0 : index
    %50 = vector.load %arg11[%c1_30, %c6_31, %c0_32] : memref<2x18x128xf32, #tpu.memory_space<vmem>>, vector<1x1x128xf32>
    %51 = vector.shape_cast %50 : vector<1x1x128xf32> to vector<1x128xf32>
    %52 = vector.shape_cast %49 : vector<1x128xf32> to vector<1x1x128xf32>
    tpu.vector_store %arg11[%c1_30, %c6_31, %c0_32], %52 {strides = array<i32>} : memref<2x18x128xf32, #tpu.memory_space<vmem>>, vector<1x1x128xf32>,
    %53 = vector.extract_strided_slice %8 {offsets = [1, 384], sizes = [1, 128], strides = [1, 1]} : vector<2x1024xf32> to vector<1x128xf32>
    %c1_33 = arith.constant 1 : index
    %c8_34 = arith.constant 8 : index
    %c0_35 = arith.constant 0 : index
    %54 = vector.load %arg11[%c1_33, %c8_34, %c0_35] : memref<2x18x128xf32, #tpu.memory_space<vmem>>, vector<1x1x128xf32>
    %55 = vector.shape_cast %54 : vector<1x1x128xf32> to vector<1x128xf32>
    %56 = vector.shape_cast %53 : vector<1x128xf32> to vector<1x1x128xf32>
    tpu.vector_store %arg11[%c1_33, %c8_34, %c0_35], %56 {strides = array<i32>} : memref<2x18x128xf32, #tpu.memory_space<vmem>>, vector<1x1x128xf32>,
    %57 = vector.extract_strided_slice %8 {offsets = [1, 512], sizes = [1, 128], strides = [1, 1]} : vector<2x1024xf32> to vector<1x128xf32>
    %c1_36 = arith.constant 1 : index
    %c10_37 = arith.constant 10 : index
    %c0_38 = arith.constant 0 : index
    %58 = vector.load %arg11[%c1_36, %c10_37, %c0_38] : memref<2x18x128xf32, #tpu.memory_space<vmem>>, vector<1x1x128xf32>
    %59 = vector.shape_cast %58 : vector<1x1x128xf32> to vector<1x128xf32>
    %60 = vector.shape_cast %57 : vector<1x128xf32> to vector<1x1x128xf32>
    tpu.vector_store %arg11[%c1_36, %c10_37, %c0_38], %60 {strides = array<i32>} : memref<2x18x128xf32, #tpu.memory_space<vmem>>, vector<1x1x128xf32>,
    %61 = vector.extract_strided_slice %8 {offsets = [1, 640], sizes = [1, 128], strides = [1, 1]} : vector<2x1024xf32> to vector<1x128xf32>
    %c1_39 = arith.constant 1 : index
    %c12_40 = arith.constant 12 : index
    %c0_41 = arith.constant 0 : index
    %62 = vector.load %arg11[%c1_39, %c12_40, %c0_41] : memref<2x18x128xf32, #tpu.memory_space<vmem>>, vector<1x1x128xf32>
    %63 = vector.shape_cast %62 : vector<1x1x128xf32> to vector<1x128xf32>
    %64 = vector.shape_cast %61 : vector<1x128xf32> to vector<1x1x128xf32>
    tpu.vector_store %arg11[%c1_39, %c12_40, %c0_41], %64 {strides = array<i32>} : memref<2x18x128xf32, #tpu.memory_space<vmem>>, vector<1x1x128xf32>,
    %65 = vector.extract_strided_slice %8 {offsets = [1, 768], sizes = [1, 128], strides = [1, 1]} : vector<2x1024xf32> to vector<1x128xf32>
    %c1_42 = arith.constant 1 : index
    %c14_43 = arith.constant 14 : index
    %c0_44 = arith.constant 0 : index
    %66 = vector.load %arg11[%c1_42, %c14_43, %c0_44] : memref<2x18x128xf32, #tpu.memory_space<vmem>>, vector<1x1x128xf32>
    %67 = vector.shape_cast %66 : vector<1x1x128xf32> to vector<1x128xf32>
    %68 = vector.shape_cast %65 : vector<1x128xf32> to vector<1x1x128xf32>
    tpu.vector_store %arg11[%c1_42, %c14_43, %c0_44], %68 {strides = array<i32>} : memref<2x18x128xf32, #tpu.memory_space<vmem>>, vector<1x1x128xf32>,
    %69 = vector.extract_strided_slice %8 {offsets = [1, 896], sizes = [1, 128], strides = [1, 1]} : vector<2x1024xf32> to vector<1x128xf32>
    %c1_45 = arith.constant 1 : index
    %c16_46 = arith.constant 16 : index
    %c0_47 = arith.constant 0 : index
    %70 = vector.load %arg11[%c1_45, %c16_46, %c0_47] : memref<2x18x128xf32, #tpu.memory_space<vmem>>, vector<1x1x128xf32>
    %71 = vector.shape_cast %70 : vector<1x1x128xf32> to vector<1x128xf32>
    %72 = vector.shape_cast %69 : vector<1x128xf32> to vector<1x1x128xf32>
    tpu.vector_store %arg11[%c1_45, %c16_46, %c0_47], %72 {strides = array<i32>} : memref<2x18x128xf32, #tpu.memory_space<vmem>>, vector<1x1x128xf32>,
    %c0_48 = arith.constant 0 : index
    %c0_49 = arith.constant 0 : index
    %c0_50 = arith.constant 0 : index
    %73 = vector.load %arg11[%c0_48, %c0_49, %c0_50] : memref<2x18x128xf32, #tpu.memory_space<vmem>>, vector<2x16x128xf32>
    %74 = vector.shape_cast %73 : vector<2x16x128xf32> to vector<32x128xf32>
    %c0_51 = arith.constant 0 : index
    %c0_52 = arith.constant 0 : index
    %c0_53 = arith.constant 0 : index
    %75 = vector.load %arg4[%c0_51, %c0_52, %c0_53] : memref<3x128x128xf32, #tpu.memory_space<vmem>>, vector<1x128x128xf32>
    %76 = vector.shape_cast %75 : vector<1x128x128xf32> to vector<128x128xf32>
    %cst_54 = arith.constant dense<0.000000e+00> : vector<32x128xf32>
    %77 = tpu.matmul %74, %76, %cst_54 {dimension_numbers = #tpu.dot_dimension_numbers<[1], [0], [0], [1], [0, 0, 1, 1], [], []>} : vector<32x128xf32>, vector<128x128xf32>, vector<32x128xf32> -> vector<32x128xf32>
    %c0_55 = arith.constant 0 : index
    %c1_56 = arith.constant 1 : index
    %c0_57 = arith.constant 0 : index
    %78 = vector.load %arg11[%c0_55, %c1_56, %c0_57] : memref<2x18x128xf32, #tpu.memory_space<vmem>>, vector<2x16x128xf32>
    %79 = vector.shape_cast %78 : vector<2x16x128xf32> to vector<32x128xf32>
    %c1_58 = arith.constant 1 : index
    %c0_59 = arith.constant 0 : index
    %c0_60 = arith.constant 0 : index
    %80 = vector.load %arg4[%c1_58, %c0_59, %c0_60] : memref<3x128x128xf32, #tpu.memory_space<vmem>>, vector<1x128x128xf32>
    %81 = vector.shape_cast %80 : vector<1x128x128xf32> to vector<128x128xf32>
    %cst_61 = arith.constant dense<0.000000e+00> : vector<32x128xf32>
    %82 = tpu.matmul %79, %81, %cst_61 {dimension_numbers = #tpu.dot_dimension_numbers<[1], [0], [0], [1], [0, 0, 1, 1], [], []>} : vector<32x128xf32>, vector<128x128xf32>, vector<32x128xf32> -> vector<32x128xf32>
    %83 = arith.addf %77, %82 : vector<32x128xf32>
    %c0_62 = arith.constant 0 : index
    %c2_63 = arith.constant 2 : index
    %c0_64 = arith.constant 0 : index
    %84 = vector.load %arg11[%c0_62, %c2_63, %c0_64] : memref<2x18x128xf32, #tpu.memory_space<vmem>>, vector<2x16x128xf32>
    %85 = vector.shape_cast %84 : vector<2x16x128xf32> to vector<32x128xf32>
    %c2_65 = arith.constant 2 : index
    %c0_66 = arith.constant 0 : index
    %c0_67 = arith.constant 0 : index
    %86 = vector.load %arg4[%c2_65, %c0_66, %c0_67] : memref<3x128x128xf32, #tpu.memory_space<vmem>>, vector<1x128x128xf32>
    %87 = vector.shape_cast %86 : vector<1x128x128xf32> to vector<128x128xf32>
    %cst_68 = arith.constant dense<0.000000e+00> : vector<32x128xf32>
    %88 = tpu.matmul %85, %87, %cst_68 {dimension_numbers = #tpu.dot_dimension_numbers<[1], [0], [0], [1], [0, 0, 1, 1], [], []>} : vector<32x128xf32>, vector<128x128xf32>, vector<32x128xf32> -> vector<32x128xf32>
    %89 = arith.addf %83, %88 : vector<32x128xf32>
    %c0_69 = arith.constant 0 : index
    %c0_70 = arith.constant 0 : index
    %90 = vector.load %arg5[%c0_69, %c0_70] : memref<1x128xf32, #tpu.memory_space<vmem>>, vector<1x128xf32>
    %91 = vector.broadcast %90 : vector<1x128xf32> to vector<32x128xf32>
    %92 = arith.addf %89, %91 : vector<32x128xf32>
    %cst_71 = arith.constant 0.000000e+00 : f32
    %93 = vector.broadcast %cst_71 : f32 to vector<32x128xf32>
    %94 = arith.maximumf %92, %93 : vector<32x128xf32>
    %cst_72 = arith.constant 0.000000e+00 : f32
    %95 = vector.broadcast %cst_72 : f32 to vector<2x128xf32>
    %c0_73 = arith.constant 0 : index
    %c0_74 = arith.constant 0 : index
    %c0_75 = arith.constant 0 : index
    %96 = vector.load %arg12[%c0_73, %c0_74, %c0_75] : memref<2x18x128xf32, #tpu.memory_space<vmem>>, vector<2x1x128xf32>
    %97 = vector.shape_cast %96 : vector<2x1x128xf32> to vector<2x128xf32>
    %98 = vector.shape_cast %95 : vector<2x128xf32> to vector<2x1x128xf32>
    tpu.vector_store %arg12[%c0_73, %c0_74, %c0_75], %98 {strides = array<i32>} : memref<2x18x128xf32, #tpu.memory_space<vmem>>, vector<2x1x128xf32>,
    %c0_76 = arith.constant 0 : index
    %c17 = arith.constant 17 : index
    %c0_77 = arith.constant 0 : index
    %99 = vector.load %arg12[%c0_76, %c17, %c0_77] : memref<2x18x128xf32, #tpu.memory_space<vmem>>, vector<2x1x128xf32>
    %100 = vector.shape_cast %99 : vector<2x1x128xf32> to vector<2x128xf32>
    %101 = vector.shape_cast %95 : vector<2x128xf32> to vector<2x1x128xf32>
    tpu.vector_store %arg12[%c0_76, %c17, %c0_77], %101 {strides = array<i32>} : memref<2x18x128xf32, #tpu.memory_space<vmem>>, vector<2x1x128xf32>,
    %102 = vector.shape_cast %94 : vector<32x128xf32> to vector<2x16x128xf32>
    %c0_78 = arith.constant 0 : index
    %c1_79 = arith.constant 1 : index
    %c0_80 = arith.constant 0 : index
    %103 = vector.load %arg12[%c0_78, %c1_79, %c0_80] : memref<2x18x128xf32, #tpu.memory_space<vmem>>, vector<2x16x128xf32>
    tpu.vector_store %arg12[%c0_78, %c1_79, %c0_80], %102 {strides = array<i32>} : memref<2x18x128xf32, #tpu.memory_space<vmem>>, vector<2x16x128xf32>,
    %c0_81 = arith.constant 0 : index
    %c0_82 = arith.constant 0 : index
    %c0_83 = arith.constant 0 : index
    %104 = vector.load %arg12[%c0_81, %c0_82, %c0_83] : memref<2x18x128xf32, #tpu.memory_space<vmem>>, vector<2x16x128xf32>
    %105 = vector.shape_cast %104 : vector<2x16x128xf32> to vector<32x128xf32>
    %c0_84 = arith.constant 0 : index
    %c0_85 = arith.constant 0 : index
    %c0_86 = arith.constant 0 : index
    %106 = vector.load %arg6[%c0_84, %c0_85, %c0_86] : memref<3x128x128xf32, #tpu.memory_space<vmem>>, vector<1x128x128xf32>
    %107 = vector.shape_cast %106 : vector<1x128x128xf32> to vector<128x128xf32>
    %cst_87 = arith.constant dense<0.000000e+00> : vector<32x128xf32>
    %108 = tpu.matmul %105, %107, %cst_87 {dimension_numbers = #tpu.dot_dimension_numbers<[1], [0], [0], [1], [0, 0, 1, 1], [], []>} : vector<32x128xf32>, vector<128x128xf32>, vector<32x128xf32> -> vector<32x128xf32>
    %c1_88 = arith.constant 1 : index
    %c0_89 = arith.constant 0 : index
    %c0_90 = arith.constant 0 : index
    %109 = vector.load %arg6[%c1_88, %c0_89, %c0_90] : memref<3x128x128xf32, #tpu.memory_space<vmem>>, vector<1x128x128xf32>
    %110 = vector.shape_cast %109 : vector<1x128x128xf32> to vector<128x128xf32>
    %cst_91 = arith.constant dense<0.000000e+00> : vector<32x128xf32>
    %111 = tpu.matmul %94, %110, %cst_91 {dimension_numbers = #tpu.dot_dimension_numbers<[1], [0], [0], [1], [0, 0, 1, 1], [], []>} : vector<32x128xf32>, vector<128x128xf32>, vector<32x128xf32> -> vector<32x128xf32>
    %112 = arith.addf %108, %111 : vector<32x128xf32>
    %c0_92 = arith.constant 0 : index
    %c2_93 = arith.constant 2 : index
    %c0_94 = arith.constant 0 : index
    %113 = vector.load %arg12[%c0_92, %c2_93, %c0_94] : memref<2x18x128xf32, #tpu.memory_space<vmem>>, vector<2x16x128xf32>
    %114 = vector.shape_cast %113 : vector<2x16x128xf32> to vector<32x128xf32>
    %c2_95 = arith.constant 2 : index
    %c0_96 = arith.constant 0 : index
    %c0_97 = arith.constant 0 : index
    %115 = vector.load %arg6[%c2_95, %c0_96, %c0_97] : memref<3x128x128xf32, #tpu.memory_space<vmem>>, vector<1x128x128xf32>
    %116 = vector.shape_cast %115 : vector<1x128x128xf32> to vector<128x128xf32>
    %cst_98 = arith.constant dense<0.000000e+00> : vector<32x128xf32>
    %117 = tpu.matmul %114, %116, %cst_98 {dimension_numbers = #tpu.dot_dimension_numbers<[1], [0], [0], [1], [0, 0, 1, 1], [], []>} : vector<32x128xf32>, vector<128x128xf32>, vector<32x128xf32> -> vector<32x128xf32>
    %118 = arith.addf %112, %117 : vector<32x128xf32>
    %c0_99 = arith.constant 0 : index
    %c0_100 = arith.constant 0 : index
    %119 = vector.load %arg7[%c0_99, %c0_100] : memref<1x128xf32, #tpu.memory_space<vmem>>, vector<1x128xf32>
    %120 = vector.broadcast %119 : vector<1x128xf32> to vector<32x128xf32>
    %121 = arith.addf %118, %120 : vector<32x128xf32>
    %cst_101 = arith.constant 0.000000e+00 : f32
    %122 = vector.broadcast %cst_101 : f32 to vector<32x128xf32>
    %123 = arith.maximumf %121, %122 : vector<32x128xf32>
    %124 = arith.addf %123, %94 : vector<32x128xf32>
    %c0_102 = arith.constant 0 : index
    %c0_103 = arith.constant 0 : index
    %c0_104 = arith.constant 0 : index
    %125 = vector.load %arg8[%c0_102, %c0_103, %c0_104] : memref<3x128x1120xf32, #tpu.memory_space<vmem>>, vector<1x128x1120xf32>
    %126 = vector.shape_cast %125 : vector<1x128x1120xf32> to vector<128x1120xf32>
    %cst_105 = arith.constant dense<0.000000e+00> : vector<32x1120xf32>
    %127 = tpu.matmul %124, %126, %cst_105 {dimension_numbers = #tpu.dot_dimension_numbers<[1], [0], [0], [1], [0, 0, 1, 1], [], []>} : vector<32x128xf32>, vector<128x1120xf32>, vector<32x1120xf32> -> vector<32x1120xf32>
    %c0_106 = arith.constant 0 : index
    %c0_107 = arith.constant 0 : index
    %c0_108 = arith.constant 0 : index
    %128 = vector.load %arg9[%c0_106, %c0_107, %c0_108] : memref<3x1x1xf32, #tpu.memory_space<vmem>>, vector<1x1x1xf32>
    %129 = vector.shape_cast %128 : vector<1x1x1xf32> to vector<1x1xf32>
    %130 = vector.broadcast %129 : vector<1x1xf32> to vector<32x1120xf32>
    %131 = arith.addf %127, %130 : vector<32x1120xf32>
    %cst_109 = arith.constant 0.000000e+00 : f32
    %132 = vector.broadcast %cst_109 : f32 to vector<32x1120xf32>
    %133 = arith.maximumf %131, %132 : vector<32x1120xf32>
    %134 = vector.extract_strided_slice %133 {offsets = [0, 0], sizes = [16, 1120], strides = [1, 1]} : vector<32x1120xf32> to vector<16x1120xf32>
    %c0_110 = arith.constant 0 : index
    %c0_111 = arith.constant 0 : index
    %c0_112 = arith.constant 0 : index
    %c0_113 = arith.constant 0 : index
    %135 = vector.load %arg10[%c0_110, %c0_111, %c0_112, %c0_113] : memref<2x3x16x1120xf32, #tpu.memory_space<vmem>>, vector<1x1x16x1120xf32>
    %136 = vector.shape_cast %135 : vector<1x1x16x1120xf32> to vector<16x1120xf32>
    %137 = vector.shape_cast %134 : vector<16x1120xf32> to vector<1x1x16x1120xf32>
    tpu.vector_store %arg10[%c0_110, %c0_111, %c0_112, %c0_113], %137 {strides = array<i32>} : memref<2x3x16x1120xf32, #tpu.memory_space<vmem>>, vector<1x1x16x1120xf32>,
    %138 = vector.extract_strided_slice %133 {offsets = [16, 0], sizes = [16, 1120], strides = [1, 1]} : vector<32x1120xf32> to vector<16x1120xf32>
    %c1_114 = arith.constant 1 : index
    %c0_115 = arith.constant 0 : index
    %c0_116 = arith.constant 0 : index
    %c0_117 = arith.constant 0 : index
    %139 = vector.load %arg10[%c1_114, %c0_115, %c0_116, %c0_117] : memref<2x3x16x1120xf32, #tpu.memory_space<vmem>>, vector<1x1x16x1120xf32>
    %140 = vector.shape_cast %139 : vector<1x1x16x1120xf32> to vector<16x1120xf32>
    %141 = vector.shape_cast %138 : vector<16x1120xf32> to vector<1x1x16x1120xf32>
    tpu.vector_store %arg10[%c1_114, %c0_115, %c0_116, %c0_117], %141 {strides = array<i32>} : memref<2x3x16x1120xf32, #tpu.memory_space<vmem>>, vector<1x1x16x1120xf32>,
    %c1_118 = arith.constant 1 : index
    %c0_119 = arith.constant 0 : index
    %c0_120 = arith.constant 0 : index
    %142 = vector.load %arg8[%c1_118, %c0_119, %c0_120] : memref<3x128x1120xf32, #tpu.memory_space<vmem>>, vector<1x128x1120xf32>
    %143 = vector.shape_cast %142 : vector<1x128x1120xf32> to vector<128x1120xf32>
    %cst_121 = arith.constant dense<0.000000e+00> : vector<32x1120xf32>
    %144 = tpu.matmul %124, %143, %cst_121 {dimension_numbers = #tpu.dot_dimension_numbers<[1], [0], [0], [1], [0, 0, 1, 1], [], []>} : vector<32x128xf32>, vector<128x1120xf32>, vector<32x1120xf32> -> vector<32x1120xf32>
    %c1_122 = arith.constant 1 : index
    %c0_123 = arith.constant 0 : index
    %c0_124 = arith.constant 0 : index
    %145 = vector.load %arg9[%c1_122, %c0_123, %c0_124] : memref<3x1x1xf32, #tpu.memory_space<vmem>>, vector<1x1x1xf32>
    %146 = vector.shape_cast %145 : vector<1x1x1xf32> to vector<1x1xf32>
    %147 = vector.broadcast %146 : vector<1x1xf32> to vector<32x1120xf32>
    %148 = arith.addf %144, %147 : vector<32x1120xf32>
    %cst_125 = arith.constant 0.000000e+00 : f32
    %149 = vector.broadcast %cst_125 : f32 to vector<32x1120xf32>
    %150 = arith.maximumf %148, %149 : vector<32x1120xf32>
    %151 = vector.extract_strided_slice %150 {offsets = [0, 0], sizes = [16, 1120], strides = [1, 1]} : vector<32x1120xf32> to vector<16x1120xf32>
    %c0_126 = arith.constant 0 : index
    %c1_127 = arith.constant 1 : index
    %c0_128 = arith.constant 0 : index
    %c0_129 = arith.constant 0 : index
    %152 = vector.load %arg10[%c0_126, %c1_127, %c0_128, %c0_129] : memref<2x3x16x1120xf32, #tpu.memory_space<vmem>>, vector<1x1x16x1120xf32>
    %153 = vector.shape_cast %152 : vector<1x1x16x1120xf32> to vector<16x1120xf32>
    %154 = vector.shape_cast %151 : vector<16x1120xf32> to vector<1x1x16x1120xf32>
    tpu.vector_store %arg10[%c0_126, %c1_127, %c0_128, %c0_129], %154 {strides = array<i32>} : memref<2x3x16x1120xf32, #tpu.memory_space<vmem>>, vector<1x1x16x1120xf32>,
    %155 = vector.extract_strided_slice %150 {offsets = [16, 0], sizes = [16, 1120], strides = [1, 1]} : vector<32x1120xf32> to vector<16x1120xf32>
    %c1_130 = arith.constant 1 : index
    %c1_131 = arith.constant 1 : index
    %c0_132 = arith.constant 0 : index
    %c0_133 = arith.constant 0 : index
    %156 = vector.load %arg10[%c1_130, %c1_131, %c0_132, %c0_133] : memref<2x3x16x1120xf32, #tpu.memory_space<vmem>>, vector<1x1x16x1120xf32>
    %157 = vector.shape_cast %156 : vector<1x1x16x1120xf32> to vector<16x1120xf32>
    %158 = vector.shape_cast %155 : vector<16x1120xf32> to vector<1x1x16x1120xf32>
    tpu.vector_store %arg10[%c1_130, %c1_131, %c0_132, %c0_133], %158 {strides = array<i32>} : memref<2x3x16x1120xf32, #tpu.memory_space<vmem>>, vector<1x1x16x1120xf32>,
    %c2_134 = arith.constant 2 : index
    %c0_135 = arith.constant 0 : index
    %c0_136 = arith.constant 0 : index
    %159 = vector.load %arg8[%c2_134, %c0_135, %c0_136] : memref<3x128x1120xf32, #tpu.memory_space<vmem>>, vector<1x128x1120xf32>
    %160 = vector.shape_cast %159 : vector<1x128x1120xf32> to vector<128x1120xf32>
    %cst_137 = arith.constant dense<0.000000e+00> : vector<32x1120xf32>
    %161 = tpu.matmul %124, %160, %cst_137 {dimension_numbers = #tpu.dot_dimension_numbers<[1], [0], [0], [1], [0, 0, 1, 1], [], []>} : vector<32x128xf32>, vector<128x1120xf32>, vector<32x1120xf32> -> vector<32x1120xf32>
    %c2_138 = arith.constant 2 : index
    %c0_139 = arith.constant 0 : index
    %c0_140 = arith.constant 0 : index
    %162 = vector.load %arg9[%c2_138, %c0_139, %c0_140] : memref<3x1x1xf32, #tpu.memory_space<vmem>>, vector<1x1x1xf32>
    %163 = vector.shape_cast %162 : vector<1x1x1xf32> to vector<1x1xf32>
    %164 = vector.broadcast %163 : vector<1x1xf32> to vector<32x1120xf32>
    %165 = arith.addf %161, %164 : vector<32x1120xf32>
    %cst_141 = arith.constant 0.000000e+00 : f32
    %166 = vector.broadcast %cst_141 : f32 to vector<32x1120xf32>
    %167 = arith.maximumf %165, %166 : vector<32x1120xf32>
    %168 = vector.extract_strided_slice %167 {offsets = [0, 0], sizes = [16, 1120], strides = [1, 1]} : vector<32x1120xf32> to vector<16x1120xf32>
    %c0_142 = arith.constant 0 : index
    %c2_143 = arith.constant 2 : index
    %c0_144 = arith.constant 0 : index
    %c0_145 = arith.constant 0 : index
    %169 = vector.load %arg10[%c0_142, %c2_143, %c0_144, %c0_145] : memref<2x3x16x1120xf32, #tpu.memory_space<vmem>>, vector<1x1x16x1120xf32>
    %170 = vector.shape_cast %169 : vector<1x1x16x1120xf32> to vector<16x1120xf32>
    %171 = vector.shape_cast %168 : vector<16x1120xf32> to vector<1x1x16x1120xf32>
    tpu.vector_store %arg10[%c0_142, %c2_143, %c0_144, %c0_145], %171 {strides = array<i32>} : memref<2x3x16x1120xf32, #tpu.memory_space<vmem>>, vector<1x1x16x1120xf32>,
    %172 = vector.extract_strided_slice %167 {offsets = [16, 0], sizes = [16, 1120], strides = [1, 1]} : vector<32x1120xf32> to vector<16x1120xf32>
    %c1_146 = arith.constant 1 : index
    %c2_147 = arith.constant 2 : index
    %c0_148 = arith.constant 0 : index
    %c0_149 = arith.constant 0 : index
    %173 = vector.load %arg10[%c1_146, %c2_147, %c0_148, %c0_149] : memref<2x3x16x1120xf32, #tpu.memory_space<vmem>>, vector<1x1x16x1120xf32>
    %174 = vector.shape_cast %173 : vector<1x1x16x1120xf32> to vector<16x1120xf32>
    %175 = vector.shape_cast %172 : vector<16x1120xf32> to vector<1x1x16x1120xf32>
    tpu.vector_store %arg10[%c1_146, %c2_147, %c0_148, %c0_149], %175 {strides = array<i32>} : memref<2x3x16x1120xf32, #tpu.memory_space<vmem>>, vector<1x1x16x1120xf32>,
    return
  }
  func.func @transform_0(%arg0: i32) -> (i32, i32) {
    %c0_i32 = arith.constant 0 : i32
    %c0_i32_0 = arith.constant 0 : i32
    %c0_i32_1 = arith.constant 0 : i32
    return %c0_i32, %c0_i32_0 : i32, i32
  }
  func.func @transform_1(%arg0: i32) -> (i32, i32) {
    %c0_i32 = arith.constant 0 : i32
    %c0_i32_0 = arith.constant 0 : i32
    %c0_i32_1 = arith.constant 0 : i32
    return %c0_i32, %c0_i32_0 : i32, i32
  }
  func.func @transform_2(%arg0: i32) -> (i32, i32) {
    %c0_i32 = arith.constant 0 : i32
    %c0_i32_0 = arith.constant 0 : i32
    %c0_i32_1 = arith.constant 0 : i32
    return %c0_i32, %c0_i32_0 : i32, i32
  }
  func.func @transform_3(%arg0: i32) -> (i32, i32, i32) {
    %c0_i32 = arith.constant 0 : i32
    %c0_i32_0 = arith.constant 0 : i32
    %c0_i32_1 = arith.constant 0 : i32
    %c0_i32_2 = arith.constant 0 : i32
    return %c0_i32, %c0_i32_0, %c0_i32_1 : i32, i32, i32
  }
  func.func @transform_4(%arg0: i32) -> (i32, i32) {
    %c0_i32 = arith.constant 0 : i32
    %c0_i32_0 = arith.constant 0 : i32
    %c0_i32_1 = arith.constant 0 : i32
    return %c0_i32, %c0_i32_0 : i32, i32
  }
  func.func @transform_5(%arg0: i32) -> (i32, i32, i32) {
    %c0_i32 = arith.constant 0 : i32
    %c0_i32_0 = arith.constant 0 : i32
    %c0_i32_1 = arith.constant 0 : i32
    %c0_i32_2 = arith.constant 0 : i32
    return %c0_i32, %c0_i32_0, %c0_i32_1 : i32, i32, i32
  }
  func.func @transform_6(%arg0: i32) -> (i32, i32) {
    %c0_i32 = arith.constant 0 : i32
    %c0_i32_0 = arith.constant 0 : i32
    %c0_i32_1 = arith.constant 0 : i32
    return %c0_i32, %c0_i32_0 : i32, i32
  }
  func.func @transform_7(%arg0: i32) -> (i32, i32, i32) {
    %c0_i32 = arith.constant 0 : i32
    %c0_i32_0 = arith.constant 0 : i32
    %c0_i32_1 = arith.constant 0 : i32
    %c0_i32_2 = arith.constant 0 : i32
    return %c0_i32, %c0_i32_0, %c0_i32_1 : i32, i32, i32
  }
  func.func @transform_8(%arg0: i32) -> (i32, i32, i32) {
    %c0_i32 = arith.constant 0 : i32
    %c0_i32_0 = arith.constant 0 : i32
    %c0_i32_1 = arith.constant 0 : i32
    %c0_i32_2 = arith.constant 0 : i32
    return %c0_i32, %c0_i32_0, %c0_i32_1 : i32, i32, i32
  }
  func.func @transform_9(%arg0: i32) -> (i32, i32, i32, i32) {
    %c0_i32 = arith.constant 0 : i32
    %c0_i32_0 = arith.constant 0 : i32
    %c0_i32_1 = arith.constant 0 : i32
    %c0_i32_2 = arith.constant 0 : i32
    %c0_i32_3 = arith.constant 0 : i32
    return %c0_i32, %c0_i32_0, %c0_i32_1, %c0_i32_2 : i32, i32, i32, i32
  }
}

</mosaic_0001>

<llo_original>
// kernel: _lambda_.1
$region0: #{_lambda_.1}
  #allocation0 [shape = 'u32[]', space=smem, size = 0x4, offset = 0x4, fixed_abs, tag = 'smem constant byte address 0x4 - core index']
  #allocation1 [shape = 'u32[144,128]{1,0:T(1,128)}', space=vmem, size = 0x12000, scoped, tag = 'internal scratch']
  #allocation2 [shape = 'f32[2,18,128]{2,1,0:T(8,128)}', space=vmem, size = 0x6000, scoped, tag = 'scratch operand']
  #allocation3 [shape = 'f32[2,18,128]{2,1,0:T(8,128)}', space=vmem, size = 0x6000, scoped, tag = 'scratch operand']
  %s0 = inlined_call_operand.hbm [shape: f32[2,128], index: 0, kind: input, shape index: {}]
  %s1 = inlined_call_operand.hbm [shape: f32[128,1024], index: 1, kind: input, shape index: {}]
  %s2 = inlined_call_operand.hbm [shape: f32[1,1024], index: 2, kind: input, shape index: {}]
  %s3 = inlined_call_operand.hbm [shape: f32[3,128,128], index: 3, kind: input, shape index: {}]
  %s4 = inlined_call_operand.hbm [shape: f32[1,128], index: 4, kind: input, shape index: {}]
  %s5 = inlined_call_operand.hbm [shape: f32[3,128,128], index: 5, kind: input, shape index: {}]
  %s6 = inlined_call_operand.hbm [shape: f32[1,128], index: 6, kind: input, shape index: {}]
  %s7 = inlined_call_operand.hbm [shape: f32[3,128,1120], index: 7, kind: input, shape index: {}]
  %s8 = inlined_call_operand.hbm [shape: f32[3,1,1], index: 8, kind: input, shape index: {}]
  %s9 = inlined_call_operand.vmem [shape: f32[2,3,16,1120], index: 9, kind: output, shape index: {}]
  %s10 = sld [smem:[#allocation0]]
  $region82: #{_lambda_.1} parent=0
    _
  %s12 = ssub.s32 1, %s10
  %s13 = scalar_select 0, %s12, %s10
  $region1: #{_lambda_.1} parent=0
    #allocation4 [shape = 'u8[1024]{0}', space=vmem, size = 0x400, scoped, tag = 'input window, operand 0, single buffered']
    #allocation5 [shape = 's32[1]{0}', space=sflag, size = 0x4, scoped, tag = 'scoped memory for _lambda_.1']
    #allocation6 [shape = 'u8[524288]{0}', space=vmem, size = 0x80000, scoped, tag = 'input window, operand 1, single buffered']
    #allocation7 [shape = 's32[1]{0}', space=sflag, size = 0x4, scoped, tag = 'scoped memory for _lambda_.1']
    #allocation8 [shape = 'u8[4096]{0}', space=vmem, size = 0x1000, scoped, tag = 'input window, operand 2, single buffered']
    #allocation9 [shape = 'u8[196608]{0}', space=vmem, size = 0x30000, scoped, tag = 'input window, operand 3, single buffered']
    #allocation10 [shape = 's32[1]{0}', space=sflag, size = 0x4, scoped, tag = 'scoped memory for _lambda_.1']
    #allocation11 [shape = 'u8[512]{0}', space=vmem, size = 0x400, scoped, tag = 'input window, operand 4, single buffered']
    #allocation12 [shape = 'u8[196608]{0}', space=vmem, size = 0x30000, scoped, tag = 'input window, operand 5, single buffered']
    #allocation13 [shape = 's32[1]{0}', space=sflag, size = 0x4, scoped, tag = 'scoped memory for _lambda_.1']
    #allocation14 [shape = 'u8[512]{0}', space=vmem, size = 0x400, scoped, tag = 'input window, operand 6, single buffered']
    #allocation15 [shape = 'u8[1769472]{0}', space=vmem, size = 0x1b0000, scoped, tag = 'input window, operand 7, single buffered']
    #allocation16 [shape = 's32[1]{0}', space=sflag, size = 0x4, scoped, tag = 'scoped memory for _lambda_.1']
    #allocation17 [shape = 'u8[1536]{0}', space=vmem, size = 0x800, scoped, tag = 'input window, operand 8, single buffered']
    %14 = vsyncpa [#allocation5], 0
    %15 = vsyncpa [#allocation7], 0
    %16 = vsyncpa [#allocation10], 0
    %17 = vsyncpa [#allocation13], 0
    %18 = vsyncpa [#allocation16], 0
    // Predicated region
    $region2: #{_lambda_.1} parent=1 // pred_check
      _
    $region3: #{_lambda_.1} parent=1 // pred_check_branch
      %20 = sbr.rel (0) target = $region5
    $region4: #{_lambda_.1} parent=1 // pred_region
      %s22 = ssub.s32 32, 32
      %23 = vsyncadd [#allocation5], %s22
      %s25 = sshll.u32 [#allocation4], 4
      %s26 = int_to_ptr.vmem [resolvable:$true] %s25
      %28 = dma.hbm_to_vmem [thread:$0]  %s0, 32, %s26, [#allocation5]
    $region5: #{_lambda_.1} parent=1 // pred_fallthru
      _
    // Predicated region
    $region6: #{_lambda_.1} parent=1 // pred_check
      _
    $region7: #{_lambda_.1} parent=1 // pred_check_branch
      %30 = sbr.rel (0) target = $region9
    $region8: #{_lambda_.1} parent=1 // pred_region
      %s32 = ssub.s32 16384, 16384
      %33 = vsyncadd [#allocation7], %s32
      %s34 = sshll.u32 [#allocation6], 4
      %s35 = int_to_ptr.vmem [resolvable:$true] %s34
      %40 = dma.hbm_to_vmem [thread:$0]  %s1, 16384, %s35, [#allocation7], 1024, 1024, 64
    $region9: #{_lambda_.1} parent=1 // pred_fallthru
      _
    // Predicated region
    $region10: #{_lambda_.1} parent=1 // pred_check
      _
    $region11: #{_lambda_.1} parent=1 // pred_check_branch
      %42 = sbr.rel (0) target = $region13
    $region12: #{_lambda_.1} parent=1 // pred_region
      %s44 = ssub.s32 128, 128
      %45 = vsyncadd [#allocation7], %s44
      %s47 = sshll.u32 [#allocation8], 4
      %s48 = int_to_ptr.vmem [resolvable:$true] %s47
      %50 = dma.hbm_to_vmem [thread:$0]  %s2, 128, %s48, [#allocation7]
    $region13: #{_lambda_.1} parent=1 // pred_fallthru
      _
    // Predicated region
    $region14: #{_lambda_.1} parent=1 // pred_check
      _
    $region15: #{_lambda_.1} parent=1 // pred_check_branch
      %52 = sbr.rel (0) target = $region17
    $region16: #{_lambda_.1} parent=1 // pred_region
      %s54 = ssub.s32 6144, 6144
      %55 = vsyncadd [#allocation10], %s54
      %s56 = sshll.u32 [#allocation9], 4
      %s57 = int_to_ptr.vmem [resolvable:$true] %s56
      %62 = dma.hbm_to_vmem [thread:$0]  %s3, 6144, %s57, [#allocation10], 128, 128, 8
    $region17: #{_lambda_.1} parent=1 // pred_fallthru
      _
    // Predicated region
    $region18: #{_lambda_.1} parent=1 // pred_check
      _
    $region19: #{_lambda_.1} parent=1 // pred_check_branch
      %64 = sbr.rel (0) target = $region21
    $region20: #{_lambda_.1} parent=1 // pred_region
      %s66 = ssub.s32 16, 16
      %67 = vsyncadd [#allocation10], %s66
      %s69 = sshll.u32 [#allocation11], 4
      %s70 = int_to_ptr.vmem [resolvable:$true] %s69
      %72 = dma.hbm_to_vmem [thread:$0]  %s4, 16, %s70, [#allocation10]
    $region21: #{_lambda_.1} parent=1 // pred_fallthru
      _
    // Predicated region
    $region22: #{_lambda_.1} parent=1 // pred_check
      _
    $region23: #{_lambda_.1} parent=1 // pred_check_branch
      %74 = sbr.rel (0) target = $region25
    $region24: #{_lambda_.1} parent=1 // pred_region
      %s76 = ssub.s32 6144, 6144
      %77 = vsyncadd [#allocation13], %s76
      %s78 = sshll.u32 [#allocation12], 4
      %s79 = int_to_ptr.vmem [resolvable:$true] %s78
      %84 = dma.hbm_to_vmem [thread:$0]  %s5, 6144, %s79, [#allocation13], 128, 128, 8
    $region25: #{_lambda_.1} parent=1 // pred_fallthru
      _
    // Predicated region
    $region26: #{_lambda_.1} parent=1 // pred_check
      _
    $region27: #{_lambda_.1} parent=1 // pred_check_branch
      %86 = sbr.rel (0) target = $region29
    $region28: #{_lambda_.1} parent=1 // pred_region
      %s88 = ssub.s32 16, 16
      %89 = vsyncadd [#allocation13], %s88
      %s91 = sshll.u32 [#allocation14], 4
      %s92 = int_to_ptr.vmem [resolvable:$true] %s91
      %94 = dma.hbm_to_vmem [thread:$0]  %s6, 16, %s92, [#allocation13]
    $region29: #{_lambda_.1} parent=1 // pred_fallthru
      _
    // Predicated region
    $region30: #{_lambda_.1} parent=1 // pred_check
      _
    $region31: #{_lambda_.1} parent=1 // pred_check_branch
      %96 = sbr.rel (0) target = $region33
    $region32: #{_lambda_.1} parent=1 // pred_region
      %s98 = ssub.s32 55296, 55296
      %99 = vsyncadd [#allocation16], %s98
      %s100 = sshll.u32 [#allocation15], 4
      %s101 = int_to_ptr.vmem [resolvable:$true] %s100
      %106 = dma.hbm_to_vmem [thread:$0]  %s7, 55296, %s101, [#allocation16], 1152, 1152, 72
    $region33: #{_lambda_.1} parent=1 // pred_fallthru
      _
    // Predicated region
    $region34: #{_lambda_.1} parent=1 // pred_check
      _
    $region35: #{_lambda_.1} parent=1 // pred_check_branch
      %108 = sbr.rel (0) target = $region37
    $region36: #{_lambda_.1} parent=1 // pred_region
      %s110 = ssub.s32 48, 48
      %111 = vsyncadd [#allocation16], %s110
      %s112 = sshll.u32 [#allocation17], 4
      %s113 = int_to_ptr.vmem [resolvable:$true] %s112
      %118 = dma.hbm_to_vmem [thread:$0]  %s8, 48, %s113, [#allocation16], 16, 16, 1
    $region37: #{_lambda_.1} parent=1 // pred_fallthru
      _
    // Predicated region
    $region38: #{_lambda_.1} parent=1 // pred_check
      _
    $region39: #{_lambda_.1} parent=1 // pred_check_branch
      %120 = sbr.rel (0) target = $region41
    $region40: #{_lambda_.1} parent=1 // pred_region
      %121 = dma.done [#allocation5], 32
    $region41: #{_lambda_.1} parent=1 // pred_fallthru
      _
    // Predicated region
    $region42: #{_lambda_.1} parent=1 // pred_check
      _
    $region43: #{_lambda_.1} parent=1 // pred_check_branch
      %123 = sbr.rel (0) target = $region45
    $region44: #{_lambda_.1} parent=1 // pred_region
      %124 = dma.done [#allocation7], 16384
    $region45: #{_lambda_.1} parent=1 // pred_fallthru
      _
    // Predicated region
    $region46: #{_lambda_.1} parent=1 // pred_check
      _
    $region47: #{_lambda_.1} parent=1 // pred_check_branch
      %126 = sbr.rel (0) target = $region49
    $region48: #{_lambda_.1} parent=1 // pred_region
      %127 = dma.done [#allocation7], 128
    $region49: #{_lambda_.1} parent=1 // pred_fallthru
      _
    // Predicated region
    $region50: #{_lambda_.1} parent=1 // pred_check
      _
    $region51: #{_lambda_.1} parent=1 // pred_check_branch
      %129 = sbr.rel (0) target = $region53
    $region52: #{_lambda_.1} parent=1 // pred_region
      %130 = dma.done [#allocation10], 6144
    $region53: #{_lambda_.1} parent=1 // pred_fallthru
      _
    // Predicated region
    $region54: #{_lambda_.1} parent=1 // pred_check
      _
    $region55: #{_lambda_.1} parent=1 // pred_check_branch
      %132 = sbr.rel (0) target = $region57
    $region56: #{_lambda_.1} parent=1 // pred_region
      %133 = dma.done [#allocation10], 16
    $region57: #{_lambda_.1} parent=1 // pred_fallthru
      _
    // Predicated region
    $region58: #{_lambda_.1} parent=1 // pred_check
      _
    $region59: #{_lambda_.1} parent=1 // pred_check_branch
      %135 = sbr.rel (0) target = $region61
    $region60: #{_lambda_.1} parent=1 // pred_region
      %136 = dma.done [#allocation13], 6144
    $region61: #{_lambda_.1} parent=1 // pred_fallthru
      _
    // Predicated region
    $region62: #{_lambda_.1} parent=1 // pred_check
      _
    $region63: #{_lambda_.1} parent=1 // pred_check_branch
      %138 = sbr.rel (0) target = $region65
    $region64: #{_lambda_.1} parent=1 // pred_region
      %139 = dma.done [#allocation13], 16
    $region65: #{_lambda_.1} parent=1 // pred_fallthru
      _
    // Predicated region
    $region66: #{_lambda_.1} parent=1 // pred_check
      _
    $region67: #{_lambda_.1} parent=1 // pred_check_branch
      %141 = sbr.rel (0) target = $region69
    $region68: #{_lambda_.1} parent=1 // pred_region
      %142 = dma.done [#allocation16], 55296
    $region69: #{_lambda_.1} parent=1 // pred_fallthru
      _
    // Predicated region
    $region70: #{_lambda_.1} parent=1 // pred_check
      _
    $region71: #{_lambda_.1} parent=1 // pred_check_branch
      %144 = sbr.rel (0) target = $region73
    $region72: #{_lambda_.1} parent=1 // pred_region
      %145 = dma.done [#allocation16], 48
    $region73: #{_lambda_.1} parent=1 // pred_fallthru
      _
    %146 = vst [vmem:[#allocation2] sm:$0xff] 0.0
    %147 = vst [vmem:[#allocation2 + $0x8] sm:$0xff] 0.0
    %148 = vst [vmem:[#allocation2 + $0x10] sm:$0x3] 0.0
    %149 = vst [vmem:[#allocation2 + $0x18] sm:$0xff] 0.0
    %150 = vst [vmem:[#allocation2 + $0x20] sm:$0xff] 0.0
    %151 = vst [vmem:[#allocation2 + $0x28] sm:$0x3] 0.0
    %v152 = vld [vmem:[#allocation4] sm:$0x3]
    %v153 = vld [vmem:[#allocation6] sm:$0xff]
    %v154 = vld [vmem:[#allocation6 + $0x8] sm:$0xff]
    %v155 = vld [vmem:[#allocation6 + $0x10] sm:$0xff]
    %v156 = vld [vmem:[#allocation6 + $0x18] sm:$0xff]
    %v157 = vld [vmem:[#allocation6 + $0x20] sm:$0xff]
    %v158 = vld [vmem:[#allocation6 + $0x28] sm:$0xff]
    %v159 = vld [vmem:[#allocation6 + $0x30] sm:$0xff]
    %v160 = vld [vmem:[#allocation6 + $0x38] sm:$0xff]
    %v161 = vld [vmem:[#allocation6 + $0x40] sm:$0xff]
    %v162 = vld [vmem:[#allocation6 + $0x48] sm:$0xff]
    %v163 = vld [vmem:[#allocation6 + $0x50] sm:$0xff]
    %v164 = vld [vmem:[#allocation6 + $0x58] sm:$0xff]
    %v165 = vld [vmem:[#allocation6 + $0x60] sm:$0xff]
    %v166 = vld [vmem:[#allocation6 + $0x68] sm:$0xff]
    %v167 = vld [vmem:[#allocation6 + $0x70] sm:$0xff]
    %v168 = vld [vmem:[#allocation6 + $0x78] sm:$0xff]
    %v169 = vld [vmem:[#allocation6 + $0x80] sm:$0xff]
    %v170 = vld [vmem:[#allocation6 + $0x88] sm:$0xff]
    %v171 = vld [vmem:[#allocation6 + $0x90] sm:$0xff]
    %v172 = vld [vmem:[#allocation6 + $0x98] sm:$0xff]
    %v173 = vld [vmem:[#allocation6 + $0xa0] sm:$0xff]
    %v174 = vld [vmem:[#allocation6 + $0xa8] sm:$0xff]
    %v175 = vld [vmem:[#allocation6 + $0xb0] sm:$0xff]
    %v176 = vld [vmem:[#allocation6 + $0xb8] sm:$0xff]
    %v177 = vld [vmem:[#allocation6 + $0xc0] sm:$0xff]
    %v178 = vld [vmem:[#allocation6 + $0xc8] sm:$0xff]
    %v179 = vld [vmem:[#allocation6 + $0xd0] sm:$0xff]
    %v180 = vld [vmem:[#allocation6 + $0xd8] sm:$0xff]
    %v181 = vld [vmem:[#allocation6 + $0xe0] sm:$0xff]
    %v182 = vld [vmem:[#allocation6 + $0xe8] sm:$0xff]
    %v183 = vld [vmem:[#allocation6 + $0xf0] sm:$0xff]
    %v184 = vld [vmem:[#allocation6 + $0xf8] sm:$0xff]
    %v185 = vld [vmem:[#allocation6 + $0x100] sm:$0xff]
    %v186 = vld [vmem:[#allocation6 + $0x108] sm:$0xff]
    %v187 = vld [vmem:[#allocation6 + $0x110] sm:$0xff]
    %v188 = vld [vmem:[#allocation6 + $0x118] sm:$0xff]
    %v189 = vld [vmem:[#allocation6 + $0x120] sm:$0xff]
    %v190 = vld [vmem:[#allocation6 + $0x128] sm:$0xff]
    %v191 = vld [vmem:[#allocation6 + $0x130] sm:$0xff]
    %v192 = vld [vmem:[#allocation6 + $0x138] sm:$0xff]
    %v193 = vld [vmem:[#allocation6 + $0x140] sm:$0xff]
    %v194 = vld [vmem:[#allocation6 + $0x148] sm:$0xff]
    %v195 = vld [vmem:[#allocation6 + $0x150] sm:$0xff]
    %v196 = vld [vmem:[#allocation6 + $0x158] sm:$0xff]
    %v197 = vld [vmem:[#allocation6 + $0x160] sm:$0xff]
    %v198 = vld [vmem:[#allocation6 + $0x168] sm:$0xff]
    %v199 = vld [vmem:[#allocation6 + $0x170] sm:$0xff]
    %v200 = vld [vmem:[#allocation6 + $0x178] sm:$0xff]
    %v201 = vld [vmem:[#allocation6 + $0x180] sm:$0xff]
    %v202 = vld [vmem:[#allocation6 + $0x188] sm:$0xff]
    %v203 = vld [vmem:[#allocation6 + $0x190] sm:$0xff]
    %v204 = vld [vmem:[#allocation6 + $0x198] sm:$0xff]
    %v205 = vld [vmem:[#allocation6 + $0x1a0] sm:$0xff]
    %v206 = vld [vmem:[#allocation6 + $0x1a8] sm:$0xff]
    %v207 = vld [vmem:[#allocation6 + $0x1b0] sm:$0xff]
    %v208 = vld [vmem:[#allocation6 + $0x1b8] sm:$0xff]
    %v209 = vld [vmem:[#allocation6 + $0x1c0] sm:$0xff]
    %v210 = vld [vmem:[#allocation6 + $0x1c8] sm:$0xff]
    %v211 = vld [vmem:[#allocation6 + $0x1d0] sm:$0xff]
    %v212 = vld [vmem:[#allocation6 + $0x1d8] sm:$0xff]
    %v213 = vld [vmem:[#allocation6 + $0x1e0] sm:$0xff]
    %v214 = vld [vmem:[#allocation6 + $0x1e8] sm:$0xff]
    %v215 = vld [vmem:[#allocation6 + $0x1f0] sm:$0xff]
    %v216 = vld [vmem:[#allocation6 + $0x1f8] sm:$0xff]
    %v217 = vld [vmem:[#allocation6 + $0x200] sm:$0xff]
    %v218 = vld [vmem:[#allocation6 + $0x208] sm:$0xff]
    %v219 = vld [vmem:[#allocation6 + $0x210] sm:$0xff]
    %v220 = vld [vmem:[#allocation6 + $0x218] sm:$0xff]
    %v221 = vld [vmem:[#allocation6 + $0x220] sm:$0xff]
    %v222 = vld [vmem:[#allocation6 + $0x228] sm:$0xff]
    %v223 = vld [vmem:[#allocation6 + $0x230] sm:$0xff]
    %v224 = vld [vmem:[#allocation6 + $0x238] sm:$0xff]
    %v225 = vld [vmem:[#allocation6 + $0x240] sm:$0xff]
    %v226 = vld [vmem:[#allocation6 + $0x248] sm:$0xff]
    %v227 = vld [vmem:[#allocation6 + $0x250] sm:$0xff]
    %v228 = vld [vmem:[#allocation6 + $0x258] sm:$0xff]
    %v229 = vld [vmem:[#allocation6 + $0x260] sm:$0xff]
    %v230 = vld [vmem:[#allocation6 + $0x268] sm:$0xff]
    %v231 = vld [vmem:[#allocation6 + $0x270] sm:$0xff]
    %v232 = vld [vmem:[#allocation6 + $0x278] sm:$0xff]
    %v233 = vld [vmem:[#allocation6 + $0x280] sm:$0xff]
    %v234 = vld [vmem:[#allocation6 + $0x288] sm:$0xff]
    %v235 = vld [vmem:[#allocation6 + $0x290] sm:$0xff]
    %v236 = vld [vmem:[#allocation6 + $0x298] sm:$0xff]
    %v237 = vld [vmem:[#allocation6 + $0x2a0] sm:$0xff]
    %v238 = vld [vmem:[#allocation6 + $0x2a8] sm:$0xff]
    %v239 = vld [vmem:[#allocation6 + $0x2b0] sm:$0xff]
    %v240 = vld [vmem:[#allocation6 + $0x2b8] sm:$0xff]
    %v241 = vld [vmem:[#allocation6 + $0x2c0] sm:$0xff]
    %v242 = vld [vmem:[#allocation6 + $0x2c8] sm:$0xff]
    %v243 = vld [vmem:[#allocation6 + $0x2d0] sm:$0xff]
    %v244 = vld [vmem:[#allocation6 + $0x2d8] sm:$0xff]
    %v245 = vld [vmem:[#allocation6 + $0x2e0] sm:$0xff]
    %v246 = vld [vmem:[#allocation6 + $0x2e8] sm:$0xff]
    %v247 = vld [vmem:[#allocation6 + $0x2f0] sm:$0xff]
    %v248 = vld [vmem:[#allocation6 + $0x2f8] sm:$0xff]
    %v249 = vld [vmem:[#allocation6 + $0x300] sm:$0xff]
    %v250 = vld [vmem:[#allocation6 + $0x308] sm:$0xff]
    %v251 = vld [vmem:[#allocation6 + $0x310] sm:$0xff]
    %v252 = vld [vmem:[#allocation6 + $0x318] sm:$0xff]
    %v253 = vld [vmem:[#allocation6 + $0x320] sm:$0xff]
    %v254 = vld [vmem:[#allocation6 + $0x328] sm:$0xff]
    %v255 = vld [vmem:[#allocation6 + $0x330] sm:$0xff]
    %v256 = vld [vmem:[#allocation6 + $0x338] sm:$0xff]
    %v257 = vld [vmem:[#allocation6 + $0x340] sm:$0xff]
    %v258 = vld [vmem:[#allocation6 + $0x348] sm:$0xff]
    %v259 = vld [vmem:[#allocation6 + $0x350] sm:$0xff]
    %v260 = vld [vmem:[#allocation6 + $0x358] sm:$0xff]
    %v261 = vld [vmem:[#allocation6 + $0x360] sm:$0xff]
    %v262 = vld [vmem:[#allocation6 + $0x368] sm:$0xff]
    %v263 = vld [vmem:[#allocation6 + $0x370] sm:$0xff]
    %v264 = vld [vmem:[#allocation6 + $0x378] sm:$0xff]
    %v265 = vld [vmem:[#allocation6 + $0x380] sm:$0xff]
    %v266 = vld [vmem:[#allocation6 + $0x388] sm:$0xff]
    %v267 = vld [vmem:[#allocation6 + $0x390] sm:$0xff]
    %v268 = vld [vmem:[#allocation6 + $0x398] sm:$0xff]
    %v269 = vld [vmem:[#allocation6 + $0x3a0] sm:$0xff]
    %v270 = vld [vmem:[#allocation6 + $0x3a8] sm:$0xff]
    %v271 = vld [vmem:[#allocation6 + $0x3b0] sm:$0xff]
    %v272 = vld [vmem:[#allocation6 + $0x3b8] sm:$0xff]
    %v273 = vld [vmem:[#allocation6 + $0x3c0] sm:$0xff]
    %v274 = vld [vmem:[#allocation6 + $0x3c8] sm:$0xff]
    %v275 = vld [vmem:[#allocation6 + $0x3d0] sm:$0xff]
    %v276 = vld [vmem:[#allocation6 + $0x3d8] sm:$0xff]
    %v277 = vld [vmem:[#allocation6 + $0x3e0] sm:$0xff]
    %v278 = vld [vmem:[#allocation6 + $0x3e8] sm:$0xff]
    %v279 = vld [vmem:[#allocation6 + $0x3f0] sm:$0xff]
    %v280 = vld [vmem:[#allocation6 + $0x3f8] sm:$0xff]
    %v281 = vld [vmem:[#allocation8] sm:$0xff]
    %v283 = vlaneseq
    %v284 = vshrl.u32 %v283, 7
    %v285 = vsub.s32 0, %v284
    %v286 = vrot.slane %v281, %v285
    %v287 = vlaneseq
    %v288 = vshrl.u32 %v287, 7
    %v289 = vsub.s32 1, %v288
    %v290 = vrot.slane %v281, %v289
    %v291 = vlaneseq
    %v292 = vshrl.u32 %v291, 7
    %v293 = vsub.s32 2, %v292
    %v294 = vrot.slane %v281, %v293
    %v295 = vlaneseq
    %v296 = vshrl.u32 %v295, 7
    %v297 = vsub.s32 3, %v296
    %v298 = vrot.slane %v281, %v297
    %v299 = vlaneseq
    %v300 = vshrl.u32 %v299, 7
    %v301 = vsub.s32 4, %v300
    %v302 = vrot.slane %v281, %v301
    %v303 = vlaneseq
    %v304 = vshrl.u32 %v303, 7
    %v305 = vsub.s32 5, %v304
    %v306 = vrot.slane %v281, %v305
    %v307 = vlaneseq
    %v308 = vshrl.u32 %v307, 7
    %v309 = vsub.s32 6, %v308
    %v310 = vrot.slane %v281, %v309
    %v311 = vlaneseq
    %v312 = vshrl.u32 %v311, 7
    %v313 = vsub.s32 7, %v312
    %v314 = vrot.slane %v281, %v313
    %323 = vmatprep.subr.mxu0 %v274
    %324 = vmatpush1.msra.mxu0 %v273
    %325 = vmatprep.subr.mxu0 %v266
    %326 = vmatpush1.msra.mxu0 %v265
    %327 = vmatprep.subr.mxu0 %v258
    %328 = vmatpush1.msra.mxu0 %v257
    %329 = vmatprep.subr.mxu0 %v250
    %330 = vmatpush1.msra.mxu0 %v249
    %331 = vmatprep.subr.mxu0 %v242
    %332 = vmatpush1.msra.mxu0 %v241
    %333 = vmatprep.subr.mxu0 %v234
    %334 = vmatpush1.msra.mxu0 %v233
    %335 = vmatprep.subr.mxu0 %v226
    %336 = vmatpush1.msra.mxu0 %v225
    %337 = vmatprep.subr.mxu0 %v218
    %338 = vmatpush1.msra.mxu0 %v217
    %339 = vmatprep.subr.mxu0 %v210
    %340 = vmatpush1.msra.mxu0 %v209
    %341 = vmatprep.subr.mxu0 %v202
    %342 = vmatpush1.msra.mxu0 %v201
    %343 = vmatprep.subr.mxu0 %v194
    %344 = vmatpush1.msra.mxu0 %v193
    %345 = vmatprep.subr.mxu0 %v186
    %346 = vmatpush1.msra.mxu0 %v185
    %347 = vmatprep.subr.mxu0 %v178
    %348 = vmatpush1.msra.mxu0 %v177
    %349 = vmatprep.subr.mxu0 %v170
    %350 = vmatpush1.msra.mxu0 %v169
    %351 = vmatprep.subr.mxu0 %v162
    %352 = vmatpush1.msra.mxu0 %v161
    %353 = vmatprep.subr.mxu0 %v154
    %354 = vmatpush1.msra.mxu0 %v153
    %355 = vmatprep.subr.mxu0 0.0
    %356 = vmatpush2.msra.mxu0 0.0
    %357 = vmatprep.subr.mxu0 0.0
    %358 = vmatpush2.msra.mxu0 0.0
    %359 = vmatprep.subr.mxu0 0.0
    %360 = vmatpush2.msra.mxu0 0.0
    %361 = vmatprep.subr.mxu0 0.0
    %362 = vmatpush2.msra.mxu0 0.0
    %363 = vmatprep.subr.mxu0 0.0
    %364 = vmatpush2.msra.mxu0 0.0
    %365 = vmatprep.subr.mxu0 0.0
    %366 = vmatpush2.msra.mxu0 0.0
    %367 = vmatprep.subr.mxu0 0.0
    %368 = vmatpush2.msra.mxu0 0.0
    %369 = vmatprep.subr.mxu0 0.0
    %370 = vmatpush2.msra.mxu0 0.0
    %371 = vmatprep.subr.mxu0 0.0
    %372 = vmatpush2.msra.mxu0 0.0
    %373 = vmatprep.subr.mxu0 0.0
    %374 = vmatpush2.msra.mxu0 0.0
    %375 = vmatprep.subr.mxu0 0.0
    %376 = vmatpush2.msra.mxu0 0.0
    %377 = vmatprep.subr.mxu0 0.0
    %378 = vmatpush2.msra.mxu0 0.0
    %379 = vmatprep.subr.mxu0 0.0
    %380 = vmatpush2.msra.mxu0 0.0
    %381 = vmatprep.subr.mxu0 0.0
    %382 = vmatpush2.msra.mxu0 0.0
    %383 = vmatprep.subr.mxu0 0.0
    %384 = vmatpush2.msra.mxu0 0.0
    %385 = vmatprep.subr.mxu0 0.0
    %386 = vmatpush2.msra.mxu0 0.0
    %387 = vmatprep.mubr.f32.mxu0 0.0
    %388 = vmatmul.mubr.f32.gmra.mxu0 %v152
    %v389 = vpop.f32.mrf.mxu0
    %v390 = vadd.f32 %v286, %v389
    %v391 = vpop.f32.mrf.mxu0
    %v392 = vadd.f32 %v290, %v391
    %393 = vdwg.mxu0
    %394 = vmatprep.subr.mxu0 %v276
    %395 = vmatpush1.msra.mxu0 %v275
    %396 = vmatprep.subr.mxu0 %v268
    %397 = vmatpush1.msra.mxu0 %v267
    %398 = vmatprep.subr.mxu0 %v260
    %399 = vmatpush1.msra.mxu0 %v259
    %400 = vmatprep.subr.mxu0 %v252
    %401 = vmatpush1.msra.mxu0 %v251
    %402 = vmatprep.subr.mxu0 %v244
    %403 = vmatpush1.msra.mxu0 %v243
    %404 = vmatprep.subr.mxu0 %v236
    %405 = vmatpush1.msra.mxu0 %v235
    %406 = vmatprep.subr.mxu0 %v228
    %407 = vmatpush1.msra.mxu0 %v227
    %408 = vmatprep.subr.mxu0 %v220
    %409 = vmatpush1.msra.mxu0 %v219
    %410 = vmatprep.subr.mxu0 %v212
    %411 = vmatpush1.msra.mxu0 %v211
    %412 = vmatprep.subr.mxu0 %v204
    %413 = vmatpush1.msra.mxu0 %v203
    %414 = vmatprep.subr.mxu0 %v196
    %415 = vmatpush1.msra.mxu0 %v195
    %416 = vmatprep.subr.mxu0 %v188
    %417 = vmatpush1.msra.mxu0 %v187
    %418 = vmatprep.subr.mxu0 %v180
    %419 = vmatpush1.msra.mxu0 %v179
    %420 = vmatprep.subr.mxu0 %v172
    %421 = vmatpush1.msra.mxu0 %v171
    %422 = vmatprep.subr.mxu0 %v164
    %423 = vmatpush1.msra.mxu0 %v163
    %424 = vmatprep.subr.mxu0 %v156
    %425 = vmatpush1.msra.mxu0 %v155
    %426 = vmatprep.subr.mxu0 0.0
    %427 = vmatpush2.msra.mxu0 0.0
    %428 = vmatprep.subr.mxu0 0.0
    %429 = vmatpush2.msra.mxu0 0.0
    %430 = vmatprep.subr.mxu0 0.0
    %431 = vmatpush2.msra.mxu0 0.0
    %432 = vmatprep.subr.mxu0 0.0
    %433 = vmatpush2.msra.mxu0 0.0
    %434 = vmatprep.subr.mxu0 0.0
    %435 = vmatpush2.msra.mxu0 0.0
    %436 = vmatprep.subr.mxu0 0.0
    %437 = vmatpush2.msra.mxu0 0.0
    %438 = vmatprep.subr.mxu0 0.0
    %439 = vmatpush2.msra.mxu0 0.0
    %440 = vmatprep.subr.mxu0 0.0
    %441 = vmatpush2.msra.mxu0 0.0
    %442 = vmatprep.subr.mxu0 0.0
    %443 = vmatpush2.msra.mxu0 0.0
    %444 = vmatprep.subr.mxu0 0.0
    %445 = vmatpush2.msra.mxu0 0.0
    %446 = vmatprep.subr.mxu0 0.0
    %447 = vmatpush2.msra.mxu0 0.0
    %448 = vmatprep.subr.mxu0 0.0
    %449 = vmatpush2.msra.mxu0 0.0
    %450 = vmatprep.subr.mxu0 0.0
    %451 = vmatpush2.msra.mxu0 0.0
    %452 = vmatprep.subr.mxu0 0.0
    %453 = vmatpush2.msra.mxu0 0.0
    %454 = vmatprep.subr.mxu0 0.0
    %455 = vmatpush2.msra.mxu0 0.0
    %456 = vmatprep.subr.mxu0 0.0
    %457 = vmatpush2.msra.mxu0 0.0
    %458 = vmatprep.mubr.f32.mxu0 0.0
    %459 = vmatmul.mubr.f32.gmra.mxu0 %v152
    %v460 = vpop.f32.mrf.mxu0
    %v461 = vadd.f32 %v294, %v460
    %v462 = vpop.f32.mrf.mxu0
    %v463 = vadd.f32 %v298, %v462
    %464 = vdwg.mxu0
    %465 = vmatprep.subr.mxu0 %v278
    %466 = vmatpush1.msra.mxu0 %v277
    %467 = vmatprep.subr.mxu0 %v270
    %468 = vmatpush1.msra.mxu0 %v269
    %469 = vmatprep.subr.mxu0 %v262
    %470 = vmatpush1.msra.mxu0 %v261
    %471 = vmatprep.subr.mxu0 %v254
    %472 = vmatpush1.msra.mxu0 %v253
    %473 = vmatprep.subr.mxu0 %v246
    %474 = vmatpush1.msra.mxu0 %v245
    %475 = vmatprep.subr.mxu0 %v238
    %476 = vmatpush1.msra.mxu0 %v237
    %477 = vmatprep.subr.mxu0 %v230
    %478 = vmatpush1.msra.mxu0 %v229
    %479 = vmatprep.subr.mxu0 %v222
    %480 = vmatpush1.msra.mxu0 %v221
    %481 = vmatprep.subr.mxu0 %v214
    %482 = vmatpush1.msra.mxu0 %v213
    %483 = vmatprep.subr.mxu0 %v206
    %484 = vmatpush1.msra.mxu0 %v205
    %485 = vmatprep.subr.mxu0 %v198
    %486 = vmatpush1.msra.mxu0 %v197
    %487 = vmatprep.subr.mxu0 %v190
    %488 = vmatpush1.msra.mxu0 %v189
    %489 = vmatprep.subr.mxu0 %v182
    %490 = vmatpush1.msra.mxu0 %v181
    %491 = vmatprep.subr.mxu0 %v174
    %492 = vmatpush1.msra.mxu0 %v173
    %493 = vmatprep.subr.mxu0 %v166
    %494 = vmatpush1.msra.mxu0 %v165
    %495 = vmatprep.subr.mxu0 %v158
    %496 = vmatpush1.msra.mxu0 %v157
    %497 = vmatprep.subr.mxu0 0.0
    %498 = vmatpush2.msra.mxu0 0.0
    %499 = vmatprep.subr.mxu0 0.0
    %500 = vmatpush2.msra.mxu0 0.0
    %501 = vmatprep.subr.mxu0 0.0
    %502 = vmatpush2.msra.mxu0 0.0
    %503 = vmatprep.subr.mxu0 0.0
    %504 = vmatpush2.msra.mxu0 0.0
    %505 = vmatprep.subr.mxu0 0.0
    %506 = vmatpush2.msra.mxu0 0.0
    %507 = vmatprep.subr.mxu0 0.0
    %508 = vmatpush2.msra.mxu0 0.0
    %509 = vmatprep.subr.mxu0 0.0
    %510 = vmatpush2.msra.mxu0 0.0
    %511 = vmatprep.subr.mxu0 0.0
    %512 = vmatpush2.msra.mxu0 0.0
    %513 = vmatprep.subr.mxu0 0.0
    %514 = vmatpush2.msra.mxu0 0.0
    %515 = vmatprep.subr.mxu0 0.0
    %516 = vmatpush2.msra.mxu0 0.0
    %517 = vmatprep.subr.mxu0 0.0
    %518 = vmatpush2.msra.mxu0 0.0
    %519 = vmatprep.subr.mxu0 0.0
    %520 = vmatpush2.msra.mxu0 0.0
    %521 = vmatprep.subr.mxu0 0.0
    %522 = vmatpush2.msra.mxu0 0.0
    %523 = vmatprep.subr.mxu0 0.0
    %524 = vmatpush2.msra.mxu0 0.0
    %525 = vmatprep.subr.mxu0 0.0
    %526 = vmatpush2.msra.mxu0 0.0
    %527 = vmatprep.subr.mxu0 0.0
    %528 = vmatpush2.msra.mxu0 0.0
    %529 = vmatprep.mubr.f32.mxu0 0.0
    %530 = vmatmul.mubr.f32.gmra.mxu0 %v152
    %v531 = vpop.f32.mrf.mxu0
    %v532 = vadd.f32 %v302, %v531
    %v533 = vpop.f32.mrf.mxu0
    %v534 = vadd.f32 %v306, %v533
    %535 = vdwg.mxu0
    %536 = vmatprep.subr.mxu0 %v280
    %537 = vmatpush1.msra.mxu0 %v279
    %538 = vmatprep.subr.mxu0 %v272
    %539 = vmatpush1.msra.mxu0 %v271
    %540 = vmatprep.subr.mxu0 %v264
    %541 = vmatpush1.msra.mxu0 %v263
    %542 = vmatprep.subr.mxu0 %v256
    %543 = vmatpush1.msra.mxu0 %v255
    %544 = vmatprep.subr.mxu0 %v248
    %545 = vmatpush1.msra.mxu0 %v247
    %546 = vmatprep.subr.mxu0 %v240
    %547 = vmatpush1.msra.mxu0 %v239
    %548 = vmatprep.subr.mxu0 %v232
    %549 = vmatpush1.msra.mxu0 %v231
    %550 = vmatprep.subr.mxu0 %v224
    %551 = vmatpush1.msra.mxu0 %v223
    %552 = vmatprep.subr.mxu0 %v216
    %553 = vmatpush1.msra.mxu0 %v215
    %554 = vmatprep.subr.mxu0 %v208
    %555 = vmatpush1.msra.mxu0 %v207
    %556 = vmatprep.subr.mxu0 %v200
    %557 = vmatpush1.msra.mxu0 %v199
    %558 = vmatprep.subr.mxu0 %v192
    %559 = vmatpush1.msra.mxu0 %v191
    %560 = vmatprep.subr.mxu0 %v184
    %561 = vmatpush1.msra.mxu0 %v183
    %562 = vmatprep.subr.mxu0 %v176
    %563 = vmatpush1.msra.mxu0 %v175
    %564 = vmatprep.subr.mxu0 %v168
    %565 = vmatpush1.msra.mxu0 %v167
    %566 = vmatprep.subr.mxu0 %v160
    %567 = vmatpush1.msra.mxu0 %v159
    %568 = vmatprep.subr.mxu0 0.0
    %569 = vmatpush2.msra.mxu0 0.0
    %570 = vmatprep.subr.mxu0 0.0
    %571 = vmatpush2.msra.mxu0 0.0
    %572 = vmatprep.subr.mxu0 0.0
    %573 = vmatpush2.msra.mxu0 0.0
    %574 = vmatprep.subr.mxu0 0.0
    %575 = vmatpush2.msra.mxu0 0.0
    %576 = vmatprep.subr.mxu0 0.0
    %577 = vmatpush2.msra.mxu0 0.0
    %578 = vmatprep.subr.mxu0 0.0
    %579 = vmatpush2.msra.mxu0 0.0
    %580 = vmatprep.subr.mxu0 0.0
    %581 = vmatpush2.msra.mxu0 0.0
    %582 = vmatprep.subr.mxu0 0.0
    %583 = vmatpush2.msra.mxu0 0.0
    %584 = vmatprep.subr.mxu0 0.0
    %585 = vmatpush2.msra.mxu0 0.0
    %586 = vmatprep.subr.mxu0 0.0
    %587 = vmatpush2.msra.mxu0 0.0
    %588 = vmatprep.subr.mxu0 0.0
    %589 = vmatpush2.msra.mxu0 0.0
    %590 = vmatprep.subr.mxu0 0.0
    %591 = vmatpush2.msra.mxu0 0.0
    %592 = vmatprep.subr.mxu0 0.0
    %593 = vmatpush2.msra.mxu0 0.0
    %594 = vmatprep.subr.mxu0 0.0
    %595 = vmatpush2.msra.mxu0 0.0
    %596 = vmatprep.subr.mxu0 0.0
    %597 = vmatpush2.msra.mxu0 0.0
    %598 = vmatprep.subr.mxu0 0.0
    %599 = vmatpush2.msra.mxu0 0.0
    %600 = vmatprep.mubr.f32.mxu0 0.0
    %601 = vmatmul.mubr.f32.gmra.mxu0 %v152
    %v602 = vpop.f32.mrf.mxu0
    %v603 = vadd.f32 %v310, %v602
    %v604 = vpop.f32.mrf.mxu0
    %v605 = vadd.f32 %v314, %v604
    %606 = vdwg.mxu0
    %v607 = vtanh.pop %v390
    %v608 = vtanh.pop %v392
    %v609 = vtanh.pop %v461
    %v610 = vtanh.pop %v463
    %v611 = vtanh.pop %v532
    %v612 = vtanh.pop %v534
    %v613 = vtanh.pop %v603
    %v614 = vtanh.pop %v605
    %615 = vst [vmem:[#allocation2 + $0x2] sm:$0x1] %v607
    %616 = vst [vmem:[#allocation2 + $0x4] sm:$0x1] %v608
    %617 = vst [vmem:[#allocation2 + $0x6] sm:$0x1] %v609
    %618 = vst [vmem:[#allocation2 + $0x8] sm:$0x1] %v610
    %619 = vst [vmem:[#allocation2 + $0xa] sm:$0x1] %v611
    %620 = vst [vmem:[#allocation2 + $0xc] sm:$0x1] %v612
    %621 = vst [vmem:[#allocation2 + $0xe] sm:$0x1] %v613
    %622 = vst [vmem:[#allocation2 + $0x10] sm:$0x1] %v614
    %s623 = scalar_lea.vmem [#allocation2], 24
    %624 = vst [vmem:[%s623 + $0x1] sm:$0x2] %v607
    %625 = vst [vmem:[%s623 + $0x3] sm:$0x2] %v608
    %626 = vst [vmem:[%s623 + $0x5] sm:$0x2] %v609
    %627 = vst [vmem:[%s623 + $0x7] sm:$0x2] %v610
    %628 = vst [vmem:[%s623 + $0x9] sm:$0x2] %v611
    %629 = vst [vmem:[%s623 + $0xb] sm:$0x2] %v612
    %630 = vst [vmem:[%s623 + $0xd] sm:$0x2] %v613
    %631 = vst [vmem:[%s623 + $0xf] sm:$0x2] %v614
    %v632 = vld [vmem:[#allocation2] sm:$0xff]
    %v633 = vld [vmem:[#allocation2 + $0x8] sm:$0xff]
    %v634 = vld [vmem:[#allocation2 + $0x18] sm:$0xff]
    %v635 = vld [vmem:[#allocation2 + $0x20] sm:$0xff]
    %v636 = vld [vmem:[#allocation9] sm:$0xff]
    %v637 = vld [vmem:[#allocation9 + $0x8] sm:$0xff]
    %v638 = vld [vmem:[#allocation9 + $0x10] sm:$0xff]
    %v639 = vld [vmem:[#allocation9 + $0x18] sm:$0xff]
    %v640 = vld [vmem:[#allocation9 + $0x20] sm:$0xff]
    %v641 = vld [vmem:[#allocation9 + $0x28] sm:$0xff]
    %v642 = vld [vmem:[#allocation9 + $0x30] sm:$0xff]
    %v643 = vld [vmem:[#allocation9 + $0x38] sm:$0xff]
    %v644 = vld [vmem:[#allocation9 + $0x40] sm:$0xff]
    %v645 = vld [vmem:[#allocation9 + $0x48] sm:$0xff]
    %v646 = vld [vmem:[#allocation9 + $0x50] sm:$0xff]
    %v647 = vld [vmem:[#allocation9 + $0x58] sm:$0xff]
    %v648 = vld [vmem:[#allocation9 + $0x60] sm:$0xff]
    %v649 = vld [vmem:[#allocation9 + $0x68] sm:$0xff]
    %v650 = vld [vmem:[#allocation9 + $0x70] sm:$0xff]
    %v651 = vld [vmem:[#allocation9 + $0x78] sm:$0xff]
    %v652 = vld [vmem:[#allocation2 + $0x1] sm:$0xff]
    %v653 = vld [vmem:[#allocation2 + $0x9] sm:$0xff]
    %v654 = vld [vmem:[#allocation2 + $0x19] sm:$0xff]
    %v655 = vld [vmem:[#allocation2 + $0x21] sm:$0xff]
    %s656 = scalar_lea.vmem [#allocation9], 128
    %v657 = vld [vmem:[%s656] sm:$0xff]
    %v658 = vld [vmem:[%s656 + $0x8] sm:$0xff]
    %v659 = vld [vmem:[%s656 + $0x10] sm:$0xff]
    %v660 = vld [vmem:[%s656 + $0x18] sm:$0xff]
    %v661 = vld [vmem:[%s656 + $0x20] sm:$0xff]
    %v662 = vld [vmem:[%s656 + $0x28] sm:$0xff]
    %v663 = vld [vmem:[%s656 + $0x30] sm:$0xff]
    %v664 = vld [vmem:[%s656 + $0x38] sm:$0xff]
    %v665 = vld [vmem:[%s656 + $0x40] sm:$0xff]
    %v666 = vld [vmem:[%s656 + $0x48] sm:$0xff]
    %v667 = vld [vmem:[%s656 + $0x50] sm:$0xff]
    %v668 = vld [vmem:[%s656 + $0x58] sm:$0xff]
    %v669 = vld [vmem:[%s656 + $0x60] sm:$0xff]
    %v670 = vld [vmem:[%s656 + $0x68] sm:$0xff]
    %v671 = vld [vmem:[%s656 + $0x70] sm:$0xff]
    %v672 = vld [vmem:[%s656 + $0x78] sm:$0xff]
    %673 = vmatprep.subr.mxu0 0.0
    %674 = vmatpush1.msra.mxu0 %v672
    %675 = vmatprep.subr.mxu0 0.0
    %676 = vmatpush1.msra.mxu0 %v671
    %677 = vmatprep.subr.mxu0 0.0
    %678 = vmatpush1.msra.mxu0 %v670
    %679 = vmatprep.subr.mxu0 0.0
    %680 = vmatpush1.msra.mxu0 %v669
    %681 = vmatprep.subr.mxu0 0.0
    %682 = vmatpush1.msra.mxu0 %v668
    %683 = vmatprep.subr.mxu0 0.0
    %684 = vmatpush1.msra.mxu0 %v667
    %685 = vmatprep.subr.mxu0 0.0
    %686 = vmatpush1.msra.mxu0 %v666
    %687 = vmatprep.subr.mxu0 0.0
    %688 = vmatpush1.msra.mxu0 %v665
    %689 = vmatprep.subr.mxu0 0.0
    %690 = vmatpush1.msra.mxu0 %v664
    %691 = vmatprep.subr.mxu0 0.0
    %692 = vmatpush1.msra.mxu0 %v663
    %693 = vmatprep.subr.mxu0 0.0
    %694 = vmatpush1.msra.mxu0 %v662
    %695 = vmatprep.subr.mxu0 0.0
    %696 = vmatpush1.msra.mxu0 %v661
    %697 = vmatprep.subr.mxu0 0.0
    %698 = vmatpush1.msra.mxu0 %v660
    %699 = vmatprep.subr.mxu0 0.0
    %700 = vmatpush1.msra.mxu0 %v659
    %701 = vmatprep.subr.mxu0 0.0
    %702 = vmatpush1.msra.mxu0 %v658
    %703 = vmatprep.subr.mxu0 0.0
    %704 = vmatpush1.msra.mxu0 %v657
    %705 = vmatprep.subr.mxu0 0.0
    %706 = vmatpush2.msra.mxu0 0.0
    %707 = vmatprep.subr.mxu0 0.0
    %708 = vmatpush2.msra.mxu0 0.0
    %709 = vmatprep.subr.mxu0 0.0
    %710 = vmatpush2.msra.mxu0 0.0
    %711 = vmatprep.subr.mxu0 0.0
    %712 = vmatpush2.msra.mxu0 0.0
    %713 = vmatprep.subr.mxu0 0.0
    %714 = vmatpush2.msra.mxu0 0.0
    %715 = vmatprep.subr.mxu0 0.0
    %716 = vmatpush2.msra.mxu0 0.0
    %717 = vmatprep.subr.mxu0 0.0
    %718 = vmatpush2.msra.mxu0 0.0
    %719 = vmatprep.subr.mxu0 0.0
    %720 = vmatpush2.msra.mxu0 0.0
    %721 = vmatprep.subr.mxu0 0.0
    %722 = vmatpush2.msra.mxu0 0.0
    %723 = vmatprep.subr.mxu0 0.0
    %724 = vmatpush2.msra.mxu0 0.0
    %725 = vmatprep.subr.mxu0 0.0
    %726 = vmatpush2.msra.mxu0 0.0
    %727 = vmatprep.subr.mxu0 0.0
    %728 = vmatpush2.msra.mxu0 0.0
    %729 = vmatprep.subr.mxu0 0.0
    %730 = vmatpush2.msra.mxu0 0.0
    %731 = vmatprep.subr.mxu0 0.0
    %732 = vmatpush2.msra.mxu0 0.0
    %733 = vmatprep.subr.mxu0 0.0
    %734 = vmatpush2.msra.mxu0 0.0
    %735 = vmatprep.subr.mxu0 0.0
    %736 = vmatpush2.msra.mxu0 0.0
    %737 = vmatprep.mubr.f32.mxu0 0.0
    %738 = vmatmul.mubr.f32.gmra.mxu0 %v652
    %v739 = vpop.f32.mrf.mxu0
    %v740 = vadd.f32 0.0, %v739
    %v741 = vpop.f32.mrf.mxu0
    %742 = vmatprep.mubr.f32.mxu0 0.0
    %743 = vmatmul.mubr.f32.gmra.mxu0 %v653
    %v744 = vpop.f32.mrf.mxu0
    %v745 = vadd.f32 0.0, %v744
    %v746 = vpop.f32.mrf.mxu0
    %747 = vmatprep.mubr.f32.mxu0 0.0
    %748 = vmatmul.mubr.f32.gmra.mxu0 %v654
    %v749 = vpop.f32.mrf.mxu0
    %v750 = vadd.f32 0.0, %v749
    %v751 = vpop.f32.mrf.mxu0
    %752 = vmatprep.mubr.f32.mxu0 0.0
    %753 = vmatmul.mubr.f32.gmra.mxu0 %v655
    %v754 = vpop.f32.mrf.mxu0
    %v755 = vadd.f32 0.0, %v754
    %v756 = vpop.f32.mrf.mxu0
    %757 = vdwg.mxu0
    %758 = vmatprep.subr.mxu0 0.0
    %759 = vmatpush1.msra.mxu0 %v651
    %760 = vmatprep.subr.mxu0 0.0
    %761 = vmatpush1.msra.mxu0 %v650
    %762 = vmatprep.subr.mxu0 0.0
    %763 = vmatpush1.msra.mxu0 %v649
    %764 = vmatprep.subr.mxu0 0.0
    %765 = vmatpush1.msra.mxu0 %v648
    %766 = vmatprep.subr.mxu0 0.0
    %767 = vmatpush1.msra.mxu0 %v647
    %768 = vmatprep.subr.mxu0 0.0
    %769 = vmatpush1.msra.mxu0 %v646
    %770 = vmatprep.subr.mxu0 0.0
    %771 = vmatpush1.msra.mxu0 %v645
    %772 = vmatprep.subr.mxu0 0.0
    %773 = vmatpush1.msra.mxu0 %v644
    %774 = vmatprep.subr.mxu0 0.0
    %775 = vmatpush1.msra.mxu0 %v643
    %776 = vmatprep.subr.mxu0 0.0
    %777 = vmatpush1.msra.mxu0 %v642
    %778 = vmatprep.subr.mxu0 0.0
    %779 = vmatpush1.msra.mxu0 %v641
    %780 = vmatprep.subr.mxu0 0.0
    %781 = vmatpush1.msra.mxu0 %v640
    %782 = vmatprep.subr.mxu0 0.0
    %783 = vmatpush1.msra.mxu0 %v639
    %784 = vmatprep.subr.mxu0 0.0
    %785 = vmatpush1.msra.mxu0 %v638
    %786 = vmatprep.subr.mxu0 0.0
    %787 = vmatpush1.msra.mxu0 %v637
    %788 = vmatprep.subr.mxu0 0.0
    %789 = vmatpush1.msra.mxu0 %v636
    %790 = vmatprep.subr.mxu0 0.0
    %791 = vmatpush2.msra.mxu0 0.0
    %792 = vmatprep.subr.mxu0 0.0
    %793 = vmatpush2.msra.mxu0 0.0
    %794 = vmatprep.subr.mxu0 0.0
    %795 = vmatpush2.msra.mxu0 0.0
    %796 = vmatprep.subr.mxu0 0.0
    %797 = vmatpush2.msra.mxu0 0.0
    %798 = vmatprep.subr.mxu0 0.0
    %799 = vmatpush2.msra.mxu0 0.0
    %800 = vmatprep.subr.mxu0 0.0
    %801 = vmatpush2.msra.mxu0 0.0
    %802 = vmatprep.subr.mxu0 0.0
    %803 = vmatpush2.msra.mxu0 0.0
    %804 = vmatprep.subr.mxu0 0.0
    %805 = vmatpush2.msra.mxu0 0.0
    %806 = vmatprep.subr.mxu0 0.0
    %807 = vmatpush2.msra.mxu0 0.0
    %808 = vmatprep.subr.mxu0 0.0
    %809 = vmatpush2.msra.mxu0 0.0
    %810 = vmatprep.subr.mxu0 0.0
    %811 = vmatpush2.msra.mxu0 0.0
    %812 = vmatprep.subr.mxu0 0.0
    %813 = vmatpush2.msra.mxu0 0.0
    %814 = vmatprep.subr.mxu0 0.0
    %815 = vmatpush2.msra.mxu0 0.0
    %816 = vmatprep.subr.mxu0 0.0
    %817 = vmatpush2.msra.mxu0 0.0
    %818 = vmatprep.subr.mxu0 0.0
    %819 = vmatpush2.msra.mxu0 0.0
    %820 = vmatprep.subr.mxu0 0.0
    %821 = vmatpush2.msra.mxu0 0.0
    %822 = vmatprep.mubr.f32.mxu0 0.0
    %823 = vmatmul.mubr.f32.gmra.mxu0 %v632
    %v824 = vpop.f32.mrf.mxu0
    %v825 = vadd.f32 %v740, %v824
    %v826 = vpop.f32.mrf.mxu0
    %827 = vmatprep.mubr.f32.mxu0 0.0
    %828 = vmatmul.mubr.f32.gmra.mxu0 %v633
    %v829 = vpop.f32.mrf.mxu0
    %v830 = vadd.f32 %v745, %v829
    %v831 = vpop.f32.mrf.mxu0
    %832 = vmatprep.mubr.f32.mxu0 0.0
    %833 = vmatmul.mubr.f32.gmra.mxu0 %v634
    %v834 = vpop.f32.mrf.mxu0
    %v835 = vadd.f32 %v750, %v834
    %v836 = vpop.f32.mrf.mxu0
    %837 = vmatprep.mubr.f32.mxu0 0.0
    %838 = vmatmul.mubr.f32.gmra.mxu0 %v635
    %v839 = vpop.f32.mrf.mxu0
    %v840 = vadd.f32 %v755, %v839
    %v841 = vpop.f32.mrf.mxu0
    %842 = vdwg.mxu0
    %v843 = vld [vmem:[#allocation2 + $0x2] sm:$0xff]
    %v844 = vld [vmem:[#allocation2 + $0xa] sm:$0xff]
    %v845 = vld [vmem:[#allocation2 + $0x1a] sm:$0xff]
    %v846 = vld [vmem:[#allocation2 + $0x22] sm:$0xff]
    %s847 = scalar_lea.vmem [#allocation9], 256
    %v848 = vld [vmem:[%s847] sm:$0xff]
    %v849 = vld [vmem:[%s847 + $0x8] sm:$0xff]
    %v850 = vld [vmem:[%s847 + $0x10] sm:$0xff]
    %v851 = vld [vmem:[%s847 + $0x18] sm:$0xff]
    %v852 = vld [vmem:[%s847 + $0x20] sm:$0xff]
    %v853 = vld [vmem:[%s847 + $0x28] sm:$0xff]
    %v854 = vld [vmem:[%s847 + $0x30] sm:$0xff]
    %v855 = vld [vmem:[%s847 + $0x38] sm:$0xff]
    %v856 = vld [vmem:[%s847 + $0x40] sm:$0xff]
    %v857 = vld [vmem:[%s847 + $0x48] sm:$0xff]
    %v858 = vld [vmem:[%s847 + $0x50] sm:$0xff]
    %v859 = vld [vmem:[%s847 + $0x58] sm:$0xff]
    %v860 = vld [vmem:[%s847 + $0x60] sm:$0xff]
    %v861 = vld [vmem:[%s847 + $0x68] sm:$0xff]
    %v862 = vld [vmem:[%s847 + $0x70] sm:$0xff]
    %v863 = vld [vmem:[%s847 + $0x78] sm:$0xff]
    %864 = vmatprep.subr.mxu0 0.0
    %865 = vmatpush1.msra.mxu0 %v863
    %866 = vmatprep.subr.mxu0 0.0
    %867 = vmatpush1.msra.mxu0 %v862
    %868 = vmatprep.subr.mxu0 0.0
    %869 = vmatpush1.msra.mxu0 %v861
    %870 = vmatprep.subr.mxu0 0.0
    %871 = vmatpush1.msra.mxu0 %v860
    %872 = vmatprep.subr.mxu0 0.0
    %873 = vmatpush1.msra.mxu0 %v859
    %874 = vmatprep.subr.mxu0 0.0
    %875 = vmatpush1.msra.mxu0 %v858
    %876 = vmatprep.subr.mxu0 0.0
    %877 = vmatpush1.msra.mxu0 %v857
    %878 = vmatprep.subr.mxu0 0.0
    %879 = vmatpush1.msra.mxu0 %v856
    %880 = vmatprep.subr.mxu0 0.0
    %881 = vmatpush1.msra.mxu0 %v855
    %882 = vmatprep.subr.mxu0 0.0
    %883 = vmatpush1.msra.mxu0 %v854
    %884 = vmatprep.subr.mxu0 0.0
    %885 = vmatpush1.msra.mxu0 %v853
    %886 = vmatprep.subr.mxu0 0.0
    %887 = vmatpush1.msra.mxu0 %v852
    %888 = vmatprep.subr.mxu0 0.0
    %889 = vmatpush1.msra.mxu0 %v851
    %890 = vmatprep.subr.mxu0 0.0
    %891 = vmatpush1.msra.mxu0 %v850
    %892 = vmatprep.subr.mxu0 0.0
    %893 = vmatpush1.msra.mxu0 %v849
    %894 = vmatprep.subr.mxu0 0.0
    %895 = vmatpush1.msra.mxu0 %v848
    %896 = vmatprep.subr.mxu0 0.0
    %897 = vmatpush2.msra.mxu0 0.0
    %898 = vmatprep.subr.mxu0 0.0
    %899 = vmatpush2.msra.mxu0 0.0
    %900 = vmatprep.subr.mxu0 0.0
    %901 = vmatpush2.msra.mxu0 0.0
    %902 = vmatprep.subr.mxu0 0.0
    %903 = vmatpush2.msra.mxu0 0.0
    %904 = vmatprep.subr.mxu0 0.0
    %905 = vmatpush2.msra.mxu0 0.0
    %906 = vmatprep.subr.mxu0 0.0
    %907 = vmatpush2.msra.mxu0 0.0
    %908 = vmatprep.subr.mxu0 0.0
    %909 = vmatpush2.msra.mxu0 0.0
    %910 = vmatprep.subr.mxu0 0.0
    %911 = vmatpush2.msra.mxu0 0.0
    %912 = vmatprep.subr.mxu0 0.0
    %913 = vmatpush2.msra.mxu0 0.0
    %914 = vmatprep.subr.mxu0 0.0
    %915 = vmatpush2.msra.mxu0 0.0
    %916 = vmatprep.subr.mxu0 0.0
    %917 = vmatpush2.msra.mxu0 0.0
    %918 = vmatprep.subr.mxu0 0.0
    %919 = vmatpush2.msra.mxu0 0.0
    %920 = vmatprep.subr.mxu0 0.0
    %921 = vmatpush2.msra.mxu0 0.0
    %922 = vmatprep.subr.mxu0 0.0
    %923 = vmatpush2.msra.mxu0 0.0
    %924 = vmatprep.subr.mxu0 0.0
    %925 = vmatpush2.msra.mxu0 0.0
    %926 = vmatprep.subr.mxu0 0.0
    %927 = vmatpush2.msra.mxu0 0.0
    %928 = vmatprep.mubr.f32.mxu0 0.0
    %929 = vmatmul.mubr.f32.gmra.mxu0 %v843
    %v930 = vpop.f32.mrf.mxu0
    %v931 = vadd.f32 0.0, %v930
    %v932 = vpop.f32.mrf.mxu0
    %933 = vmatprep.mubr.f32.mxu0 0.0
    %934 = vmatmul.mubr.f32.gmra.mxu0 %v844
    %v935 = vpop.f32.mrf.mxu0
    %v936 = vadd.f32 0.0, %v935
    %v937 = vpop.f32.mrf.mxu0
    %938 = vmatprep.mubr.f32.mxu0 0.0
    %939 = vmatmul.mubr.f32.gmra.mxu0 %v845
    %v940 = vpop.f32.mrf.mxu0
    %v941 = vadd.f32 0.0, %v940
    %v942 = vpop.f32.mrf.mxu0
    %943 = vmatprep.mubr.f32.mxu0 0.0
    %944 = vmatmul.mubr.f32.gmra.mxu0 %v846
    %v945 = vpop.f32.mrf.mxu0
    %v946 = vadd.f32 0.0, %v945
    %v947 = vpop.f32.mrf.mxu0
    %948 = vdwg.mxu0
    %v949 = vadd.f32 %v825, %v931
    %v950 = vadd.f32 %v830, %v936
    %v951 = vadd.f32 %v835, %v941
    %v952 = vadd.f32 %v840, %v946
    %v953 = vld [vmem:[#allocation11] sm:$0x1]
    %v955 = vlaneseq
    %v956 = vshrl.u32 %v955, 7
    %v957 = vsub.s32 0, %v956
    %v958 = vrot.slane %v953, %v957
    %v960 = vadd.f32 %v949, %v958
    %v961 = vadd.f32 %v950, %v958
    %v962 = vadd.f32 %v951, %v958
    %v963 = vadd.f32 %v952, %v958
    %v964 = vmax.f32 %v960, 0.0
    %v965 = vmax.f32 %v961, 0.0
    %v966 = vmax.f32 %v962, 0.0
    %v967 = vmax.f32 %v963, 0.0
    %968 = vst [vmem:[#allocation3] sm:$0x1] 0.0
    %969 = vst [vmem:[#allocation3 + $0x18] sm:$0x1] 0.0
    %970 = vst [vmem:[#allocation3 + $0x11] sm:$0x1] 0.0
    %971 = vst [vmem:[#allocation3 + $0x29] sm:$0x1] 0.0
    %972 = vst [vmem:[#allocation3 + $0x1] sm:$0xff] %v964
    %973 = vst [vmem:[#allocation3 + $0x9] sm:$0xff] %v965
    %974 = vst [vmem:[#allocation3 + $0x19] sm:$0xff] %v966
    %975 = vst [vmem:[#allocation3 + $0x21] sm:$0xff] %v967
    %v976 = vld [vmem:[#allocation3] sm:$0xff]
    %v977 = vld [vmem:[#allocation3 + $0x8] sm:$0xff]
    %v978 = vld [vmem:[#allocation3 + $0x18] sm:$0xff]
    %v979 = vld [vmem:[#allocation3 + $0x20] sm:$0xff]
    %v980 = vld [vmem:[#allocation12] sm:$0xff]
    %v981 = vld [vmem:[#allocation12 + $0x8] sm:$0xff]
    %v982 = vld [vmem:[#allocation12 + $0x10] sm:$0xff]
    %v983 = vld [vmem:[#allocation12 + $0x18] sm:$0xff]
    %v984 = vld [vmem:[#allocation12 + $0x20] sm:$0xff]
    %v985 = vld [vmem:[#allocation12 + $0x28] sm:$0xff]
    %v986 = vld [vmem:[#allocation12 + $0x30] sm:$0xff]
    %v987 = vld [vmem:[#allocation12 + $0x38] sm:$0xff]
    %v988 = vld [vmem:[#allocation12 + $0x40] sm:$0xff]
    %v989 = vld [vmem:[#allocation12 + $0x48] sm:$0xff]
    %v990 = vld [vmem:[#allocation12 + $0x50] sm:$0xff]
    %v991 = vld [vmem:[#allocation12 + $0x58] sm:$0xff]
    %v992 = vld [vmem:[#allocation12 + $0x60] sm:$0xff]
    %v993 = vld [vmem:[#allocation12 + $0x68] sm:$0xff]
    %v994 = vld [vmem:[#allocation12 + $0x70] sm:$0xff]
    %v995 = vld [vmem:[#allocation12 + $0x78] sm:$0xff]
    %s996 = scalar_lea.vmem [#allocation12], 128
    %v997 = vld [vmem:[%s996] sm:$0xff]
    %v998 = vld [vmem:[%s996 + $0x8] sm:$0xff]
    %v999 = vld [vmem:[%s996 + $0x10] sm:$0xff]
    %v1000 = vld [vmem:[%s996 + $0x18] sm:$0xff]
    %v1001 = vld [vmem:[%s996 + $0x20] sm:$0xff]
    %v1002 = vld [vmem:[%s996 + $0x28] sm:$0xff]
    %v1003 = vld [vmem:[%s996 + $0x30] sm:$0xff]
    %v1004 = vld [vmem:[%s996 + $0x38] sm:$0xff]
    %v1005 = vld [vmem:[%s996 + $0x40] sm:$0xff]
    %v1006 = vld [vmem:[%s996 + $0x48] sm:$0xff]
    %v1007 = vld [vmem:[%s996 + $0x50] sm:$0xff]
    %v1008 = vld [vmem:[%s996 + $0x58] sm:$0xff]
    %v1009 = vld [vmem:[%s996 + $0x60] sm:$0xff]
    %v1010 = vld [vmem:[%s996 + $0x68] sm:$0xff]
    %v1011 = vld [vmem:[%s996 + $0x70] sm:$0xff]
    %v1012 = vld [vmem:[%s996 + $0x78] sm:$0xff]
    %1013 = vmatprep.subr.mxu0 0.0
    %1014 = vmatpush1.msra.mxu0 %v1012
    %1015 = vmatprep.subr.mxu0 0.0
    %1016 = vmatpush1.msra.mxu0 %v1011
    %1017 = vmatprep.subr.mxu0 0.0
    %1018 = vmatpush1.msra.mxu0 %v1010
    %1019 = vmatprep.subr.mxu0 0.0
    %1020 = vmatpush1.msra.mxu0 %v1009
    %1021 = vmatprep.subr.mxu0 0.0
    %1022 = vmatpush1.msra.mxu0 %v1008
    %1023 = vmatprep.subr.mxu0 0.0
    %1024 = vmatpush1.msra.mxu0 %v1007
    %1025 = vmatprep.subr.mxu0 0.0
    %1026 = vmatpush1.msra.mxu0 %v1006
    %1027 = vmatprep.subr.mxu0 0.0
    %1028 = vmatpush1.msra.mxu0 %v1005
    %1029 = vmatprep.subr.mxu0 0.0
    %1030 = vmatpush1.msra.mxu0 %v1004
    %1031 = vmatprep.subr.mxu0 0.0
    %1032 = vmatpush1.msra.mxu0 %v1003
    %1033 = vmatprep.subr.mxu0 0.0
    %1034 = vmatpush1.msra.mxu0 %v1002
    %1035 = vmatprep.subr.mxu0 0.0
    %1036 = vmatpush1.msra.mxu0 %v1001
    %1037 = vmatprep.subr.mxu0 0.0
    %1038 = vmatpush1.msra.mxu0 %v1000
    %1039 = vmatprep.subr.mxu0 0.0
    %1040 = vmatpush1.msra.mxu0 %v999
    %1041 = vmatprep.subr.mxu0 0.0
    %1042 = vmatpush1.msra.mxu0 %v998
    %1043 = vmatprep.subr.mxu0 0.0
    %1044 = vmatpush1.msra.mxu0 %v997
    %1045 = vmatprep.subr.mxu0 0.0
    %1046 = vmatpush2.msra.mxu0 0.0
    %1047 = vmatprep.subr.mxu0 0.0
    %1048 = vmatpush2.msra.mxu0 0.0
    %1049 = vmatprep.subr.mxu0 0.0
    %1050 = vmatpush2.msra.mxu0 0.0
    %1051 = vmatprep.subr.mxu0 0.0
    %1052 = vmatpush2.msra.mxu0 0.0
    %1053 = vmatprep.subr.mxu0 0.0
    %1054 = vmatpush2.msra.mxu0 0.0
    %1055 = vmatprep.subr.mxu0 0.0
    %1056 = vmatpush2.msra.mxu0 0.0
    %1057 = vmatprep.subr.mxu0 0.0
    %1058 = vmatpush2.msra.mxu0 0.0
    %1059 = vmatprep.subr.mxu0 0.0
    %1060 = vmatpush2.msra.mxu0 0.0
    %1061 = vmatprep.subr.mxu0 0.0
    %1062 = vmatpush2.msra.mxu0 0.0
    %1063 = vmatprep.subr.mxu0 0.0
    %1064 = vmatpush2.msra.mxu0 0.0
    %1065 = vmatprep.subr.mxu0 0.0
    %1066 = vmatpush2.msra.mxu0 0.0
    %1067 = vmatprep.subr.mxu0 0.0
    %1068 = vmatpush2.msra.mxu0 0.0
    %1069 = vmatprep.subr.mxu0 0.0
    %1070 = vmatpush2.msra.mxu0 0.0
    %1071 = vmatprep.subr.mxu0 0.0
    %1072 = vmatpush2.msra.mxu0 0.0
    %1073 = vmatprep.subr.mxu0 0.0
    %1074 = vmatpush2.msra.mxu0 0.0
    %1075 = vmatprep.subr.mxu0 0.0
    %1076 = vmatpush2.msra.mxu0 0.0
    %1077 = vmatprep.mubr.f32.mxu0 0.0
    %1078 = vmatmul.mubr.f32.gmra.mxu0 %v964
    %v1079 = vpop.f32.mrf.mxu0
    %v1080 = vadd.f32 0.0, %v1079
    %v1081 = vpop.f32.mrf.mxu0
    %1082 = vmatprep.mubr.f32.mxu0 0.0
    %1083 = vmatmul.mubr.f32.gmra.mxu0 %v965
    %v1084 = vpop.f32.mrf.mxu0
    %v1085 = vadd.f32 0.0, %v1084
    %v1086 = vpop.f32.mrf.mxu0
    %1087 = vmatprep.mubr.f32.mxu0 0.0
    %1088 = vmatmul.mubr.f32.gmra.mxu0 %v966
    %v1089 = vpop.f32.mrf.mxu0
    %v1090 = vadd.f32 0.0, %v1089
    %v1091 = vpop.f32.mrf.mxu0
    %1092 = vmatprep.mubr.f32.mxu0 0.0
    %1093 = vmatmul.mubr.f32.gmra.mxu0 %v967
    %v1094 = vpop.f32.mrf.mxu0
    %v1095 = vadd.f32 0.0, %v1094
    %v1096 = vpop.f32.mrf.mxu0
    %1097 = vdwg.mxu0
    %1098 = vmatprep.subr.mxu0 0.0
    %1099 = vmatpush1.msra.mxu0 %v995
    %1100 = vmatprep.subr.mxu0 0.0
    %1101 = vmatpush1.msra.mxu0 %v994
    %1102 = vmatprep.subr.mxu0 0.0
    %1103 = vmatpush1.msra.mxu0 %v993
    %1104 = vmatprep.subr.mxu0 0.0
    %1105 = vmatpush1.msra.mxu0 %v992
    %1106 = vmatprep.subr.mxu0 0.0
    %1107 = vmatpush1.msra.mxu0 %v991
    %1108 = vmatprep.subr.mxu0 0.0
    %1109 = vmatpush1.msra.mxu0 %v990
    %1110 = vmatprep.subr.mxu0 0.0
    %1111 = vmatpush1.msra.mxu0 %v989
    %1112 = vmatprep.subr.mxu0 0.0
    %1113 = vmatpush1.msra.mxu0 %v988
    %1114 = vmatprep.subr.mxu0 0.0
    %1115 = vmatpush1.msra.mxu0 %v987
    %1116 = vmatprep.subr.mxu0 0.0
    %1117 = vmatpush1.msra.mxu0 %v986
    %1118 = vmatprep.subr.mxu0 0.0
    %1119 = vmatpush1.msra.mxu0 %v985
    %1120 = vmatprep.subr.mxu0 0.0
    %1121 = vmatpush1.msra.mxu0 %v984
    %1122 = vmatprep.subr.mxu0 0.0
    %1123 = vmatpush1.msra.mxu0 %v983
    %1124 = vmatprep.subr.mxu0 0.0
    %1125 = vmatpush1.msra.mxu0 %v982
    %1126 = vmatprep.subr.mxu0 0.0
    %1127 = vmatpush1.msra.mxu0 %v981
    %1128 = vmatprep.subr.mxu0 0.0
    %1129 = vmatpush1.msra.mxu0 %v980
    %1130 = vmatprep.subr.mxu0 0.0
    %1131 = vmatpush2.msra.mxu0 0.0
    %1132 = vmatprep.subr.mxu0 0.0
    %1133 = vmatpush2.msra.mxu0 0.0
    %1134 = vmatprep.subr.mxu0 0.0
    %1135 = vmatpush2.msra.mxu0 0.0
    %1136 = vmatprep.subr.mxu0 0.0
    %1137 = vmatpush2.msra.mxu0 0.0
    %1138 = vmatprep.subr.mxu0 0.0
    %1139 = vmatpush2.msra.mxu0 0.0
    %1140 = vmatprep.subr.mxu0 0.0
    %1141 = vmatpush2.msra.mxu0 0.0
    %1142 = vmatprep.subr.mxu0 0.0
    %1143 = vmatpush2.msra.mxu0 0.0
    %1144 = vmatprep.subr.mxu0 0.0
    %1145 = vmatpush2.msra.mxu0 0.0
    %1146 = vmatprep.subr.mxu0 0.0
    %1147 = vmatpush2.msra.mxu0 0.0
    %1148 = vmatprep.subr.mxu0 0.0
    %1149 = vmatpush2.msra.mxu0 0.0
    %1150 = vmatprep.subr.mxu0 0.0
    %1151 = vmatpush2.msra.mxu0 0.0
    %1152 = vmatprep.subr.mxu0 0.0
    %1153 = vmatpush2.msra.mxu0 0.0
    %1154 = vmatprep.subr.mxu0 0.0
    %1155 = vmatpush2.msra.mxu0 0.0
    %1156 = vmatprep.subr.mxu0 0.0
    %1157 = vmatpush2.msra.mxu0 0.0
    %1158 = vmatprep.subr.mxu0 0.0
    %1159 = vmatpush2.msra.mxu0 0.0
    %1160 = vmatprep.subr.mxu0 0.0
    %1161 = vmatpush2.msra.mxu0 0.0
    %1162 = vmatprep.mubr.f32.mxu0 0.0
    %1163 = vmatmul.mubr.f32.gmra.mxu0 %v976
    %v1164 = vpop.f32.mrf.mxu0
    %v1165 = vadd.f32 %v1080, %v1164
    %v1166 = vpop.f32.mrf.mxu0
    %1167 = vmatprep.mubr.f32.mxu0 0.0
    %1168 = vmatmul.mubr.f32.gmra.mxu0 %v977
    %v1169 = vpop.f32.mrf.mxu0
    %v1170 = vadd.f32 %v1085, %v1169
    %v1171 = vpop.f32.mrf.mxu0
    %1172 = vmatprep.mubr.f32.mxu0 0.0
    %1173 = vmatmul.mubr.f32.gmra.mxu0 %v978
    %v1174 = vpop.f32.mrf.mxu0
    %v1175 = vadd.f32 %v1090, %v1174
    %v1176 = vpop.f32.mrf.mxu0
    %1177 = vmatprep.mubr.f32.mxu0 0.0
    %1178 = vmatmul.mubr.f32.gmra.mxu0 %v979
    %v1179 = vpop.f32.mrf.mxu0
    %v1180 = vadd.f32 %v1095, %v1179
    %v1181 = vpop.f32.mrf.mxu0
    %1182 = vdwg.mxu0
    %v1183 = vld [vmem:[#allocation3 + $0x2] sm:$0xff]
    %v1184 = vld [vmem:[#allocation3 + $0xa] sm:$0xff]
    %v1185 = vld [vmem:[#allocation3 + $0x1a] sm:$0xff]
    %v1186 = vld [vmem:[#allocation3 + $0x22] sm:$0xff]
    %s1187 = scalar_lea.vmem [#allocation12], 256
    %v1188 = vld [vmem:[%s1187] sm:$0xff]
    %v1189 = vld [vmem:[%s1187 + $0x8] sm:$0xff]
    %v1190 = vld [vmem:[%s1187 + $0x10] sm:$0xff]
    %v1191 = vld [vmem:[%s1187 + $0x18] sm:$0xff]
    %v1192 = vld [vmem:[%s1187 + $0x20] sm:$0xff]
    %v1193 = vld [vmem:[%s1187 + $0x28] sm:$0xff]
    %v1194 = vld [vmem:[%s1187 + $0x30] sm:$0xff]
    %v1195 = vld [vmem:[%s1187 + $0x38] sm:$0xff]
    %v1196 = vld [vmem:[%s1187 + $0x40] sm:$0xff]
    %v1197 = vld [vmem:[%s1187 + $0x48] sm:$0xff]
    %v1198 = vld [vmem:[%s1187 + $0x50] sm:$0xff]
    %v1199 = vld [vmem:[%s1187 + $0x58] sm:$0xff]
    %v1200 = vld [vmem:[%s1187 + $0x60] sm:$0xff]
    %v1201 = vld [vmem:[%s1187 + $0x68] sm:$0xff]
    %v1202 = vld [vmem:[%s1187 + $0x70] sm:$0xff]
    %v1203 = vld [vmem:[%s1187 + $0x78] sm:$0xff]
    %1204 = vmatprep.subr.mxu0 0.0
    %1205 = vmatpush1.msra.mxu0 %v1203
    %1206 = vmatprep.subr.mxu0 0.0
    %1207 = vmatpush1.msra.mxu0 %v1202
    %1208 = vmatprep.subr.mxu0 0.0
    %1209 = vmatpush1.msra.mxu0 %v1201
    %1210 = vmatprep.subr.mxu0 0.0
    %1211 = vmatpush1.msra.mxu0 %v1200
    %1212 = vmatprep.subr.mxu0 0.0
    %1213 = vmatpush1.msra.mxu0 %v1199
    %1214 = vmatprep.subr.mxu0 0.0
    %1215 = vmatpush1.msra.mxu0 %v1198
    %1216 = vmatprep.subr.mxu0 0.0
    %1217 = vmatpush1.msra.mxu0 %v1197
    %1218 = vmatprep.subr.mxu0 0.0
    %1219 = vmatpush1.msra.mxu0 %v1196
    %1220 = vmatprep.subr.mxu0 0.0
    %1221 = vmatpush1.msra.mxu0 %v1195
    %1222 = vmatprep.subr.mxu0 0.0
    %1223 = vmatpush1.msra.mxu0 %v1194
    %1224 = vmatprep.subr.mxu0 0.0
    %1225 = vmatpush1.msra.mxu0 %v1193
    %1226 = vmatprep.subr.mxu0 0.0
    %1227 = vmatpush1.msra.mxu0 %v1192
    %1228 = vmatprep.subr.mxu0 0.0
    %1229 = vmatpush1.msra.mxu0 %v1191
    %1230 = vmatprep.subr.mxu0 0.0
    %1231 = vmatpush1.msra.mxu0 %v1190
    %1232 = vmatprep.subr.mxu0 0.0
    %1233 = vmatpush1.msra.mxu0 %v1189
    %1234 = vmatprep.subr.mxu0 0.0
    %1235 = vmatpush1.msra.mxu0 %v1188
    %1236 = vmatprep.subr.mxu0 0.0
    %1237 = vmatpush2.msra.mxu0 0.0
    %1238 = vmatprep.subr.mxu0 0.0
    %1239 = vmatpush2.msra.mxu0 0.0
    %1240 = vmatprep.subr.mxu0 0.0
    %1241 = vmatpush2.msra.mxu0 0.0
    %1242 = vmatprep.subr.mxu0 0.0
    %1243 = vmatpush2.msra.mxu0 0.0
    %1244 = vmatprep.subr.mxu0 0.0
    %1245 = vmatpush2.msra.mxu0 0.0
    %1246 = vmatprep.subr.mxu0 0.0
    %1247 = vmatpush2.msra.mxu0 0.0
    %1248 = vmatprep.subr.mxu0 0.0
    %1249 = vmatpush2.msra.mxu0 0.0
    %1250 = vmatprep.subr.mxu0 0.0
    %1251 = vmatpush2.msra.mxu0 0.0
    %1252 = vmatprep.subr.mxu0 0.0
    %1253 = vmatpush2.msra.mxu0 0.0
    %1254 = vmatprep.subr.mxu0 0.0
    %1255 = vmatpush2.msra.mxu0 0.0
    %1256 = vmatprep.subr.mxu0 0.0
    %1257 = vmatpush2.msra.mxu0 0.0
    %1258 = vmatprep.subr.mxu0 0.0
    %1259 = vmatpush2.msra.mxu0 0.0
    %1260 = vmatprep.subr.mxu0 0.0
    %1261 = vmatpush2.msra.mxu0 0.0
    %1262 = vmatprep.subr.mxu0 0.0
    %1263 = vmatpush2.msra.mxu0 0.0
    %1264 = vmatprep.subr.mxu0 0.0
    %1265 = vmatpush2.msra.mxu0 0.0
    %1266 = vmatprep.subr.mxu0 0.0
    %1267 = vmatpush2.msra.mxu0 0.0
    %1268 = vmatprep.mubr.f32.mxu0 0.0
    %1269 = vmatmul.mubr.f32.gmra.mxu0 %v1183
    %v1270 = vpop.f32.mrf.mxu0
    %v1271 = vadd.f32 0.0, %v1270
    %v1272 = vpop.f32.mrf.mxu0
    %1273 = vmatprep.mubr.f32.mxu0 0.0
    %1274 = vmatmul.mubr.f32.gmra.mxu0 %v1184
    %v1275 = vpop.f32.mrf.mxu0
    %v1276 = vadd.f32 0.0, %v1275
    %v1277 = vpop.f32.mrf.mxu0
    %1278 = vmatprep.mubr.f32.mxu0 0.0
    %1279 = vmatmul.mubr.f32.gmra.mxu0 %v1185
    %v1280 = vpop.f32.mrf.mxu0
    %v1281 = vadd.f32 0.0, %v1280
    %v1282 = vpop.f32.mrf.mxu0
    %1283 = vmatprep.mubr.f32.mxu0 0.0
    %1284 = vmatmul.mubr.f32.gmra.mxu0 %v1186
    %v1285 = vpop.f32.mrf.mxu0
    %v1286 = vadd.f32 0.0, %v1285
    %v1287 = vpop.f32.mrf.mxu0
    %1288 = vdwg.mxu0
    %v1289 = vadd.f32 %v1165, %v1271
    %v1290 = vadd.f32 %v1170, %v1276
    %v1291 = vadd.f32 %v1175, %v1281
    %v1292 = vadd.f32 %v1180, %v1286
    %v1293 = vld [vmem:[#allocation14] sm:$0x1]
    %v1295 = vlaneseq
    %v1296 = vshrl.u32 %v1295, 7
    %v1297 = vsub.s32 0, %v1296
    %v1298 = vrot.slane %v1293, %v1297
    %v1300 = vadd.f32 %v1289, %v1298
    %v1301 = vadd.f32 %v1290, %v1298
    %v1302 = vadd.f32 %v1291, %v1298
    %v1303 = vadd.f32 %v1292, %v1298
    %v1304 = vmax.f32 %v1300, 0.0
    %v1305 = vmax.f32 %v1301, 0.0
    %v1306 = vmax.f32 %v1302, 0.0
    %v1307 = vmax.f32 %v1303, 0.0
    %v1308 = vadd.f32 %v1304, %v964
    %v1309 = vadd.f32 %v1305, %v965
    %v1310 = vadd.f32 %v1306, %v966
    %v1311 = vadd.f32 %v1307, %v967
    %v1312 = vld [vmem:[#allocation15] sm:$0xff]
    %v1313 = vld [vmem:[#allocation15 + $0x8] sm:$0xff]
    %v1314 = vld [vmem:[#allocation15 + $0x10] sm:$0xff]
    %v1315 = vld [vmem:[#allocation15 + $0x18] sm:$0xff]
    %v1316 = vld [vmem:[#allocation15 + $0x20] sm:$0xff]
    %v1317 = vld [vmem:[#allocation15 + $0x28] sm:$0xff]
    %v1318 = vld [vmem:[#allocation15 + $0x30] sm:$0xff]
    %v1319 = vld [vmem:[#allocation15 + $0x38] sm:$0xff]
    %v1320 = vld [vmem:[#allocation15 + $0x40] sm:$0xff]
    %v1321 = vld [vmem:[#allocation15 + $0x48] sm:$0xff]
    %v1322 = vld [vmem:[#allocation15 + $0x50] sm:$0xff]
    %v1323 = vld [vmem:[#allocation15 + $0x58] sm:$0xff]
    %v1324 = vld [vmem:[#allocation15 + $0x60] sm:$0xff]
    %v1325 = vld [vmem:[#allocation15 + $0x68] sm:$0xff]
    %v1326 = vld [vmem:[#allocation15 + $0x70] sm:$0xff]
    %v1327 = vld [vmem:[#allocation15 + $0x78] sm:$0xff]
    %v1328 = vld [vmem:[#allocation15 + $0x80] sm:$0xff]
    %v1329 = vld [vmem:[#allocation15 + $0x88] sm:$0xff]
    %v1330 = vld [vmem:[#allocation15 + $0x90] sm:$0xff]
    %v1331 = vld [vmem:[#allocation15 + $0x98] sm:$0xff]
    %v1332 = vld [vmem:[#allocation15 + $0xa0] sm:$0xff]
    %v1333 = vld [vmem:[#allocation15 + $0xa8] sm:$0xff]
    %v1334 = vld [vmem:[#allocation15 + $0xb0] sm:$0xff]
    %v1335 = vld [vmem:[#allocation15 + $0xb8] sm:$0xff]
    %v1336 = vld [vmem:[#allocation15 + $0xc0] sm:$0xff]
    %v1337 = vld [vmem:[#allocation15 + $0xc8] sm:$0xff]
    %v1338 = vld [vmem:[#allocation15 + $0xd0] sm:$0xff]
    %v1339 = vld [vmem:[#allocation15 + $0xd8] sm:$0xff]
    %v1340 = vld [vmem:[#allocation15 + $0xe0] sm:$0xff]
    %v1341 = vld [vmem:[#allocation15 + $0xe8] sm:$0xff]
    %v1342 = vld [vmem:[#allocation15 + $0xf0] sm:$0xff]
    %v1343 = vld [vmem:[#allocation15 + $0xf8] sm:$0xff]
    %v1344 = vld [vmem:[#allocation15 + $0x100] sm:$0xff]
    %v1345 = vld [vmem:[#allocation15 + $0x108] sm:$0xff]
    %v1346 = vld [vmem:[#allocation15 + $0x110] sm:$0xff]
    %v1347 = vld [vmem:[#allocation15 + $0x118] sm:$0xff]
    %v1348 = vld [vmem:[#allocation15 + $0x120] sm:$0xff]
    %v1349 = vld [vmem:[#allocation15 + $0x128] sm:$0xff]
    %v1350 = vld [vmem:[#allocation15 + $0x130] sm:$0xff]
    %v1351 = vld [vmem:[#allocation15 + $0x138] sm:$0xff]
    %v1352 = vld [vmem:[#allocation15 + $0x140] sm:$0xff]
    %v1353 = vld [vmem:[#allocation15 + $0x148] sm:$0xff]
    %v1354 = vld [vmem:[#allocation15 + $0x150] sm:$0xff]
    %v1355 = vld [vmem:[#allocation15 + $0x158] sm:$0xff]
    %v1356 = vld [vmem:[#allocation15 + $0x160] sm:$0xff]
    %v1357 = vld [vmem:[#allocation15 + $0x168] sm:$0xff]
    %v1358 = vld [vmem:[#allocation15 + $0x170] sm:$0xff]
    %v1359 = vld [vmem:[#allocation15 + $0x178] sm:$0xff]
    %v1360 = vld [vmem:[#allocation15 + $0x180] sm:$0xff]
    %v1361 = vld [vmem:[#allocation15 + $0x188] sm:$0xff]
    %v1362 = vld [vmem:[#allocation15 + $0x190] sm:$0xff]
    %v1363 = vld [vmem:[#allocation15 + $0x198] sm:$0xff]
    %v1364 = vld [vmem:[#allocation15 + $0x1a0] sm:$0xff]
    %v1365 = vld [vmem:[#allocation15 + $0x1a8] sm:$0xff]
    %v1366 = vld [vmem:[#allocation15 + $0x1b0] sm:$0xff]
    %v1367 = vld [vmem:[#allocation15 + $0x1b8] sm:$0xff]
    %v1368 = vld [vmem:[#allocation15 + $0x1c0] sm:$0xff]
    %v1369 = vld [vmem:[#allocation15 + $0x1c8] sm:$0xff]
    %v1370 = vld [vmem:[#allocation15 + $0x1d0] sm:$0xff]
    %v1371 = vld [vmem:[#allocation15 + $0x1d8] sm:$0xff]
    %v1372 = vld [vmem:[#allocation15 + $0x1e0] sm:$0xff]
    %v1373 = vld [vmem:[#allocation15 + $0x1e8] sm:$0xff]
    %v1374 = vld [vmem:[#allocation15 + $0x1f0] sm:$0xff]
    %v1375 = vld [vmem:[#allocation15 + $0x1f8] sm:$0xff]
    %v1376 = vld [vmem:[#allocation15 + $0x200] sm:$0xff]
    %v1377 = vld [vmem:[#allocation15 + $0x208] sm:$0xff]
    %v1378 = vld [vmem:[#allocation15 + $0x210] sm:$0xff]
    %v1379 = vld [vmem:[#allocation15 + $0x218] sm:$0xff]
    %v1380 = vld [vmem:[#allocation15 + $0x220] sm:$0xff]
    %v1381 = vld [vmem:[#allocation15 + $0x228] sm:$0xff]
    %v1382 = vld [vmem:[#allocation15 + $0x230] sm:$0xff]
    %v1383 = vld [vmem:[#allocation15 + $0x238] sm:$0xff]
    %v1384 = vld [vmem:[#allocation15 + $0x240] sm:$0xff]
    %v1385 = vld [vmem:[#allocation15 + $0x248] sm:$0xff]
    %v1386 = vld [vmem:[#allocation15 + $0x250] sm:$0xff]
    %v1387 = vld [vmem:[#allocation15 + $0x258] sm:$0xff]
    %v1388 = vld [vmem:[#allocation15 + $0x260] sm:$0xff]
    %v1389 = vld [vmem:[#allocation15 + $0x268] sm:$0xff]
    %v1390 = vld [vmem:[#allocation15 + $0x270] sm:$0xff]
    %v1391 = vld [vmem:[#allocation15 + $0x278] sm:$0xff]
    %v1392 = vld [vmem:[#allocation15 + $0x280] sm:$0xff]
    %v1393 = vld [vmem:[#allocation15 + $0x288] sm:$0xff]
    %v1394 = vld [vmem:[#allocation15 + $0x290] sm:$0xff]
    %v1395 = vld [vmem:[#allocation15 + $0x298] sm:$0xff]
    %v1396 = vld [vmem:[#allocation15 + $0x2a0] sm:$0xff]
    %v1397 = vld [vmem:[#allocation15 + $0x2a8] sm:$0xff]
    %v1398 = vld [vmem:[#allocation15 + $0x2b0] sm:$0xff]
    %v1399 = vld [vmem:[#allocation15 + $0x2b8] sm:$0xff]
    %v1400 = vld [vmem:[#allocation15 + $0x2c0] sm:$0xff]
    %v1401 = vld [vmem:[#allocation15 + $0x2c8] sm:$0xff]
    %v1402 = vld [vmem:[#allocation15 + $0x2d0] sm:$0xff]
    %v1403 = vld [vmem:[#allocation15 + $0x2d8] sm:$0xff]
    %v1404 = vld [vmem:[#allocation15 + $0x2e0] sm:$0xff]
    %v1405 = vld [vmem:[#allocation15 + $0x2e8] sm:$0xff]
    %v1406 = vld [vmem:[#allocation15 + $0x2f0] sm:$0xff]
    %v1407 = vld [vmem:[#allocation15 + $0x2f8] sm:$0xff]
    %v1408 = vld [vmem:[#allocation15 + $0x300] sm:$0xff]
    %v1409 = vld [vmem:[#allocation15 + $0x308] sm:$0xff]
    %v1410 = vld [vmem:[#allocation15 + $0x310] sm:$0xff]
    %v1411 = vld [vmem:[#allocation15 + $0x318] sm:$0xff]
    %v1412 = vld [vmem:[#allocation15 + $0x320] sm:$0xff]
    %v1413 = vld [vmem:[#allocation15 + $0x328] sm:$0xff]
    %v1414 = vld [vmem:[#allocation15 + $0x330] sm:$0xff]
    %v1415 = vld [vmem:[#allocation15 + $0x338] sm:$0xff]
    %v1416 = vld [vmem:[#allocation15 + $0x340] sm:$0xff]
    %v1417 = vld [vmem:[#allocation15 + $0x348] sm:$0xff]
    %v1418 = vld [vmem:[#allocation15 + $0x350] sm:$0xff]
    %v1419 = vld [vmem:[#allocation15 + $0x358] sm:$0xff]
    %v1420 = vld [vmem:[#allocation15 + $0x360] sm:$0xff]
    %v1421 = vld [vmem:[#allocation15 + $0x368] sm:$0xff]
    %v1422 = vld [vmem:[#allocation15 + $0x370] sm:$0xff]
    %v1423 = vld [vmem:[#allocation15 + $0x378] sm:$0xff]
    %v1424 = vld [vmem:[#allocation15 + $0x380] sm:$0xff]
    %v1425 = vld [vmem:[#allocation15 + $0x388] sm:$0xff]
    %v1426 = vld [vmem:[#allocation15 + $0x390] sm:$0xff]
    %v1427 = vld [vmem:[#allocation15 + $0x398] sm:$0xff]
    %v1428 = vld [vmem:[#allocation15 + $0x3a0] sm:$0xff]
    %v1429 = vld [vmem:[#allocation15 + $0x3a8] sm:$0xff]
    %v1430 = vld [vmem:[#allocation15 + $0x3b0] sm:$0xff]
    %v1431 = vld [vmem:[#allocation15 + $0x3b8] sm:$0xff]
    %v1432 = vld [vmem:[#allocation15 + $0x3c0] sm:$0xff]
    %v1433 = vld [vmem:[#allocation15 + $0x3c8] sm:$0xff]
    %v1434 = vld [vmem:[#allocation15 + $0x3d0] sm:$0xff]
    %v1435 = vld [vmem:[#allocation15 + $0x3d8] sm:$0xff]
    %v1436 = vld [vmem:[#allocation15 + $0x3e0] sm:$0xff]
    %v1437 = vld [vmem:[#allocation15 + $0x3e8] sm:$0xff]
    %v1438 = vld [vmem:[#allocation15 + $0x3f0] sm:$0xff]
    %v1439 = vld [vmem:[#allocation15 + $0x3f8] sm:$0xff]
    %v1440 = vld [vmem:[#allocation15 + $0x400] sm:$0xff]
    %v1441 = vld [vmem:[#allocation15 + $0x408] sm:$0xff]
    %v1442 = vld [vmem:[#allocation15 + $0x410] sm:$0xff]
    %v1443 = vld [vmem:[#allocation15 + $0x418] sm:$0xff]
    %v1444 = vld [vmem:[#allocation15 + $0x420] sm:$0xff]
    %v1445 = vld [vmem:[#allocation15 + $0x428] sm:$0xff]
    %v1446 = vld [vmem:[#allocation15 + $0x430] sm:$0xff]
    %v1447 = vld [vmem:[#allocation15 + $0x438] sm:$0xff]
    %v1448 = vld [vmem:[#allocation15 + $0x440] sm:$0xff]
    %v1449 = vld [vmem:[#allocation15 + $0x448] sm:$0xff]
    %v1450 = vld [vmem:[#allocation15 + $0x450] sm:$0xff]
    %v1451 = vld [vmem:[#allocation15 + $0x458] sm:$0xff]
    %v1452 = vld [vmem:[#allocation15 + $0x460] sm:$0xff]
    %v1453 = vld [vmem:[#allocation15 + $0x468] sm:$0xff]
    %v1454 = vld [vmem:[#allocation15 + $0x470] sm:$0xff]
    %v1455 = vld [vmem:[#allocation15 + $0x478] sm:$0xff]
    %v1456 = vld [vmem:[#allocation17] sm:$0x1]
    %v1458 = vlaneseq
    %v1459 = vshrl.u32 %v1458, 7
    %v1460 = vsub.s32 0, %v1459
    %v1461 = vrot.slane %v1456, %v1460
    %1462 = vset.pattern.permute.xlu0 0
    %1463 = vperm.xlu0 %1462, %v1461
    %v1464 = vpop.permute.xlu0 %1463
    %1466 = vmatprep.subr.mxu0 %v1448
    %1467 = vmatpush1.msra.mxu0 %v1447
    %1468 = vmatprep.subr.mxu0 %v1439
    %1469 = vmatpush1.msra.mxu0 %v1438
    %1470 = vmatprep.subr.mxu0 %v1430
    %1471 = vmatpush1.msra.mxu0 %v1429
    %1472 = vmatprep.subr.mxu0 %v1421
    %1473 = vmatpush1.msra.mxu0 %v1420
    %1474 = vmatprep.subr.mxu0 %v1412
    %1475 = vmatpush1.msra.mxu0 %v1411
    %1476 = vmatprep.subr.mxu0 %v1403
    %1477 = vmatpush1.msra.mxu0 %v1402
    %1478 = vmatprep.subr.mxu0 %v1394
    %1479 = vmatpush1.msra.mxu0 %v1393
    %1480 = vmatprep.subr.mxu0 %v1385
    %1481 = vmatpush1.msra.mxu0 %v1384
    %1482 = vmatprep.subr.mxu0 %v1376
    %1483 = vmatpush1.msra.mxu0 %v1375
    %1484 = vmatprep.subr.mxu0 %v1367
    %1485 = vmatpush1.msra.mxu0 %v1366
    %1486 = vmatprep.subr.mxu0 %v1358
    %1487 = vmatpush1.msra.mxu0 %v1357
    %1488 = vmatprep.subr.mxu0 %v1349
    %1489 = vmatpush1.msra.mxu0 %v1348
    %1490 = vmatprep.subr.mxu0 %v1340
    %1491 = vmatpush1.msra.mxu0 %v1339
    %1492 = vmatprep.subr.mxu0 %v1331
    %1493 = vmatpush1.msra.mxu0 %v1330
    %1494 = vmatprep.subr.mxu0 %v1322
    %1495 = vmatpush1.msra.mxu0 %v1321
    %1496 = vmatprep.subr.mxu0 %v1313
    %1497 = vmatpush1.msra.mxu0 %v1312
    %1498 = vmatprep.subr.mxu0 0.0
    %1499 = vmatpush2.msra.mxu0 0.0
    %1500 = vmatprep.subr.mxu0 0.0
    %1501 = vmatpush2.msra.mxu0 0.0
    %1502 = vmatprep.subr.mxu0 0.0
    %1503 = vmatpush2.msra.mxu0 0.0
    %1504 = vmatprep.subr.mxu0 0.0
    %1505 = vmatpush2.msra.mxu0 0.0
    %1506 = vmatprep.subr.mxu0 0.0
    %1507 = vmatpush2.msra.mxu0 0.0
    %1508 = vmatprep.subr.mxu0 0.0
    %1509 = vmatpush2.msra.mxu0 0.0
    %1510 = vmatprep.subr.mxu0 0.0
    %1511 = vmatpush2.msra.mxu0 0.0
    %1512 = vmatprep.subr.mxu0 0.0
    %1513 = vmatpush2.msra.mxu0 0.0
    %1514 = vmatprep.subr.mxu0 0.0
    %1515 = vmatpush2.msra.mxu0 0.0
    %1516 = vmatprep.subr.mxu0 0.0
    %1517 = vmatpush2.msra.mxu0 0.0
    %1518 = vmatprep.subr.mxu0 0.0
    %1519 = vmatpush2.msra.mxu0 0.0
    %1520 = vmatprep.subr.mxu0 0.0
    %1521 = vmatpush2.msra.mxu0 0.0
    %1522 = vmatprep.subr.mxu0 0.0
    %1523 = vmatpush2.msra.mxu0 0.0
    %1524 = vmatprep.subr.mxu0 0.0
    %1525 = vmatpush2.msra.mxu0 0.0
    %1526 = vmatprep.subr.mxu0 0.0
    %1527 = vmatpush2.msra.mxu0 0.0
    %1528 = vmatprep.subr.mxu0 0.0
    %1529 = vmatpush2.msra.mxu0 0.0
    %1530 = vmatprep.mubr.f32.mxu0 0.0
    %1531 = vmatmul.mubr.f32.gmra.mxu0 %v1308
    %v1532 = vpop.f32.mrf.mxu0
    %v1533 = vadd.f32 %v1464, %v1532
    %v1534 = vpop.f32.mrf.mxu0
    %v1535 = vadd.f32 %v1464, %v1534
    %1536 = vmatprep.mubr.f32.mxu0 0.0
    %1537 = vmatmul.mubr.f32.gmra.mxu0 %v1309
    %v1538 = vpop.f32.mrf.mxu0
    %v1539 = vadd.f32 %v1464, %v1538
    %v1540 = vpop.f32.mrf.mxu0
    %v1541 = vadd.f32 %v1464, %v1540
    %1542 = vmatprep.mubr.f32.mxu0 0.0
    %1543 = vmatmul.mubr.f32.gmra.mxu0 %v1310
    %v1544 = vpop.f32.mrf.mxu0
    %v1545 = vadd.f32 %v1464, %v1544
    %v1546 = vpop.f32.mrf.mxu0
    %v1547 = vadd.f32 %v1464, %v1546
    %1548 = vmatprep.mubr.f32.mxu0 0.0
    %1549 = vmatmul.mubr.f32.gmra.mxu0 %v1311
    %v1550 = vpop.f32.mrf.mxu0
    %v1551 = vadd.f32 %v1464, %v1550
    %v1552 = vpop.f32.mrf.mxu0
    %v1553 = vadd.f32 %v1464, %v1552
    %1554 = vdwg.mxu0
    %1555 = vmatprep.subr.mxu0 %v1450
    %1556 = vmatpush1.msra.mxu0 %v1449
    %1557 = vmatprep.subr.mxu0 %v1441
    %1558 = vmatpush1.msra.mxu0 %v1440
    %1559 = vmatprep.subr.mxu0 %v1432
    %1560 = vmatpush1.msra.mxu0 %v1431
    %1561 = vmatprep.subr.mxu0 %v1423
    %1562 = vmatpush1.msra.mxu0 %v1422
    %1563 = vmatprep.subr.mxu0 %v1414
    %1564 = vmatpush1.msra.mxu0 %v1413
    %1565 = vmatprep.subr.mxu0 %v1405
    %1566 = vmatpush1.msra.mxu0 %v1404
    %1567 = vmatprep.subr.mxu0 %v1396
    %1568 = vmatpush1.msra.mxu0 %v1395
    %1569 = vmatprep.subr.mxu0 %v1387
    %1570 = vmatpush1.msra.mxu0 %v1386
    %1571 = vmatprep.subr.mxu0 %v1378
    %1572 = vmatpush1.msra.mxu0 %v1377
    %1573 = vmatprep.subr.mxu0 %v1369
    %1574 = vmatpush1.msra.mxu0 %v1368
    %1575 = vmatprep.subr.mxu0 %v1360
    %1576 = vmatpush1.msra.mxu0 %v1359
    %1577 = vmatprep.subr.mxu0 %v1351
    %1578 = vmatpush1.msra.mxu0 %v1350
    %1579 = vmatprep.subr.mxu0 %v1342
    %1580 = vmatpush1.msra.mxu0 %v1341
    %1581 = vmatprep.subr.mxu0 %v1333
    %1582 = vmatpush1.msra.mxu0 %v1332
    %1583 = vmatprep.subr.mxu0 %v1324
    %1584 = vmatpush1.msra.mxu0 %v1323
    %1585 = vmatprep.subr.mxu0 %v1315
    %1586 = vmatpush1.msra.mxu0 %v1314
    %1587 = vmatprep.subr.mxu0 0.0
    %1588 = vmatpush2.msra.mxu0 0.0
    %1589 = vmatprep.subr.mxu0 0.0
    %1590 = vmatpush2.msra.mxu0 0.0
    %1591 = vmatprep.subr.mxu0 0.0
    %1592 = vmatpush2.msra.mxu0 0.0
    %1593 = vmatprep.subr.mxu0 0.0
    %1594 = vmatpush2.msra.mxu0 0.0
    %1595 = vmatprep.subr.mxu0 0.0
    %1596 = vmatpush2.msra.mxu0 0.0
    %1597 = vmatprep.subr.mxu0 0.0
    %1598 = vmatpush2.msra.mxu0 0.0
    %1599 = vmatprep.subr.mxu0 0.0
    %1600 = vmatpush2.msra.mxu0 0.0
    %1601 = vmatprep.subr.mxu0 0.0
    %1602 = vmatpush2.msra.mxu0 0.0
    %1603 = vmatprep.subr.mxu0 0.0
    %1604 = vmatpush2.msra.mxu0 0.0
    %1605 = vmatprep.subr.mxu0 0.0
    %1606 = vmatpush2.msra.mxu0 0.0
    %1607 = vmatprep.subr.mxu0 0.0
    %1608 = vmatpush2.msra.mxu0 0.0
    %1609 = vmatprep.subr.mxu0 0.0
    %1610 = vmatpush2.msra.mxu0 0.0
    %1611 = vmatprep.subr.mxu0 0.0
    %1612 = vmatpush2.msra.mxu0 0.0
    %1613 = vmatprep.subr.mxu0 0.0
    %1614 = vmatpush2.msra.mxu0 0.0
    %1615 = vmatprep.subr.mxu0 0.0
    %1616 = vmatpush2.msra.mxu0 0.0
    %1617 = vmatprep.subr.mxu0 0.0
    %1618 = vmatpush2.msra.mxu0 0.0
    %1619 = vmatprep.mubr.f32.mxu0 0.0
    %1620 = vmatmul.mubr.f32.gmra.mxu0 %v1308
    %v1621 = vpop.f32.mrf.mxu0
    %v1622 = vadd.f32 %v1464, %v1621
    %v1623 = vpop.f32.mrf.mxu0
    %v1624 = vadd.f32 %v1464, %v1623
    %1625 = vmatprep.mubr.f32.mxu0 0.0
    %1626 = vmatmul.mubr.f32.gmra.mxu0 %v1309
    %v1627 = vpop.f32.mrf.mxu0
    %v1628 = vadd.f32 %v1464, %v1627
    %v1629 = vpop.f32.mrf.mxu0
    %v1630 = vadd.f32 %v1464, %v1629
    %1631 = vmatprep.mubr.f32.mxu0 0.0
    %1632 = vmatmul.mubr.f32.gmra.mxu0 %v1310
    %v1633 = vpop.f32.mrf.mxu0
    %v1634 = vadd.f32 %v1464, %v1633
    %v1635 = vpop.f32.mrf.mxu0
    %v1636 = vadd.f32 %v1464, %v1635
    %1637 = vmatprep.mubr.f32.mxu0 0.0
    %1638 = vmatmul.mubr.f32.gmra.mxu0 %v1311
    %v1639 = vpop.f32.mrf.mxu0
    %v1640 = vadd.f32 %v1464, %v1639
    %v1641 = vpop.f32.mrf.mxu0
    %v1642 = vadd.f32 %v1464, %v1641
    %1643 = vdwg.mxu0
    %1644 = vmatprep.subr.mxu0 %v1452
    %1645 = vmatpush1.msra.mxu0 %v1451
    %1646 = vmatprep.subr.mxu0 %v1443
    %1647 = vmatpush1.msra.mxu0 %v1442
    %1648 = vmatprep.subr.mxu0 %v1434
    %1649 = vmatpush1.msra.mxu0 %v1433
    %1650 = vmatprep.subr.mxu0 %v1425
    %1651 = vmatpush1.msra.mxu0 %v1424
    %1652 = vmatprep.subr.mxu0 %v1416
    %1653 = vmatpush1.msra.mxu0 %v1415
    %1654 = vmatprep.subr.mxu0 %v1407
    %1655 = vmatpush1.msra.mxu0 %v1406
    %1656 = vmatprep.subr.mxu0 %v1398
    %1657 = vmatpush1.msra.mxu0 %v1397
    %1658 = vmatprep.subr.mxu0 %v1389
    %1659 = vmatpush1.msra.mxu0 %v1388
    %1660 = vmatprep.subr.mxu0 %v1380
    %1661 = vmatpush1.msra.mxu0 %v1379
    %1662 = vmatprep.subr.mxu0 %v1371
    %1663 = vmatpush1.msra.mxu0 %v1370
    %1664 = vmatprep.subr.mxu0 %v1362
    %1665 = vmatpush1.msra.mxu0 %v1361
    %1666 = vmatprep.subr.mxu0 %v1353
    %1667 = vmatpush1.msra.mxu0 %v1352
    %1668 = vmatprep.subr.mxu0 %v1344
    %1669 = vmatpush1.msra.mxu0 %v1343
    %1670 = vmatprep.subr.mxu0 %v1335
    %1671 = vmatpush1.msra.mxu0 %v1334
    %1672 = vmatprep.subr.mxu0 %v1326
    %1673 = vmatpush1.msra.mxu0 %v1325
    %1674 = vmatprep.subr.mxu0 %v1317
    %1675 = vmatpush1.msra.mxu0 %v1316
    %1676 = vmatprep.subr.mxu0 0.0
    %1677 = vmatpush2.msra.mxu0 0.0
    %1678 = vmatprep.subr.mxu0 0.0
    %1679 = vmatpush2.msra.mxu0 0.0
    %1680 = vmatprep.subr.mxu0 0.0
    %1681 = vmatpush2.msra.mxu0 0.0
    %1682 = vmatprep.subr.mxu0 0.0
    %1683 = vmatpush2.msra.mxu0 0.0
    %1684 = vmatprep.subr.mxu0 0.0
    %1685 = vmatpush2.msra.mxu0 0.0
    %1686 = vmatprep.subr.mxu0 0.0
    %1687 = vmatpush2.msra.mxu0 0.0
    %1688 = vmatprep.subr.mxu0 0.0
    %1689 = vmatpush2.msra.mxu0 0.0
    %1690 = vmatprep.subr.mxu0 0.0
    %1691 = vmatpush2.msra.mxu0 0.0
    %1692 = vmatprep.subr.mxu0 0.0
    %1693 = vmatpush2.msra.mxu0 0.0
    %1694 = vmatprep.subr.mxu0 0.0
    %1695 = vmatpush2.msra.mxu0 0.0
    %1696 = vmatprep.subr.mxu0 0.0
    %1697 = vmatpush2.msra.mxu0 0.0
    %1698 = vmatprep.subr.mxu0 0.0
    %1699 = vmatpush2.msra.mxu0 0.0
    %1700 = vmatprep.subr.mxu0 0.0
    %1701 = vmatpush2.msra.mxu0 0.0
    %1702 = vmatprep.subr.mxu0 0.0
    %1703 = vmatpush2.msra.mxu0 0.0
    %1704 = vmatprep.subr.mxu0 0.0
    %1705 = vmatpush2.msra.mxu0 0.0
    %1706 = vmatprep.subr.mxu0 0.0
    %1707 = vmatpush2.msra.mxu0 0.0
    %1708 = vmatprep.mubr.f32.mxu0 0.0
    %1709 = vmatmul.mubr.f32.gmra.mxu0 %v1308
    %v1710 = vpop.f32.mrf.mxu0
    %v1711 = vadd.f32 %v1464, %v1710
    %v1712 = vpop.f32.mrf.mxu0
    %v1713 = vadd.f32 %v1464, %v1712
    %1714 = vmatprep.mubr.f32.mxu0 0.0
    %1715 = vmatmul.mubr.f32.gmra.mxu0 %v1309
    %v1716 = vpop.f32.mrf.mxu0
    %v1717 = vadd.f32 %v1464, %v1716
    %v1718 = vpop.f32.mrf.mxu0
    %v1719 = vadd.f32 %v1464, %v1718
    %1720 = vmatprep.mubr.f32.mxu0 0.0
    %1721 = vmatmul.mubr.f32.gmra.mxu0 %v1310
    %v1722 = vpop.f32.mrf.mxu0
    %v1723 = vadd.f32 %v1464, %v1722
    %v1724 = vpop.f32.mrf.mxu0
    %v1725 = vadd.f32 %v1464, %v1724
    %1726 = vmatprep.mubr.f32.mxu0 0.0
    %1727 = vmatmul.mubr.f32.gmra.mxu0 %v1311
    %v1728 = vpop.f32.mrf.mxu0
    %v1729 = vadd.f32 %v1464, %v1728
    %v1730 = vpop.f32.mrf.mxu0
    %v1731 = vadd.f32 %v1464, %v1730
    %1732 = vdwg.mxu0
    %1733 = vmatprep.subr.mxu0 %v1454
    %1734 = vmatpush1.msra.mxu0 %v1453
    %1735 = vmatprep.subr.mxu0 %v1445
    %1736 = vmatpush1.msra.mxu0 %v1444
    %1737 = vmatprep.subr.mxu0 %v1436
    %1738 = vmatpush1.msra.mxu0 %v1435
    %1739 = vmatprep.subr.mxu0 %v1427
    %1740 = vmatpush1.msra.mxu0 %v1426
    %1741 = vmatprep.subr.mxu0 %v1418
    %1742 = vmatpush1.msra.mxu0 %v1417
    %1743 = vmatprep.subr.mxu0 %v1409
    %1744 = vmatpush1.msra.mxu0 %v1408
    %1745 = vmatprep.subr.mxu0 %v1400
    %1746 = vmatpush1.msra.mxu0 %v1399
    %1747 = vmatprep.subr.mxu0 %v1391
    %1748 = vmatpush1.msra.mxu0 %v1390
    %1749 = vmatprep.subr.mxu0 %v1382
    %1750 = vmatpush1.msra.mxu0 %v1381
    %1751 = vmatprep.subr.mxu0 %v1373
    %1752 = vmatpush1.msra.mxu0 %v1372
    %1753 = vmatprep.subr.mxu0 %v1364
    %1754 = vmatpush1.msra.mxu0 %v1363
    %1755 = vmatprep.subr.mxu0 %v1355
    %1756 = vmatpush1.msra.mxu0 %v1354
    %1757 = vmatprep.subr.mxu0 %v1346
    %1758 = vmatpush1.msra.mxu0 %v1345
    %1759 = vmatprep.subr.mxu0 %v1337
    %1760 = vmatpush1.msra.mxu0 %v1336
    %1761 = vmatprep.subr.mxu0 %v1328
    %1762 = vmatpush1.msra.mxu0 %v1327
    %1763 = vmatprep.subr.mxu0 %v1319
    %1764 = vmatpush1.msra.mxu0 %v1318
    %1765 = vmatprep.subr.mxu0 0.0
    %1766 = vmatpush2.msra.mxu0 0.0
    %1767 = vmatprep.subr.mxu0 0.0
    %1768 = vmatpush2.msra.mxu0 0.0
    %1769 = vmatprep.subr.mxu0 0.0
    %1770 = vmatpush2.msra.mxu0 0.0
    %1771 = vmatprep.subr.mxu0 0.0
    %1772 = vmatpush2.msra.mxu0 0.0
    %1773 = vmatprep.subr.mxu0 0.0
    %1774 = vmatpush2.msra.mxu0 0.0
    %1775 = vmatprep.subr.mxu0 0.0
    %1776 = vmatpush2.msra.mxu0 0.0
    %1777 = vmatprep.subr.mxu0 0.0
    %1778 = vmatpush2.msra.mxu0 0.0
    %1779 = vmatprep.subr.mxu0 0.0
    %1780 = vmatpush2.msra.mxu0 0.0
    %1781 = vmatprep.subr.mxu0 0.0
    %1782 = vmatpush2.msra.mxu0 0.0
    %1783 = vmatprep.subr.mxu0 0.0
    %1784 = vmatpush2.msra.mxu0 0.0
    %1785 = vmatprep.subr.mxu0 0.0
    %1786 = vmatpush2.msra.mxu0 0.0
    %1787 = vmatprep.subr.mxu0 0.0
    %1788 = vmatpush2.msra.mxu0 0.0
    %1789 = vmatprep.subr.mxu0 0.0
    %1790 = vmatpush2.msra.mxu0 0.0
    %1791 = vmatprep.subr.mxu0 0.0
    %1792 = vmatpush2.msra.mxu0 0.0
    %1793 = vmatprep.subr.mxu0 0.0
    %1794 = vmatpush2.msra.mxu0 0.0
    %1795 = vmatprep.subr.mxu0 0.0
    %1796 = vmatpush2.msra.mxu0 0.0
    %1797 = vmatprep.mubr.f32.mxu0 0.0
    %1798 = vmatmul.mubr.f32.gmra.mxu0 %v1308
    %v1799 = vpop.f32.mrf.mxu0
    %v1800 = vadd.f32 %v1464, %v1799
    %v1801 = vpop.f32.mrf.mxu0
    %v1802 = vadd.f32 %v1464, %v1801
    %1803 = vmatprep.mubr.f32.mxu0 0.0
    %1804 = vmatmul.mubr.f32.gmra.mxu0 %v1309
    %v1805 = vpop.f32.mrf.mxu0
    %v1806 = vadd.f32 %v1464, %v1805
    %v1807 = vpop.f32.mrf.mxu0
    %v1808 = vadd.f32 %v1464, %v1807
    %1809 = vmatprep.mubr.f32.mxu0 0.0
    %1810 = vmatmul.mubr.f32.gmra.mxu0 %v1310
    %v1811 = vpop.f32.mrf.mxu0
    %v1812 = vadd.f32 %v1464, %v1811
    %v1813 = vpop.f32.mrf.mxu0
    %v1814 = vadd.f32 %v1464, %v1813
    %1815 = vmatprep.mubr.f32.mxu0 0.0
    %1816 = vmatmul.mubr.f32.gmra.mxu0 %v1311
    %v1817 = vpop.f32.mrf.mxu0
    %v1818 = vadd.f32 %v1464, %v1817
    %v1819 = vpop.f32.mrf.mxu0
    %v1820 = vadd.f32 %v1464, %v1819
    %1821 = vdwg.mxu0
    %1822 = vmatprep.subr.mxu0 0.0
    %1823 = vmatpush1.msra.mxu0 %v1455
    %1824 = vmatprep.subr.mxu0 0.0
    %1825 = vmatpush1.msra.mxu0 %v1446
    %1826 = vmatprep.subr.mxu0 0.0
    %1827 = vmatpush1.msra.mxu0 %v1437
    %1828 = vmatprep.subr.mxu0 0.0
    %1829 = vmatpush1.msra.mxu0 %v1428
    %1830 = vmatprep.subr.mxu0 0.0
    %1831 = vmatpush1.msra.mxu0 %v1419
    %1832 = vmatprep.subr.mxu0 0.0
    %1833 = vmatpush1.msra.mxu0 %v1410
    %1834 = vmatprep.subr.mxu0 0.0
    %1835 = vmatpush1.msra.mxu0 %v1401
    %1836 = vmatprep.subr.mxu0 0.0
    %1837 = vmatpush1.msra.mxu0 %v1392
    %1838 = vmatprep.subr.mxu0 0.0
    %1839 = vmatpush1.msra.mxu0 %v1383
    %1840 = vmatprep.subr.mxu0 0.0
    %1841 = vmatpush1.msra.mxu0 %v1374
    %1842 = vmatprep.subr.mxu0 0.0
    %1843 = vmatpush1.msra.mxu0 %v1365
    %1844 = vmatprep.subr.mxu0 0.0
    %1845 = vmatpush1.msra.mxu0 %v1356
    %1846 = vmatprep.subr.mxu0 0.0
    %1847 = vmatpush1.msra.mxu0 %v1347
    %1848 = vmatprep.subr.mxu0 0.0
    %1849 = vmatpush1.msra.mxu0 %v1338
    %1850 = vmatprep.subr.mxu0 0.0
    %1851 = vmatpush1.msra.mxu0 %v1329
    %1852 = vmatprep.subr.mxu0 0.0
    %1853 = vmatpush1.msra.mxu0 %v1320
    %1854 = vmatprep.subr.mxu0 0.0
    %1855 = vmatpush2.msra.mxu0 0.0
    %1856 = vmatprep.subr.mxu0 0.0
    %1857 = vmatpush2.msra.mxu0 0.0
    %1858 = vmatprep.subr.mxu0 0.0
    %1859 = vmatpush2.msra.mxu0 0.0
    %1860 = vmatprep.subr.mxu0 0.0
    %1861 = vmatpush2.msra.mxu0 0.0
    %1862 = vmatprep.subr.mxu0 0.0
    %1863 = vmatpush2.msra.mxu0 0.0
    %1864 = vmatprep.subr.mxu0 0.0
    %1865 = vmatpush2.msra.mxu0 0.0
    %1866 = vmatprep.subr.mxu0 0.0
    %1867 = vmatpush2.msra.mxu0 0.0
    %1868 = vmatprep.subr.mxu0 0.0
    %1869 = vmatpush2.msra.mxu0 0.0
    %1870 = vmatprep.subr.mxu0 0.0
    %1871 = vmatpush2.msra.mxu0 0.0
    %1872 = vmatprep.subr.mxu0 0.0
    %1873 = vmatpush2.msra.mxu0 0.0
    %1874 = vmatprep.subr.mxu0 0.0
    %1875 = vmatpush2.msra.mxu0 0.0
    %1876 = vmatprep.subr.mxu0 0.0
    %1877 = vmatpush2.msra.mxu0 0.0
    %1878 = vmatprep.subr.mxu0 0.0
    %1879 = vmatpush2.msra.mxu0 0.0
    %1880 = vmatprep.subr.mxu0 0.0
    %1881 = vmatpush2.msra.mxu0 0.0
    %1882 = vmatprep.subr.mxu0 0.0
    %1883 = vmatpush2.msra.mxu0 0.0
    %1884 = vmatprep.subr.mxu0 0.0
    %1885 = vmatpush2.msra.mxu0 0.0
    %1886 = vmatprep.mubr.f32.mxu0 0.0
    %1887 = vmatmul.mubr.f32.gmra.mxu0 %v1308
    %v1888 = vpop.f32.mrf.mxu0
    %v1889 = vadd.f32 %v1464, %v1888
    %v1890 = vpop.f32.mrf.mxu0
    %1891 = vmatprep.mubr.f32.mxu0 0.0
    %1892 = vmatmul.mubr.f32.gmra.mxu0 %v1309
    %v1893 = vpop.f32.mrf.mxu0
    %v1894 = vadd.f32 %v1464, %v1893
    %v1895 = vpop.f32.mrf.mxu0
    %1896 = vmatprep.mubr.f32.mxu0 0.0
    %1897 = vmatmul.mubr.f32.gmra.mxu0 %v1310
    %v1898 = vpop.f32.mrf.mxu0
    %v1899 = vadd.f32 %v1464, %v1898
    %v1900 = vpop.f32.mrf.mxu0
    %1901 = vmatprep.mubr.f32.mxu0 0.0
    %1902 = vmatmul.mubr.f32.gmra.mxu0 %v1311
    %v1903 = vpop.f32.mrf.mxu0
    %v1904 = vadd.f32 %v1464, %v1903
    %v1905 = vpop.f32.mrf.mxu0
    %1906 = vdwg.mxu0
    %v1907 = vmax.f32 %v1533, 0.0
    %v1908 = vmax.f32 %v1535, 0.0
    %v1909 = vmax.f32 %v1622, 0.0
    %v1910 = vmax.f32 %v1624, 0.0
    %v1911 = vmax.f32 %v1711, 0.0
    %v1912 = vmax.f32 %v1713, 0.0
    %v1913 = vmax.f32 %v1800, 0.0
    %v1914 = vmax.f32 %v1802, 0.0
    %v1915 = vmax.f32 %v1889, 0.0
    %v1916 = vmax.f32 %v1539, 0.0
    %v1917 = vmax.f32 %v1541, 0.0
    %v1918 = vmax.f32 %v1628, 0.0
    %v1919 = vmax.f32 %v1630, 0.0
    %v1920 = vmax.f32 %v1717, 0.0
    %v1921 = vmax.f32 %v1719, 0.0
    %v1922 = vmax.f32 %v1806, 0.0
    %v1923 = vmax.f32 %v1808, 0.0
    %v1924 = vmax.f32 %v1894, 0.0
    %v1925 = vmax.f32 %v1545, 0.0
    %v1926 = vmax.f32 %v1547, 0.0
    %v1927 = vmax.f32 %v1634, 0.0
    %v1928 = vmax.f32 %v1636, 0.0
    %v1929 = vmax.f32 %v1723, 0.0
    %v1930 = vmax.f32 %v1725, 0.0
    %v1931 = vmax.f32 %v1812, 0.0
    %v1932 = vmax.f32 %v1814, 0.0
    %v1933 = vmax.f32 %v1899, 0.0
    %v1934 = vmax.f32 %v1551, 0.0
    %v1935 = vmax.f32 %v1553, 0.0
    %v1936 = vmax.f32 %v1640, 0.0
    %v1937 = vmax.f32 %v1642, 0.0
    %v1938 = vmax.f32 %v1729, 0.0
    %v1939 = vmax.f32 %v1731, 0.0
    %v1940 = vmax.f32 %v1818, 0.0
    %v1941 = vmax.f32 %v1820, 0.0
    %v1942 = vmax.f32 %v1904, 0.0
    %1943 = vst [vmem:[%s9] sm:$0xff] %v1907
    %1944 = vst [vmem:[%s9 + $0x8] sm:$0xff] %v1908
    %1945 = vst [vmem:[%s9 + $0x10] sm:$0xff] %v1909
    %1946 = vst [vmem:[%s9 + $0x18] sm:$0xff] %v1910
    %1947 = vst [vmem:[%s9 + $0x20] sm:$0xff] %v1911
    %1948 = vst [vmem:[%s9 + $0x28] sm:$0xff] %v1912
    %1949 = vst [vmem:[%s9 + $0x30] sm:$0xff] %v1913
    %1950 = vst [vmem:[%s9 + $0x38] sm:$0xff] %v1914
    %vm1951 = vcmask 785408
    %1952 = vst.msk [vmem:[%s9 + $0x40] sm:$0xff] %vm1951, %v1915
    %1953 = vst [vmem:[%s9 + $0x48] sm:$0xff] %v1916
    %1954 = vst [vmem:[%s9 + $0x50] sm:$0xff] %v1917
    %1955 = vst [vmem:[%s9 + $0x58] sm:$0xff] %v1918
    %1956 = vst [vmem:[%s9 + $0x60] sm:$0xff] %v1919
    %1957 = vst [vmem:[%s9 + $0x68] sm:$0xff] %v1920
    %1958 = vst [vmem:[%s9 + $0x70] sm:$0xff] %v1921
    %1959 = vst [vmem:[%s9 + $0x78] sm:$0xff] %v1922
    %1960 = vst [vmem:[%s9 + $0x80] sm:$0xff] %v1923
    %1961 = vst.msk [vmem:[%s9 + $0x88] sm:$0xff] %vm1951, %v1924
    %s1962 = scalar_lea.vmem %s9, 432
    %1963 = vst [vmem:[%s1962] sm:$0xff] %v1925
    %1964 = vst [vmem:[%s1962 + $0x8] sm:$0xff] %v1926
    %1965 = vst [vmem:[%s1962 + $0x10] sm:$0xff] %v1927
    %1966 = vst [vmem:[%s1962 + $0x18] sm:$0xff] %v1928
    %1967 = vst [vmem:[%s1962 + $0x20] sm:$0xff] %v1929
    %1968 = vst [vmem:[%s1962 + $0x28] sm:$0xff] %v1930
    %1969 = vst [vmem:[%s1962 + $0x30] sm:$0xff] %v1931
    %1970 = vst [vmem:[%s1962 + $0x38] sm:$0xff] %v1932
    %1971 = vst.msk [vmem:[%s1962 + $0x40] sm:$0xff] %vm1951, %v1933
    %1972 = vst [vmem:[%s1962 + $0x48] sm:$0xff] %v1934
    %1973 = vst [vmem:[%s1962 + $0x50] sm:$0xff] %v1935
    %1974 = vst [vmem:[%s1962 + $0x58] sm:$0xff] %v1936
    %1975 = vst [vmem:[%s1962 + $0x60] sm:$0xff] %v1937
    %1976 = vst [vmem:[%s1962 + $0x68] sm:$0xff] %v1938
    %1977 = vst [vmem:[%s1962 + $0x70] sm:$0xff] %v1939
    %1978 = vst [vmem:[%s1962 + $0x78] sm:$0xff] %v1940
    %1979 = vst [vmem:[%s1962 + $0x80] sm:$0xff] %v1941
    %1980 = vst.msk [vmem:[%s1962 + $0x88] sm:$0xff] %vm1951, %v1942
    %s1981 = scalar_lea.vmem [#allocation15], 1152
    %v1982 = vld [vmem:[%s1981] sm:$0xff]
    %v1983 = vld [vmem:[%s1981 + $0x8] sm:$0xff]
    %v1984 = vld [vmem:[%s1981 + $0x10] sm:$0xff]
    %v1985 = vld [vmem:[%s1981 + $0x18] sm:$0xff]
    %v1986 = vld [vmem:[%s1981 + $0x20] sm:$0xff]
    %v1987 = vld [vmem:[%s1981 + $0x28] sm:$0xff]
    %v1988 = vld [vmem:[%s1981 + $0x30] sm:$0xff]
    %v1989 = vld [vmem:[%s1981 + $0x38] sm:$0xff]
    %v1990 = vld [vmem:[%s1981 + $0x40] sm:$0xff]
    %v1991 = vld [vmem:[%s1981 + $0x48] sm:$0xff]
    %v1992 = vld [vmem:[%s1981 + $0x50] sm:$0xff]
    %v1993 = vld [vmem:[%s1981 + $0x58] sm:$0xff]
    %v1994 = vld [vmem:[%s1981 + $0x60] sm:$0xff]
    %v1995 = vld [vmem:[%s1981 + $0x68] sm:$0xff]
    %v1996 = vld [vmem:[%s1981 + $0x70] sm:$0xff]
    %v1997 = vld [vmem:[%s1981 + $0x78] sm:$0xff]
    %v1998 = vld [vmem:[%s1981 + $0x80] sm:$0xff]
    %v1999 = vld [vmem:[%s1981 + $0x88] sm:$0xff]
    %v2000 = vld [vmem:[%s1981 + $0x90] sm:$0xff]
    %v2001 = vld [vmem:[%s1981 + $0x98] sm:$0xff]
    %v2002 = vld [vmem:[%s1981 + $0xa0] sm:$0xff]
    %v2003 = vld [vmem:[%s1981 + $0xa8] sm:$0xff]
    %v2004 = vld [vmem:[%s1981 + $0xb0] sm:$0xff]
    %v2005 = vld [vmem:[%s1981 + $0xb8] sm:$0xff]
    %v2006 = vld [vmem:[%s1981 + $0xc0] sm:$0xff]
    %v2007 = vld [vmem:[%s1981 + $0xc8] sm:$0xff]
    %v2008 = vld [vmem:[%s1981 + $0xd0] sm:$0xff]
    %v2009 = vld [vmem:[%s1981 + $0xd8] sm:$0xff]
    %v2010 = vld [vmem:[%s1981 + $0xe0] sm:$0xff]
    %v2011 = vld [vmem:[%s1981 + $0xe8] sm:$0xff]
    %v2012 = vld [vmem:[%s1981 + $0xf0] sm:$0xff]
    %v2013 = vld [vmem:[%s1981 + $0xf8] sm:$0xff]
    %v2014 = vld [vmem:[%s1981 + $0x100] sm:$0xff]
    %v2015 = vld [vmem:[%s1981 + $0x108] sm:$0xff]
    %v2016 = vld [vmem:[%s1981 + $0x110] sm:$0xff]
    %v2017 = vld [vmem:[%s1981 + $0x118] sm:$0xff]
    %v2018 = vld [vmem:[%s1981 + $0x120] sm:$0xff]
    %v2019 = vld [vmem:[%s1981 + $0x128] sm:$0xff]
    %v2020 = vld [vmem:[%s1981 + $0x130] sm:$0xff]
    %v2021 = vld [vmem:[%s1981 + $0x138] sm:$0xff]
    %v2022 = vld [vmem:[%s1981 + $0x140] sm:$0xff]
    %v2023 = vld [vmem:[%s1981 + $0x148] sm:$0xff]
    %v2024 = vld [vmem:[%s1981 + $0x150] sm:$0xff]
    %v2025 = vld [vmem:[%s1981 + $0x158] sm:$0xff]
    %v2026 = vld [vmem:[%s1981 + $0x160] sm:$0xff]
    %v2027 = vld [vmem:[%s1981 + $0x168] sm:$0xff]
    %v2028 = vld [vmem:[%s1981 + $0x170] sm:$0xff]
    %v2029 = vld [vmem:[%s1981 + $0x178] sm:$0xff]
    %v2030 = vld [vmem:[%s1981 + $0x180] sm:$0xff]
    %v2031 = vld [vmem:[%s1981 + $0x188] sm:$0xff]
    %v2032 = vld [vmem:[%s1981 + $0x190] sm:$0xff]
    %v2033 = vld [vmem:[%s1981 + $0x198] sm:$0xff]
    %v2034 = vld [vmem:[%s1981 + $0x1a0] sm:$0xff]
    %v2035 = vld [vmem:[%s1981 + $0x1a8] sm:$0xff]
    %v2036 = vld [vmem:[%s1981 + $0x1b0] sm:$0xff]
    %v2037 = vld [vmem:[%s1981 + $0x1b8] sm:$0xff]
    %v2038 = vld [vmem:[%s1981 + $0x1c0] sm:$0xff]
    %v2039 = vld [vmem:[%s1981 + $0x1c8] sm:$0xff]
    %v2040 = vld [vmem:[%s1981 + $0x1d0] sm:$0xff]
    %v2041 = vld [vmem:[%s1981 + $0x1d8] sm:$0xff]
    %v2042 = vld [vmem:[%s1981 + $0x1e0] sm:$0xff]
    %v2043 = vld [vmem:[%s1981 + $0x1e8] sm:$0xff]
    %v2044 = vld [vmem:[%s1981 + $0x1f0] sm:$0xff]
    %v2045 = vld [vmem:[%s1981 + $0x1f8] sm:$0xff]
    %v2046 = vld [vmem:[%s1981 + $0x200] sm:$0xff]
    %v2047 = vld [vmem:[%s1981 + $0x208] sm:$0xff]
    %v2048 = vld [vmem:[%s1981 + $0x210] sm:$0xff]
    %v2049 = vld [vmem:[%s1981 + $0x218] sm:$0xff]
    %v2050 = vld [vmem:[%s1981 + $0x220] sm:$0xff]
    %v2051 = vld [vmem:[%s1981 + $0x228] sm:$0xff]
    %v2052 = vld [vmem:[%s1981 + $0x230] sm:$0xff]
    %v2053 = vld [vmem:[%s1981 + $0x238] sm:$0xff]
    %v2054 = vld [vmem:[%s1981 + $0x240] sm:$0xff]
    %v2055 = vld [vmem:[%s1981 + $0x248] sm:$0xff]
    %v2056 = vld [vmem:[%s1981 + $0x250] sm:$0xff]
    %v2057 = vld [vmem:[%s1981 + $0x258] sm:$0xff]
    %v2058 = vld [vmem:[%s1981 + $0x260] sm:$0xff]
    %v2059 = vld [vmem:[%s1981 + $0x268] sm:$0xff]
    %v2060 = vld [vmem:[%s1981 + $0x270] sm:$0xff]
    %v2061 = vld [vmem:[%s1981 + $0x278] sm:$0xff]
    %v2062 = vld [vmem:[%s1981 + $0x280] sm:$0xff]
    %v2063 = vld [vmem:[%s1981 + $0x288] sm:$0xff]
    %v2064 = vld [vmem:[%s1981 + $0x290] sm:$0xff]
    %v2065 = vld [vmem:[%s1981 + $0x298] sm:$0xff]
    %v2066 = vld [vmem:[%s1981 + $0x2a0] sm:$0xff]
    %v2067 = vld [vmem:[%s1981 + $0x2a8] sm:$0xff]
    %v2068 = vld [vmem:[%s1981 + $0x2b0] sm:$0xff]
    %v2069 = vld [vmem:[%s1981 + $0x2b8] sm:$0xff]
    %v2070 = vld [vmem:[%s1981 + $0x2c0] sm:$0xff]
    %v2071 = vld [vmem:[%s1981 + $0x2c8] sm:$0xff]
    %v2072 = vld [vmem:[%s1981 + $0x2d0] sm:$0xff]
    %v2073 = vld [vmem:[%s1981 + $0x2d8] sm:$0xff]
    %v2074 = vld [vmem:[%s1981 + $0x2e0] sm:$0xff]
    %v2075 = vld [vmem:[%s1981 + $0x2e8] sm:$0xff]
    %v2076 = vld [vmem:[%s1981 + $0x2f0] sm:$0xff]
    %v2077 = vld [vmem:[%s1981 + $0x2f8] sm:$0xff]
    %v2078 = vld [vmem:[%s1981 + $0x300] sm:$0xff]
    %v2079 = vld [vmem:[%s1981 + $0x308] sm:$0xff]
    %v2080 = vld [vmem:[%s1981 + $0x310] sm:$0xff]
    %v2081 = vld [vmem:[%s1981 + $0x318] sm:$0xff]
    %v2082 = vld [vmem:[%s1981 + $0x320] sm:$0xff]
    %v2083 = vld [vmem:[%s1981 + $0x328] sm:$0xff]
    %v2084 = vld [vmem:[%s1981 + $0x330] sm:$0xff]
    %v2085 = vld [vmem:[%s1981 + $0x338] sm:$0xff]
    %v2086 = vld [vmem:[%s1981 + $0x340] sm:$0xff]
    %v2087 = vld [vmem:[%s1981 + $0x348] sm:$0xff]
    %v2088 = vld [vmem:[%s1981 + $0x350] sm:$0xff]
    %v2089 = vld [vmem:[%s1981 + $0x358] sm:$0xff]
    %v2090 = vld [vmem:[%s1981 + $0x360] sm:$0xff]
    %v2091 = vld [vmem:[%s1981 + $0x368] sm:$0xff]
    %v2092 = vld [vmem:[%s1981 + $0x370] sm:$0xff]
    %v2093 = vld [vmem:[%s1981 + $0x378] sm:$0xff]
    %v2094 = vld [vmem:[%s1981 + $0x380] sm:$0xff]
    %v2095 = vld [vmem:[%s1981 + $0x388] sm:$0xff]
    %v2096 = vld [vmem:[%s1981 + $0x390] sm:$0xff]
    %v2097 = vld [vmem:[%s1981 + $0x398] sm:$0xff]
    %v2098 = vld [vmem:[%s1981 + $0x3a0] sm:$0xff]
    %v2099 = vld [vmem:[%s1981 + $0x3a8] sm:$0xff]
    %v2100 = vld [vmem:[%s1981 + $0x3b0] sm:$0xff]
    %v2101 = vld [vmem:[%s1981 + $0x3b8] sm:$0xff]
    %v2102 = vld [vmem:[%s1981 + $0x3c0] sm:$0xff]
    %v2103 = vld [vmem:[%s1981 + $0x3c8] sm:$0xff]
    %v2104 = vld [vmem:[%s1981 + $0x3d0] sm:$0xff]
    %v2105 = vld [vmem:[%s1981 + $0x3d8] sm:$0xff]
    %v2106 = vld [vmem:[%s1981 + $0x3e0] sm:$0xff]
    %v2107 = vld [vmem:[%s1981 + $0x3e8] sm:$0xff]
    %v2108 = vld [vmem:[%s1981 + $0x3f0] sm:$0xff]
    %v2109 = vld [vmem:[%s1981 + $0x3f8] sm:$0xff]
    %v2110 = vld [vmem:[%s1981 + $0x400] sm:$0xff]
    %v2111 = vld [vmem:[%s1981 + $0x408] sm:$0xff]
    %v2112 = vld [vmem:[%s1981 + $0x410] sm:$0xff]
    %v2113 = vld [vmem:[%s1981 + $0x418] sm:$0xff]
    %v2114 = vld [vmem:[%s1981 + $0x420] sm:$0xff]
    %v2115 = vld [vmem:[%s1981 + $0x428] sm:$0xff]
    %v2116 = vld [vmem:[%s1981 + $0x430] sm:$0xff]
    %v2117 = vld [vmem:[%s1981 + $0x438] sm:$0xff]
    %v2118 = vld [vmem:[%s1981 + $0x440] sm:$0xff]
    %v2119 = vld [vmem:[%s1981 + $0x448] sm:$0xff]
    %v2120 = vld [vmem:[%s1981 + $0x450] sm:$0xff]
    %v2121 = vld [vmem:[%s1981 + $0x458] sm:$0xff]
    %v2122 = vld [vmem:[%s1981 + $0x460] sm:$0xff]
    %v2123 = vld [vmem:[%s1981 + $0x468] sm:$0xff]
    %v2124 = vld [vmem:[%s1981 + $0x470] sm:$0xff]
    %v2125 = vld [vmem:[%s1981 + $0x478] sm:$0xff]
    %s2126 = scalar_lea.vmem [#allocation17], 1
    %v2127 = vld [vmem:[%s2126] sm:$0x1]
    %v2129 = vlaneseq
    %v2130 = vshrl.u32 %v2129, 7
    %v2131 = vsub.s32 0, %v2130
    %v2132 = vrot.slane %v2127, %v2131
    %2133 = vset.pattern.permute.xlu0 0
    %2134 = vperm.xlu0 %2133, %v2132
    %v2135 = vpop.permute.xlu0 %2134
    %2137 = vmatprep.subr.mxu0 %v2118
    %2138 = vmatpush1.msra.mxu0 %v2117
    %2139 = vmatprep.subr.mxu0 %v2109
    %2140 = vmatpush1.msra.mxu0 %v2108
    %2141 = vmatprep.subr.mxu0 %v2100
    %2142 = vmatpush1.msra.mxu0 %v2099
    %2143 = vmatprep.subr.mxu0 %v2091
    %2144 = vmatpush1.msra.mxu0 %v2090
    %2145 = vmatprep.subr.mxu0 %v2082
    %2146 = vmatpush1.msra.mxu0 %v2081
    %2147 = vmatprep.subr.mxu0 %v2073
    %2148 = vmatpush1.msra.mxu0 %v2072
    %2149 = vmatprep.subr.mxu0 %v2064
    %2150 = vmatpush1.msra.mxu0 %v2063
    %2151 = vmatprep.subr.mxu0 %v2055
    %2152 = vmatpush1.msra.mxu0 %v2054
    %2153 = vmatprep.subr.mxu0 %v2046
    %2154 = vmatpush1.msra.mxu0 %v2045
    %2155 = vmatprep.subr.mxu0 %v2037
    %2156 = vmatpush1.msra.mxu0 %v2036
    %2157 = vmatprep.subr.mxu0 %v2028
    %2158 = vmatpush1.msra.mxu0 %v2027
    %2159 = vmatprep.subr.mxu0 %v2019
    %2160 = vmatpush1.msra.mxu0 %v2018
    %2161 = vmatprep.subr.mxu0 %v2010
    %2162 = vmatpush1.msra.mxu0 %v2009
    %2163 = vmatprep.subr.mxu0 %v2001
    %2164 = vmatpush1.msra.mxu0 %v2000
    %2165 = vmatprep.subr.mxu0 %v1992
    %2166 = vmatpush1.msra.mxu0 %v1991
    %2167 = vmatprep.subr.mxu0 %v1983
    %2168 = vmatpush1.msra.mxu0 %v1982
    %2169 = vmatprep.subr.mxu0 0.0
    %2170 = vmatpush2.msra.mxu0 0.0
    %2171 = vmatprep.subr.mxu0 0.0
    %2172 = vmatpush2.msra.mxu0 0.0
    %2173 = vmatprep.subr.mxu0 0.0
    %2174 = vmatpush2.msra.mxu0 0.0
    %2175 = vmatprep.subr.mxu0 0.0
    %2176 = vmatpush2.msra.mxu0 0.0
    %2177 = vmatprep.subr.mxu0 0.0
    %2178 = vmatpush2.msra.mxu0 0.0
    %2179 = vmatprep.subr.mxu0 0.0
    %2180 = vmatpush2.msra.mxu0 0.0
    %2181 = vmatprep.subr.mxu0 0.0
    %2182 = vmatpush2.msra.mxu0 0.0
    %2183 = vmatprep.subr.mxu0 0.0
    %2184 = vmatpush2.msra.mxu0 0.0
    %2185 = vmatprep.subr.mxu0 0.0
    %2186 = vmatpush2.msra.mxu0 0.0
    %2187 = vmatprep.subr.mxu0 0.0
    %2188 = vmatpush2.msra.mxu0 0.0
    %2189 = vmatprep.subr.mxu0 0.0
    %2190 = vmatpush2.msra.mxu0 0.0
    %2191 = vmatprep.subr.mxu0 0.0
    %2192 = vmatpush2.msra.mxu0 0.0
    %2193 = vmatprep.subr.mxu0 0.0
    %2194 = vmatpush2.msra.mxu0 0.0
    %2195 = vmatprep.subr.mxu0 0.0
    %2196 = vmatpush2.msra.mxu0 0.0
    %2197 = vmatprep.subr.mxu0 0.0
    %2198 = vmatpush2.msra.mxu0 0.0
    %2199 = vmatprep.subr.mxu0 0.0
    %2200 = vmatpush2.msra.mxu0 0.0
    %2201 = vmatprep.mubr.f32.mxu0 0.0
    %2202 = vmatmul.mubr.f32.gmra.mxu0 %v1308
    %v2203 = vpop.f32.mrf.mxu0
    %v2204 = vadd.f32 %v2135, %v2203
    %v2205 = vpop.f32.mrf.mxu0
    %v2206 = vadd.f32 %v2135, %v2205
    %2207 = vmatprep.mubr.f32.mxu0 0.0
    %2208 = vmatmul.mubr.f32.gmra.mxu0 %v1309
    %v2209 = vpop.f32.mrf.mxu0
    %v2210 = vadd.f32 %v2135, %v2209
    %v2211 = vpop.f32.mrf.mxu0
    %v2212 = vadd.f32 %v2135, %v2211
    %2213 = vmatprep.mubr.f32.mxu0 0.0
    %2214 = vmatmul.mubr.f32.gmra.mxu0 %v1310
    %v2215 = vpop.f32.mrf.mxu0
    %v2216 = vadd.f32 %v2135, %v2215
    %v2217 = vpop.f32.mrf.mxu0
    %v2218 = vadd.f32 %v2135, %v2217
    %2219 = vmatprep.mubr.f32.mxu0 0.0
    %2220 = vmatmul.mubr.f32.gmra.mxu0 %v1311
    %v2221 = vpop.f32.mrf.mxu0
    %v2222 = vadd.f32 %v2135, %v2221
    %v2223 = vpop.f32.mrf.mxu0
    %v2224 = vadd.f32 %v2135, %v2223
    %2225 = vdwg.mxu0
    %2226 = vmatprep.subr.mxu0 %v2120
    %2227 = vmatpush1.msra.mxu0 %v2119
    %2228 = vmatprep.subr.mxu0 %v2111
    %2229 = vmatpush1.msra.mxu0 %v2110
    %2230 = vmatprep.subr.mxu0 %v2102
    %2231 = vmatpush1.msra.mxu0 %v2101
    %2232 = vmatprep.subr.mxu0 %v2093
    %2233 = vmatpush1.msra.mxu0 %v2092
    %2234 = vmatprep.subr.mxu0 %v2084
    %2235 = vmatpush1.msra.mxu0 %v2083
    %2236 = vmatprep.subr.mxu0 %v2075
    %2237 = vmatpush1.msra.mxu0 %v2074
    %2238 = vmatprep.subr.mxu0 %v2066
    %2239 = vmatpush1.msra.mxu0 %v2065
    %2240 = vmatprep.subr.mxu0 %v2057
    %2241 = vmatpush1.msra.mxu0 %v2056
    %2242 = vmatprep.subr.mxu0 %v2048
    %2243 = vmatpush1.msra.mxu0 %v2047
    %2244 = vmatprep.subr.mxu0 %v2039
    %2245 = vmatpush1.msra.mxu0 %v2038
    %2246 = vmatprep.subr.mxu0 %v2030
    %2247 = vmatpush1.msra.mxu0 %v2029
    %2248 = vmatprep.subr.mxu0 %v2021
    %2249 = vmatpush1.msra.mxu0 %v2020
    %2250 = vmatprep.subr.mxu0 %v2012
    %2251 = vmatpush1.msra.mxu0 %v2011
    %2252 = vmatprep.subr.mxu0 %v2003
    %2253 = vmatpush1.msra.mxu0 %v2002
    %2254 = vmatprep.subr.mxu0 %v1994
    %2255 = vmatpush1.msra.mxu0 %v1993
    %2256 = vmatprep.subr.mxu0 %v1985
    %2257 = vmatpush1.msra.mxu0 %v1984
    %2258 = vmatprep.subr.mxu0 0.0
    %2259 = vmatpush2.msra.mxu0 0.0
    %2260 = vmatprep.subr.mxu0 0.0
    %2261 = vmatpush2.msra.mxu0 0.0
    %2262 = vmatprep.subr.mxu0 0.0
    %2263 = vmatpush2.msra.mxu0 0.0
    %2264 = vmatprep.subr.mxu0 0.0
    %2265 = vmatpush2.msra.mxu0 0.0
    %2266 = vmatprep.subr.mxu0 0.0
    %2267 = vmatpush2.msra.mxu0 0.0
    %2268 = vmatprep.subr.mxu0 0.0
    %2269 = vmatpush2.msra.mxu0 0.0
    %2270 = vmatprep.subr.mxu0 0.0
    %2271 = vmatpush2.msra.mxu0 0.0
    %2272 = vmatprep.subr.mxu0 0.0
    %2273 = vmatpush2.msra.mxu0 0.0
    %2274 = vmatprep.subr.mxu0 0.0
    %2275 = vmatpush2.msra.mxu0 0.0
    %2276 = vmatprep.subr.mxu0 0.0
    %2277 = vmatpush2.msra.mxu0 0.0
    %2278 = vmatprep.subr.mxu0 0.0
    %2279 = vmatpush2.msra.mxu0 0.0
    %2280 = vmatprep.subr.mxu0 0.0
    %2281 = vmatpush2.msra.mxu0 0.0
    %2282 = vmatprep.subr.mxu0 0.0
    %2283 = vmatpush2.msra.mxu0 0.0
    %2284 = vmatprep.subr.mxu0 0.0
    %2285 = vmatpush2.msra.mxu0 0.0
    %2286 = vmatprep.subr.mxu0 0.0
    %2287 = vmatpush2.msra.mxu0 0.0
    %2288 = vmatprep.subr.mxu0 0.0
    %2289 = vmatpush2.msra.mxu0 0.0
    %2290 = vmatprep.mubr.f32.mxu0 0.0
    %2291 = vmatmul.mubr.f32.gmra.mxu0 %v1308
    %v2292 = vpop.f32.mrf.mxu0
    %v2293 = vadd.f32 %v2135, %v2292
    %v2294 = vpop.f32.mrf.mxu0
    %v2295 = vadd.f32 %v2135, %v2294
    %2296 = vmatprep.mubr.f32.mxu0 0.0
    %2297 = vmatmul.mubr.f32.gmra.mxu0 %v1309
    %v2298 = vpop.f32.mrf.mxu0
    %v2299 = vadd.f32 %v2135, %v2298
    %v2300 = vpop.f32.mrf.mxu0
    %v2301 = vadd.f32 %v2135, %v2300
    %2302 = vmatprep.mubr.f32.mxu0 0.0
    %2303 = vmatmul.mubr.f32.gmra.mxu0 %v1310
    %v2304 = vpop.f32.mrf.mxu0
    %v2305 = vadd.f32 %v2135, %v2304
    %v2306 = vpop.f32.mrf.mxu0
    %v2307 = vadd.f32 %v2135, %v2306
    %2308 = vmatprep.mubr.f32.mxu0 0.0
    %2309 = vmatmul.mubr.f32.gmra.mxu0 %v1311
    %v2310 = vpop.f32.mrf.mxu0
    %v2311 = vadd.f32 %v2135, %v2310
    %v2312 = vpop.f32.mrf.mxu0
    %v2313 = vadd.f32 %v2135, %v2312
    %2314 = vdwg.mxu0
    %2315 = vmatprep.subr.mxu0 %v2122
    %2316 = vmatpush1.msra.mxu0 %v2121
    %2317 = vmatprep.subr.mxu0 %v2113
    %2318 = vmatpush1.msra.mxu0 %v2112
    %2319 = vmatprep.subr.mxu0 %v2104
    %2320 = vmatpush1.msra.mxu0 %v2103
    %2321 = vmatprep.subr.mxu0 %v2095
    %2322 = vmatpush1.msra.mxu0 %v2094
    %2323 = vmatprep.subr.mxu0 %v2086
    %2324 = vmatpush1.msra.mxu0 %v2085
    %2325 = vmatprep.subr.mxu0 %v2077
    %2326 = vmatpush1.msra.mxu0 %v2076
    %2327 = vmatprep.subr.mxu0 %v2068
    %2328 = vmatpush1.msra.mxu0 %v2067
    %2329 = vmatprep.subr.mxu0 %v2059
    %2330 = vmatpush1.msra.mxu0 %v2058
    %2331 = vmatprep.subr.mxu0 %v2050
    %2332 = vmatpush1.msra.mxu0 %v2049
    %2333 = vmatprep.subr.mxu0 %v2041
    %2334 = vmatpush1.msra.mxu0 %v2040
    %2335 = vmatprep.subr.mxu0 %v2032
    %2336 = vmatpush1.msra.mxu0 %v2031
    %2337 = vmatprep.subr.mxu0 %v2023
    %2338 = vmatpush1.msra.mxu0 %v2022
    %2339 = vmatprep.subr.mxu0 %v2014
    %2340 = vmatpush1.msra.mxu0 %v2013
    %2341 = vmatprep.subr.mxu0 %v2005
    %2342 = vmatpush1.msra.mxu0 %v2004
    %2343 = vmatprep.subr.mxu0 %v1996
    %2344 = vmatpush1.msra.mxu0 %v1995
    %2345 = vmatprep.subr.mxu0 %v1987
    %2346 = vmatpush1.msra.mxu0 %v1986
    %2347 = vmatprep.subr.mxu0 0.0
    %2348 = vmatpush2.msra.mxu0 0.0
    %2349 = vmatprep.subr.mxu0 0.0
    %2350 = vmatpush2.msra.mxu0 0.0
    %2351 = vmatprep.subr.mxu0 0.0
    %2352 = vmatpush2.msra.mxu0 0.0
    %2353 = vmatprep.subr.mxu0 0.0
    %2354 = vmatpush2.msra.mxu0 0.0
    %2355 = vmatprep.subr.mxu0 0.0
    %2356 = vmatpush2.msra.mxu0 0.0
    %2357 = vmatprep.subr.mxu0 0.0
    %2358 = vmatpush2.msra.mxu0 0.0
    %2359 = vmatprep.subr.mxu0 0.0
    %2360 = vmatpush2.msra.mxu0 0.0
    %2361 = vmatprep.subr.mxu0 0.0
    %2362 = vmatpush2.msra.mxu0 0.0
    %2363 = vmatprep.subr.mxu0 0.0
    %2364 = vmatpush2.msra.mxu0 0.0
    %2365 = vmatprep.subr.mxu0 0.0
    %2366 = vmatpush2.msra.mxu0 0.0
    %2367 = vmatprep.subr.mxu0 0.0
    %2368 = vmatpush2.msra.mxu0 0.0
    %2369 = vmatprep.subr.mxu0 0.0
    %2370 = vmatpush2.msra.mxu0 0.0
    %2371 = vmatprep.subr.mxu0 0.0
    %2372 = vmatpush2.msra.mxu0 0.0
    %2373 = vmatprep.subr.mxu0 0.0
    %2374 = vmatpush2.msra.mxu0 0.0
    %2375 = vmatprep.subr.mxu0 0.0
    %2376 = vmatpush2.msra.mxu0 0.0
    %2377 = vmatprep.subr.mxu0 0.0
    %2378 = vmatpush2.msra.mxu0 0.0
    %2379 = vmatprep.mubr.f32.mxu0 0.0
    %2380 = vmatmul.mubr.f32.gmra.mxu0 %v1308
    %v2381 = vpop.f32.mrf.mxu0
    %v2382 = vadd.f32 %v2135, %v2381
    %v2383 = vpop.f32.mrf.mxu0
    %v2384 = vadd.f32 %v2135, %v2383
    %2385 = vmatprep.mubr.f32.mxu0 0.0
    %2386 = vmatmul.mubr.f32.gmra.mxu0 %v1309
    %v2387 = vpop.f32.mrf.mxu0
    %v2388 = vadd.f32 %v2135, %v2387
    %v2389 = vpop.f32.mrf.mxu0
    %v2390 = vadd.f32 %v2135, %v2389
    %2391 = vmatprep.mubr.f32.mxu0 0.0
    %2392 = vmatmul.mubr.f32.gmra.mxu0 %v1310
    %v2393 = vpop.f32.mrf.mxu0
    %v2394 = vadd.f32 %v2135, %v2393
    %v2395 = vpop.f32.mrf.mxu0
    %v2396 = vadd.f32 %v2135, %v2395
    %2397 = vmatprep.mubr.f32.mxu0 0.0
    %2398 = vmatmul.mubr.f32.gmra.mxu0 %v1311
    %v2399 = vpop.f32.mrf.mxu0
    %v2400 = vadd.f32 %v2135, %v2399
    %v2401 = vpop.f32.mrf.mxu0
    %v2402 = vadd.f32 %v2135, %v2401
    %2403 = vdwg.mxu0
    %2404 = vmatprep.subr.mxu0 %v2124
    %2405 = vmatpush1.msra.mxu0 %v2123
    %2406 = vmatprep.subr.mxu0 %v2115
    %2407 = vmatpush1.msra.mxu0 %v2114
    %2408 = vmatprep.subr.mxu0 %v2106
    %2409 = vmatpush1.msra.mxu0 %v2105
    %2410 = vmatprep.subr.mxu0 %v2097
    %2411 = vmatpush1.msra.mxu0 %v2096
    %2412 = vmatprep.subr.mxu0 %v2088
    %2413 = vmatpush1.msra.mxu0 %v2087
    %2414 = vmatprep.subr.mxu0 %v2079
    %2415 = vmatpush1.msra.mxu0 %v2078
    %2416 = vmatprep.subr.mxu0 %v2070
    %2417 = vmatpush1.msra.mxu0 %v2069
    %2418 = vmatprep.subr.mxu0 %v2061
    %2419 = vmatpush1.msra.mxu0 %v2060
    %2420 = vmatprep.subr.mxu0 %v2052
    %2421 = vmatpush1.msra.mxu0 %v2051
    %2422 = vmatprep.subr.mxu0 %v2043
    %2423 = vmatpush1.msra.mxu0 %v2042
    %2424 = vmatprep.subr.mxu0 %v2034
    %2425 = vmatpush1.msra.mxu0 %v2033
    %2426 = vmatprep.subr.mxu0 %v2025
    %2427 = vmatpush1.msra.mxu0 %v2024
    %2428 = vmatprep.subr.mxu0 %v2016
    %2429 = vmatpush1.msra.mxu0 %v2015
    %2430 = vmatprep.subr.mxu0 %v2007
    %2431 = vmatpush1.msra.mxu0 %v2006
    %2432 = vmatprep.subr.mxu0 %v1998
    %2433 = vmatpush1.msra.mxu0 %v1997
    %2434 = vmatprep.subr.mxu0 %v1989
    %2435 = vmatpush1.msra.mxu0 %v1988
    %2436 = vmatprep.subr.mxu0 0.0
    %2437 = vmatpush2.msra.mxu0 0.0
    %2438 = vmatprep.subr.mxu0 0.0
    %2439 = vmatpush2.msra.mxu0 0.0
    %2440 = vmatprep.subr.mxu0 0.0
    %2441 = vmatpush2.msra.mxu0 0.0
    %2442 = vmatprep.subr.mxu0 0.0
    %2443 = vmatpush2.msra.mxu0 0.0
    %2444 = vmatprep.subr.mxu0 0.0
    %2445 = vmatpush2.msra.mxu0 0.0
    %2446 = vmatprep.subr.mxu0 0.0
    %2447 = vmatpush2.msra.mxu0 0.0
    %2448 = vmatprep.subr.mxu0 0.0
    %2449 = vmatpush2.msra.mxu0 0.0
    %2450 = vmatprep.subr.mxu0 0.0
    %2451 = vmatpush2.msra.mxu0 0.0
    %2452 = vmatprep.subr.mxu0 0.0
    %2453 = vmatpush2.msra.mxu0 0.0
    %2454 = vmatprep.subr.mxu0 0.0
    %2455 = vmatpush2.msra.mxu0 0.0
    %2456 = vmatprep.subr.mxu0 0.0
    %2457 = vmatpush2.msra.mxu0 0.0
    %2458 = vmatprep.subr.mxu0 0.0
    %2459 = vmatpush2.msra.mxu0 0.0
    %2460 = vmatprep.subr.mxu0 0.0
    %2461 = vmatpush2.msra.mxu0 0.0
    %2462 = vmatprep.subr.mxu0 0.0
    %2463 = vmatpush2.msra.mxu0 0.0
    %2464 = vmatprep.subr.mxu0 0.0
    %2465 = vmatpush2.msra.mxu0 0.0
    %2466 = vmatprep.subr.mxu0 0.0
    %2467 = vmatpush2.msra.mxu0 0.0
    %2468 = vmatprep.mubr.f32.mxu0 0.0
    %2469 = vmatmul.mubr.f32.gmra.mxu0 %v1308
    %v2470 = vpop.f32.mrf.mxu0
    %v2471 = vadd.f32 %v2135, %v2470
    %v2472 = vpop.f32.mrf.mxu0
    %v2473 = vadd.f32 %v2135, %v2472
    %2474 = vmatprep.mubr.f32.mxu0 0.0
    %2475 = vmatmul.mubr.f32.gmra.mxu0 %v1309
    %v2476 = vpop.f32.mrf.mxu0
    %v2477 = vadd.f32 %v2135, %v2476
    %v2478 = vpop.f32.mrf.mxu0
    %v2479 = vadd.f32 %v2135, %v2478
    %2480 = vmatprep.mubr.f32.mxu0 0.0
    %2481 = vmatmul.mubr.f32.gmra.mxu0 %v1310
    %v2482 = vpop.f32.mrf.mxu0
    %v2483 = vadd.f32 %v2135, %v2482
    %v2484 = vpop.f32.mrf.mxu0
    %v2485 = vadd.f32 %v2135, %v2484
    %2486 = vmatprep.mubr.f32.mxu0 0.0
    %2487 = vmatmul.mubr.f32.gmra.mxu0 %v1311
    %v2488 = vpop.f32.mrf.mxu0
    %v2489 = vadd.f32 %v2135, %v2488
    %v2490 = vpop.f32.mrf.mxu0
    %v2491 = vadd.f32 %v2135, %v2490
    %2492 = vdwg.mxu0
    %2493 = vmatprep.subr.mxu0 0.0
    %2494 = vmatpush1.msra.mxu0 %v2125
    %2495 = vmatprep.subr.mxu0 0.0
    %2496 = vmatpush1.msra.mxu0 %v2116
    %2497 = vmatprep.subr.mxu0 0.0
    %2498 = vmatpush1.msra.mxu0 %v2107
    %2499 = vmatprep.subr.mxu0 0.0
    %2500 = vmatpush1.msra.mxu0 %v2098
    %2501 = vmatprep.subr.mxu0 0.0
    %2502 = vmatpush1.msra.mxu0 %v2089
    %2503 = vmatprep.subr.mxu0 0.0
    %2504 = vmatpush1.msra.mxu0 %v2080
    %2505 = vmatprep.subr.mxu0 0.0
    %2506 = vmatpush1.msra.mxu0 %v2071
    %2507 = vmatprep.subr.mxu0 0.0
    %2508 = vmatpush1.msra.mxu0 %v2062
    %2509 = vmatprep.subr.mxu0 0.0
    %2510 = vmatpush1.msra.mxu0 %v2053
    %2511 = vmatprep.subr.mxu0 0.0
    %2512 = vmatpush1.msra.mxu0 %v2044
    %2513 = vmatprep.subr.mxu0 0.0
    %2514 = vmatpush1.msra.mxu0 %v2035
    %2515 = vmatprep.subr.mxu0 0.0
    %2516 = vmatpush1.msra.mxu0 %v2026
    %2517 = vmatprep.subr.mxu0 0.0
    %2518 = vmatpush1.msra.mxu0 %v2017
    %2519 = vmatprep.subr.mxu0 0.0
    %2520 = vmatpush1.msra.mxu0 %v2008
    %2521 = vmatprep.subr.mxu0 0.0
    %2522 = vmatpush1.msra.mxu0 %v1999
    %2523 = vmatprep.subr.mxu0 0.0
    %2524 = vmatpush1.msra.mxu0 %v1990
    %2525 = vmatprep.subr.mxu0 0.0
    %2526 = vmatpush2.msra.mxu0 0.0
    %2527 = vmatprep.subr.mxu0 0.0
    %2528 = vmatpush2.msra.mxu0 0.0
    %2529 = vmatprep.subr.mxu0 0.0
    %2530 = vmatpush2.msra.mxu0 0.0
    %2531 = vmatprep.subr.mxu0 0.0
    %2532 = vmatpush2.msra.mxu0 0.0
    %2533 = vmatprep.subr.mxu0 0.0
    %2534 = vmatpush2.msra.mxu0 0.0
    %2535 = vmatprep.subr.mxu0 0.0
    %2536 = vmatpush2.msra.mxu0 0.0
    %2537 = vmatprep.subr.mxu0 0.0
    %2538 = vmatpush2.msra.mxu0 0.0
    %2539 = vmatprep.subr.mxu0 0.0
    %2540 = vmatpush2.msra.mxu0 0.0
    %2541 = vmatprep.subr.mxu0 0.0
    %2542 = vmatpush2.msra.mxu0 0.0
    %2543 = vmatprep.subr.mxu0 0.0
    %2544 = vmatpush2.msra.mxu0 0.0
    %2545 = vmatprep.subr.mxu0 0.0
    %2546 = vmatpush2.msra.mxu0 0.0
    %2547 = vmatprep.subr.mxu0 0.0
    %2548 = vmatpush2.msra.mxu0 0.0
    %2549 = vmatprep.subr.mxu0 0.0
    %2550 = vmatpush2.msra.mxu0 0.0
    %2551 = vmatprep.subr.mxu0 0.0
    %2552 = vmatpush2.msra.mxu0 0.0
    %2553 = vmatprep.subr.mxu0 0.0
    %2554 = vmatpush2.msra.mxu0 0.0
    %2555 = vmatprep.subr.mxu0 0.0
    %2556 = vmatpush2.msra.mxu0 0.0
    %2557 = vmatprep.mubr.f32.mxu0 0.0
    %2558 = vmatmul.mubr.f32.gmra.mxu0 %v1308
    %v2559 = vpop.f32.mrf.mxu0
    %v2560 = vadd.f32 %v2135, %v2559
    %v2561 = vpop.f32.mrf.mxu0
    %2562 = vmatprep.mubr.f32.mxu0 0.0
    %2563 = vmatmul.mubr.f32.gmra.mxu0 %v1309
    %v2564 = vpop.f32.mrf.mxu0
    %v2565 = vadd.f32 %v2135, %v2564
    %v2566 = vpop.f32.mrf.mxu0
    %2567 = vmatprep.mubr.f32.mxu0 0.0
    %2568 = vmatmul.mubr.f32.gmra.mxu0 %v1310
    %v2569 = vpop.f32.mrf.mxu0
    %v2570 = vadd.f32 %v2135, %v2569
    %v2571 = vpop.f32.mrf.mxu0
    %2572 = vmatprep.mubr.f32.mxu0 0.0
    %2573 = vmatmul.mubr.f32.gmra.mxu0 %v1311
    %v2574 = vpop.f32.mrf.mxu0
    %v2575 = vadd.f32 %v2135, %v2574
    %v2576 = vpop.f32.mrf.mxu0
    %2577 = vdwg.mxu0
    %v2578 = vmax.f32 %v2204, 0.0
    %v2579 = vmax.f32 %v2206, 0.0
    %v2580 = vmax.f32 %v2293, 0.0
    %v2581 = vmax.f32 %v2295, 0.0
    %v2582 = vmax.f32 %v2382, 0.0
    %v2583 = vmax.f32 %v2384, 0.0
    %v2584 = vmax.f32 %v2471, 0.0
    %v2585 = vmax.f32 %v2473, 0.0
    %v2586 = vmax.f32 %v2560, 0.0
    %v2587 = vmax.f32 %v2210, 0.0
    %v2588 = vmax.f32 %v2212, 0.0
    %v2589 = vmax.f32 %v2299, 0.0
    %v2590 = vmax.f32 %v2301, 0.0
    %v2591 = vmax.f32 %v2388, 0.0
    %v2592 = vmax.f32 %v2390, 0.0
    %v2593 = vmax.f32 %v2477, 0.0
    %v2594 = vmax.f32 %v2479, 0.0
    %v2595 = vmax.f32 %v2565, 0.0
    %v2596 = vmax.f32 %v2216, 0.0
    %v2597 = vmax.f32 %v2218, 0.0
    %v2598 = vmax.f32 %v2305, 0.0
    %v2599 = vmax.f32 %v2307, 0.0
    %v2600 = vmax.f32 %v2394, 0.0
    %v2601 = vmax.f32 %v2396, 0.0
    %v2602 = vmax.f32 %v2483, 0.0
    %v2603 = vmax.f32 %v2485, 0.0
    %v2604 = vmax.f32 %v2570, 0.0
    %v2605 = vmax.f32 %v2222, 0.0
    %v2606 = vmax.f32 %v2224, 0.0
    %v2607 = vmax.f32 %v2311, 0.0
    %v2608 = vmax.f32 %v2313, 0.0
    %v2609 = vmax.f32 %v2400, 0.0
    %v2610 = vmax.f32 %v2402, 0.0
    %v2611 = vmax.f32 %v2489, 0.0
    %v2612 = vmax.f32 %v2491, 0.0
    %v2613 = vmax.f32 %v2575, 0.0
    %s2614 = scalar_lea.vmem %s9, 144
    %2615 = vst [vmem:[%s2614] sm:$0xff] %v2578
    %2616 = vst [vmem:[%s2614 + $0x8] sm:$0xff] %v2579
    %2617 = vst [vmem:[%s2614 + $0x10] sm:$0xff] %v2580
    %2618 = vst [vmem:[%s2614 + $0x18] sm:$0xff] %v2581
    %2619 = vst [vmem:[%s2614 + $0x20] sm:$0xff] %v2582
    %2620 = vst [vmem:[%s2614 + $0x28] sm:$0xff] %v2583
    %2621 = vst [vmem:[%s2614 + $0x30] sm:$0xff] %v2584
    %2622 = vst [vmem:[%s2614 + $0x38] sm:$0xff] %v2585
    %2623 = vst.msk [vmem:[%s2614 + $0x40] sm:$0xff] %vm1951, %v2586
    %2624 = vst [vmem:[%s2614 + $0x48] sm:$0xff] %v2587
    %2625 = vst [vmem:[%s2614 + $0x50] sm:$0xff] %v2588
    %2626 = vst [vmem:[%s2614 + $0x58] sm:$0xff] %v2589
    %2627 = vst [vmem:[%s2614 + $0x60] sm:$0xff] %v2590
    %2628 = vst [vmem:[%s2614 + $0x68] sm:$0xff] %v2591
    %2629 = vst [vmem:[%s2614 + $0x70] sm:$0xff] %v2592
    %2630 = vst [vmem:[%s2614 + $0x78] sm:$0xff] %v2593
    %2631 = vst [vmem:[%s2614 + $0x80] sm:$0xff] %v2594
    %2632 = vst.msk [vmem:[%s2614 + $0x88] sm:$0xff] %vm1951, %v2595
    %s2633 = scalar_lea.vmem %s9, 576
    %2634 = vst [vmem:[%s2633] sm:$0xff] %v2596
    %2635 = vst [vmem:[%s2633 + $0x8] sm:$0xff] %v2597
    %2636 = vst [vmem:[%s2633 + $0x10] sm:$0xff] %v2598
    %2637 = vst [vmem:[%s2633 + $0x18] sm:$0xff] %v2599
    %2638 = vst [vmem:[%s2633 + $0x20] sm:$0xff] %v2600
    %2639 = vst [vmem:[%s2633 + $0x28] sm:$0xff] %v2601
    %2640 = vst [vmem:[%s2633 + $0x30] sm:$0xff] %v2602
    %2641 = vst [vmem:[%s2633 + $0x38] sm:$0xff] %v2603
    %2642 = vst.msk [vmem:[%s2633 + $0x40] sm:$0xff] %vm1951, %v2604
    %2643 = vst [vmem:[%s2633 + $0x48] sm:$0xff] %v2605
    %2644 = vst [vmem:[%s2633 + $0x50] sm:$0xff] %v2606
    %2645 = vst [vmem:[%s2633 + $0x58] sm:$0xff] %v2607
    %2646 = vst [vmem:[%s2633 + $0x60] sm:$0xff] %v2608
    %2647 = vst [vmem:[%s2633 + $0x68] sm:$0xff] %v2609
    %2648 = vst [vmem:[%s2633 + $0x70] sm:$0xff] %v2610
    %2649 = vst [vmem:[%s2633 + $0x78] sm:$0xff] %v2611
    %2650 = vst [vmem:[%s2633 + $0x80] sm:$0xff] %v2612
    %2651 = vst.msk [vmem:[%s2633 + $0x88] sm:$0xff] %vm1951, %v2613
    %s2652 = scalar_lea.vmem [#allocation15], 2304
    %v2653 = vld [vmem:[%s2652] sm:$0xff]
    %v2654 = vld [vmem:[%s2652 + $0x8] sm:$0xff]
    %v2655 = vld [vmem:[%s2652 + $0x10] sm:$0xff]
    %v2656 = vld [vmem:[%s2652 + $0x18] sm:$0xff]
    %v2657 = vld [vmem:[%s2652 + $0x20] sm:$0xff]
    %v2658 = vld [vmem:[%s2652 + $0x28] sm:$0xff]
    %v2659 = vld [vmem:[%s2652 + $0x30] sm:$0xff]
    %v2660 = vld [vmem:[%s2652 + $0x38] sm:$0xff]
    %v2661 = vld [vmem:[%s2652 + $0x40] sm:$0xff]
    %v2662 = vld [vmem:[%s2652 + $0x48] sm:$0xff]
    %v2663 = vld [vmem:[%s2652 + $0x50] sm:$0xff]
    %v2664 = vld [vmem:[%s2652 + $0x58] sm:$0xff]
    %v2665 = vld [vmem:[%s2652 + $0x60] sm:$0xff]
    %v2666 = vld [vmem:[%s2652 + $0x68] sm:$0xff]
    %v2667 = vld [vmem:[%s2652 + $0x70] sm:$0xff]
    %v2668 = vld [vmem:[%s2652 + $0x78] sm:$0xff]
    %v2669 = vld [vmem:[%s2652 + $0x80] sm:$0xff]
    %v2670 = vld [vmem:[%s2652 + $0x88] sm:$0xff]
    %v2671 = vld [vmem:[%s2652 + $0x90] sm:$0xff]
    %v2672 = vld [vmem:[%s2652 + $0x98] sm:$0xff]
    %v2673 = vld [vmem:[%s2652 + $0xa0] sm:$0xff]
    %v2674 = vld [vmem:[%s2652 + $0xa8] sm:$0xff]
    %v2675 = vld [vmem:[%s2652 + $0xb0] sm:$0xff]
    %v2676 = vld [vmem:[%s2652 + $0xb8] sm:$0xff]
    %v2677 = vld [vmem:[%s2652 + $0xc0] sm:$0xff]
    %v2678 = vld [vmem:[%s2652 + $0xc8] sm:$0xff]
    %v2679 = vld [vmem:[%s2652 + $0xd0] sm:$0xff]
    %v2680 = vld [vmem:[%s2652 + $0xd8] sm:$0xff]
    %v2681 = vld [vmem:[%s2652 + $0xe0] sm:$0xff]
    %v2682 = vld [vmem:[%s2652 + $0xe8] sm:$0xff]
    %v2683 = vld [vmem:[%s2652 + $0xf0] sm:$0xff]
    %v2684 = vld [vmem:[%s2652 + $0xf8] sm:$0xff]
    %v2685 = vld [vmem:[%s2652 + $0x100] sm:$0xff]
    %v2686 = vld [vmem:[%s2652 + $0x108] sm:$0xff]
    %v2687 = vld [vmem:[%s2652 + $0x110] sm:$0xff]
    %v2688 = vld [vmem:[%s2652 + $0x118] sm:$0xff]
    %v2689 = vld [vmem:[%s2652 + $0x120] sm:$0xff]
    %v2690 = vld [vmem:[%s2652 + $0x128] sm:$0xff]
    %v2691 = vld [vmem:[%s2652 + $0x130] sm:$0xff]
    %v2692 = vld [vmem:[%s2652 + $0x138] sm:$0xff]
    %v2693 = vld [vmem:[%s2652 + $0x140] sm:$0xff]
    %v2694 = vld [vmem:[%s2652 + $0x148] sm:$0xff]
    %v2695 = vld [vmem:[%s2652 + $0x150] sm:$0xff]
    %v2696 = vld [vmem:[%s2652 + $0x158] sm:$0xff]
    %v2697 = vld [vmem:[%s2652 + $0x160] sm:$0xff]
    %v2698 = vld [vmem:[%s2652 + $0x168] sm:$0xff]
    %v2699 = vld [vmem:[%s2652 + $0x170] sm:$0xff]
    %v2700 = vld [vmem:[%s2652 + $0x178] sm:$0xff]
    %v2701 = vld [vmem:[%s2652 + $0x180] sm:$0xff]
    %v2702 = vld [vmem:[%s2652 + $0x188] sm:$0xff]
    %v2703 = vld [vmem:[%s2652 + $0x190] sm:$0xff]
    %v2704 = vld [vmem:[%s2652 + $0x198] sm:$0xff]
    %v2705 = vld [vmem:[%s2652 + $0x1a0] sm:$0xff]
    %v2706 = vld [vmem:[%s2652 + $0x1a8] sm:$0xff]
    %v2707 = vld [vmem:[%s2652 + $0x1b0] sm:$0xff]
    %v2708 = vld [vmem:[%s2652 + $0x1b8] sm:$0xff]
    %v2709 = vld [vmem:[%s2652 + $0x1c0] sm:$0xff]
    %v2710 = vld [vmem:[%s2652 + $0x1c8] sm:$0xff]
    %v2711 = vld [vmem:[%s2652 + $0x1d0] sm:$0xff]
    %v2712 = vld [vmem:[%s2652 + $0x1d8] sm:$0xff]
    %v2713 = vld [vmem:[%s2652 + $0x1e0] sm:$0xff]
    %v2714 = vld [vmem:[%s2652 + $0x1e8] sm:$0xff]
    %v2715 = vld [vmem:[%s2652 + $0x1f0] sm:$0xff]
    %v2716 = vld [vmem:[%s2652 + $0x1f8] sm:$0xff]
    %v2717 = vld [vmem:[%s2652 + $0x200] sm:$0xff]
    %v2718 = vld [vmem:[%s2652 + $0x208] sm:$0xff]
    %v2719 = vld [vmem:[%s2652 + $0x210] sm:$0xff]
    %v2720 = vld [vmem:[%s2652 + $0x218] sm:$0xff]
    %v2721 = vld [vmem:[%s2652 + $0x220] sm:$0xff]
    %v2722 = vld [vmem:[%s2652 + $0x228] sm:$0xff]
    %v2723 = vld [vmem:[%s2652 + $0x230] sm:$0xff]
    %v2724 = vld [vmem:[%s2652 + $0x238] sm:$0xff]
    %v2725 = vld [vmem:[%s2652 + $0x240] sm:$0xff]
    %v2726 = vld [vmem:[%s2652 + $0x248] sm:$0xff]
    %v2727 = vld [vmem:[%s2652 + $0x250] sm:$0xff]
    %v2728 = vld [vmem:[%s2652 + $0x258] sm:$0xff]
    %v2729 = vld [vmem:[%s2652 + $0x260] sm:$0xff]
    %v2730 = vld [vmem:[%s2652 + $0x268] sm:$0xff]
    %v2731 = vld [vmem:[%s2652 + $0x270] sm:$0xff]
    %v2732 = vld [vmem:[%s2652 + $0x278] sm:$0xff]
    %v2733 = vld [vmem:[%s2652 + $0x280] sm:$0xff]
    %v2734 = vld [vmem:[%s2652 + $0x288] sm:$0xff]
    %v2735 = vld [vmem:[%s2652 + $0x290] sm:$0xff]
    %v2736 = vld [vmem:[%s2652 + $0x298] sm:$0xff]
    %v2737 = vld [vmem:[%s2652 + $0x2a0] sm:$0xff]
    %v2738 = vld [vmem:[%s2652 + $0x2a8] sm:$0xff]
    %v2739 = vld [vmem:[%s2652 + $0x2b0] sm:$0xff]
    %v2740 = vld [vmem:[%s2652 + $0x2b8] sm:$0xff]
    %v2741 = vld [vmem:[%s2652 + $0x2c0] sm:$0xff]
    %v2742 = vld [vmem:[%s2652 + $0x2c8] sm:$0xff]
    %v2743 = vld [vmem:[%s2652 + $0x2d0] sm:$0xff]
    %v2744 = vld [vmem:[%s2652 + $0x2d8] sm:$0xff]
    %v2745 = vld [vmem:[%s2652 + $0x2e0] sm:$0xff]
    %v2746 = vld [vmem:[%s2652 + $0x2e8] sm:$0xff]
    %v2747 = vld [vmem:[%s2652 + $0x2f0] sm:$0xff]
    %v2748 = vld [vmem:[%s2652 + $0x2f8] sm:$0xff]
    %v2749 = vld [vmem:[%s2652 + $0x300] sm:$0xff]
    %v2750 = vld [vmem:[%s2652 + $0x308] sm:$0xff]
    %v2751 = vld [vmem:[%s2652 + $0x310] sm:$0xff]
    %v2752 = vld [vmem:[%s2652 + $0x318] sm:$0xff]
    %v2753 = vld [vmem:[%s2652 + $0x320] sm:$0xff]
    %v2754 = vld [vmem:[%s2652 + $0x328] sm:$0xff]
    %v2755 = vld [vmem:[%s2652 + $0x330] sm:$0xff]
    %v2756 = vld [vmem:[%s2652 + $0x338] sm:$0xff]
    %v2757 = vld [vmem:[%s2652 + $0x340] sm:$0xff]
    %v2758 = vld [vmem:[%s2652 + $0x348] sm:$0xff]
    %v2759 = vld [vmem:[%s2652 + $0x350] sm:$0xff]
    %v2760 = vld [vmem:[%s2652 + $0x358] sm:$0xff]
    %v2761 = vld [vmem:[%s2652 + $0x360] sm:$0xff]
    %v2762 = vld [vmem:[%s2652 + $0x368] sm:$0xff]
    %v2763 = vld [vmem:[%s2652 + $0x370] sm:$0xff]
    %v2764 = vld [vmem:[%s2652 + $0x378] sm:$0xff]
    %v2765 = vld [vmem:[%s2652 + $0x380] sm:$0xff]
    %v2766 = vld [vmem:[%s2652 + $0x388] sm:$0xff]
    %v2767 = vld [vmem:[%s2652 + $0x390] sm:$0xff]
    %v2768 = vld [vmem:[%s2652 + $0x398] sm:$0xff]
    %v2769 = vld [vmem:[%s2652 + $0x3a0] sm:$0xff]
    %v2770 = vld [vmem:[%s2652 + $0x3a8] sm:$0xff]
    %v2771 = vld [vmem:[%s2652 + $0x3b0] sm:$0xff]
    %v2772 = vld [vmem:[%s2652 + $0x3b8] sm:$0xff]
    %v2773 = vld [vmem:[%s2652 + $0x3c0] sm:$0xff]
    %v2774 = vld [vmem:[%s2652 + $0x3c8] sm:$0xff]
    %v2775 = vld [vmem:[%s2652 + $0x3d0] sm:$0xff]
    %v2776 = vld [vmem:[%s2652 + $0x3d8] sm:$0xff]
    %v2777 = vld [vmem:[%s2652 + $0x3e0] sm:$0xff]
    %v2778 = vld [vmem:[%s2652 + $0x3e8] sm:$0xff]
    %v2779 = vld [vmem:[%s2652 + $0x3f0] sm:$0xff]
    %v2780 = vld [vmem:[%s2652 + $0x3f8] sm:$0xff]
    %v2781 = vld [vmem:[%s2652 + $0x400] sm:$0xff]
    %v2782 = vld [vmem:[%s2652 + $0x408] sm:$0xff]
    %v2783 = vld [vmem:[%s2652 + $0x410] sm:$0xff]
    %v2784 = vld [vmem:[%s2652 + $0x418] sm:$0xff]
    %v2785 = vld [vmem:[%s2652 + $0x420] sm:$0xff]
    %v2786 = vld [vmem:[%s2652 + $0x428] sm:$0xff]
    %v2787 = vld [vmem:[%s2652 + $0x430] sm:$0xff]
    %v2788 = vld [vmem:[%s2652 + $0x438] sm:$0xff]
    %v2789 = vld [vmem:[%s2652 + $0x440] sm:$0xff]
    %v2790 = vld [vmem:[%s2652 + $0x448] sm:$0xff]
    %v2791 = vld [vmem:[%s2652 + $0x450] sm:$0xff]
    %v2792 = vld [vmem:[%s2652 + $0x458] sm:$0xff]
    %v2793 = vld [vmem:[%s2652 + $0x460] sm:$0xff]
    %v2794 = vld [vmem:[%s2652 + $0x468] sm:$0xff]
    %v2795 = vld [vmem:[%s2652 + $0x470] sm:$0xff]
    %v2796 = vld [vmem:[%s2652 + $0x478] sm:$0xff]
    %s2797 = scalar_lea.vmem [#allocation17], 2
    %v2798 = vld [vmem:[%s2797] sm:$0x1]
    %v2800 = vlaneseq
    %v2801 = vshrl.u32 %v2800, 7
    %v2802 = vsub.s32 0, %v2801
    %v2803 = vrot.slane %v2798, %v2802
    %2804 = vset.pattern.permute.xlu0 0
    %2805 = vperm.xlu0 %2804, %v2803
    %v2806 = vpop.permute.xlu0 %2805
    %2808 = vmatprep.subr.mxu0 %v2789
    %2809 = vmatpush1.msra.mxu0 %v2788
    %2810 = vmatprep.subr.mxu0 %v2780
    %2811 = vmatpush1.msra.mxu0 %v2779
    %2812 = vmatprep.subr.mxu0 %v2771
    %2813 = vmatpush1.msra.mxu0 %v2770
    %2814 = vmatprep.subr.mxu0 %v2762
    %2815 = vmatpush1.msra.mxu0 %v2761
    %2816 = vmatprep.subr.mxu0 %v2753
    %2817 = vmatpush1.msra.mxu0 %v2752
    %2818 = vmatprep.subr.mxu0 %v2744
    %2819 = vmatpush1.msra.mxu0 %v2743
    %2820 = vmatprep.subr.mxu0 %v2735
    %2821 = vmatpush1.msra.mxu0 %v2734
    %2822 = vmatprep.subr.mxu0 %v2726
    %2823 = vmatpush1.msra.mxu0 %v2725
    %2824 = vmatprep.subr.mxu0 %v2717
    %2825 = vmatpush1.msra.mxu0 %v2716
    %2826 = vmatprep.subr.mxu0 %v2708
    %2827 = vmatpush1.msra.mxu0 %v2707
    %2828 = vmatprep.subr.mxu0 %v2699
    %2829 = vmatpush1.msra.mxu0 %v2698
    %2830 = vmatprep.subr.mxu0 %v2690
    %2831 = vmatpush1.msra.mxu0 %v2689
    %2832 = vmatprep.subr.mxu0 %v2681
    %2833 = vmatpush1.msra.mxu0 %v2680
    %2834 = vmatprep.subr.mxu0 %v2672
    %2835 = vmatpush1.msra.mxu0 %v2671
    %2836 = vmatprep.subr.mxu0 %v2663
    %2837 = vmatpush1.msra.mxu0 %v2662
    %2838 = vmatprep.subr.mxu0 %v2654
    %2839 = vmatpush1.msra.mxu0 %v2653
    %2840 = vmatprep.subr.mxu0 0.0
    %2841 = vmatpush2.msra.mxu0 0.0
    %2842 = vmatprep.subr.mxu0 0.0
    %2843 = vmatpush2.msra.mxu0 0.0
    %2844 = vmatprep.subr.mxu0 0.0
    %2845 = vmatpush2.msra.mxu0 0.0
    %2846 = vmatprep.subr.mxu0 0.0
    %2847 = vmatpush2.msra.mxu0 0.0
    %2848 = vmatprep.subr.mxu0 0.0
    %2849 = vmatpush2.msra.mxu0 0.0
    %2850 = vmatprep.subr.mxu0 0.0
    %2851 = vmatpush2.msra.mxu0 0.0
    %2852 = vmatprep.subr.mxu0 0.0
    %2853 = vmatpush2.msra.mxu0 0.0
    %2854 = vmatprep.subr.mxu0 0.0
    %2855 = vmatpush2.msra.mxu0 0.0
    %2856 = vmatprep.subr.mxu0 0.0
    %2857 = vmatpush2.msra.mxu0 0.0
    %2858 = vmatprep.subr.mxu0 0.0
    %2859 = vmatpush2.msra.mxu0 0.0
    %2860 = vmatprep.subr.mxu0 0.0
    %2861 = vmatpush2.msra.mxu0 0.0
    %2862 = vmatprep.subr.mxu0 0.0
    %2863 = vmatpush2.msra.mxu0 0.0
    %2864 = vmatprep.subr.mxu0 0.0
    %2865 = vmatpush2.msra.mxu0 0.0
    %2866 = vmatprep.subr.mxu0 0.0
    %2867 = vmatpush2.msra.mxu0 0.0
    %2868 = vmatprep.subr.mxu0 0.0
    %2869 = vmatpush2.msra.mxu0 0.0
    %2870 = vmatprep.subr.mxu0 0.0
    %2871 = vmatpush2.msra.mxu0 0.0
    %2872 = vmatprep.mubr.f32.mxu0 0.0
    %2873 = vmatmul.mubr.f32.gmra.mxu0 %v1308
    %v2874 = vpop.f32.mrf.mxu0
    %v2875 = vadd.f32 %v2806, %v2874
    %v2876 = vpop.f32.mrf.mxu0
    %v2877 = vadd.f32 %v2806, %v2876
    %2878 = vmatprep.mubr.f32.mxu0 0.0
    %2879 = vmatmul.mubr.f32.gmra.mxu0 %v1309
    %v2880 = vpop.f32.mrf.mxu0
    %v2881 = vadd.f32 %v2806, %v2880
    %v2882 = vpop.f32.mrf.mxu0
    %v2883 = vadd.f32 %v2806, %v2882
    %2884 = vmatprep.mubr.f32.mxu0 0.0
    %2885 = vmatmul.mubr.f32.gmra.mxu0 %v1310
    %v2886 = vpop.f32.mrf.mxu0
    %v2887 = vadd.f32 %v2806, %v2886
    %v2888 = vpop.f32.mrf.mxu0
    %v2889 = vadd.f32 %v2806, %v2888
    %2890 = vmatprep.mubr.f32.mxu0 0.0
    %2891 = vmatmul.mubr.f32.gmra.mxu0 %v1311
    %v2892 = vpop.f32.mrf.mxu0
    %v2893 = vadd.f32 %v2806, %v2892
    %v2894 = vpop.f32.mrf.mxu0
    %v2895 = vadd.f32 %v2806, %v2894
    %2896 = vdwg.mxu0
    %2897 = vmatprep.subr.mxu0 %v2791
    %2898 = vmatpush1.msra.mxu0 %v2790
    %2899 = vmatprep.subr.mxu0 %v2782
    %2900 = vmatpush1.msra.mxu0 %v2781
    %2901 = vmatprep.subr.mxu0 %v2773
    %2902 = vmatpush1.msra.mxu0 %v2772
    %2903 = vmatprep.subr.mxu0 %v2764
    %2904 = vmatpush1.msra.mxu0 %v2763
    %2905 = vmatprep.subr.mxu0 %v2755
    %2906 = vmatpush1.msra.mxu0 %v2754
    %2907 = vmatprep.subr.mxu0 %v2746
    %2908 = vmatpush1.msra.mxu0 %v2745
    %2909 = vmatprep.subr.mxu0 %v2737
    %2910 = vmatpush1.msra.mxu0 %v2736
    %2911 = vmatprep.subr.mxu0 %v2728
    %2912 = vmatpush1.msra.mxu0 %v2727
    %2913 = vmatprep.subr.mxu0 %v2719
    %2914 = vmatpush1.msra.mxu0 %v2718
    %2915 = vmatprep.subr.mxu0 %v2710
    %2916 = vmatpush1.msra.mxu0 %v2709
    %2917 = vmatprep.subr.mxu0 %v2701
    %2918 = vmatpush1.msra.mxu0 %v2700
    %2919 = vmatprep.subr.mxu0 %v2692
    %2920 = vmatpush1.msra.mxu0 %v2691
    %2921 = vmatprep.subr.mxu0 %v2683
    %2922 = vmatpush1.msra.mxu0 %v2682
    %2923 = vmatprep.subr.mxu0 %v2674
    %2924 = vmatpush1.msra.mxu0 %v2673
    %2925 = vmatprep.subr.mxu0 %v2665
    %2926 = vmatpush1.msra.mxu0 %v2664
    %2927 = vmatprep.subr.mxu0 %v2656
    %2928 = vmatpush1.msra.mxu0 %v2655
    %2929 = vmatprep.subr.mxu0 0.0
    %2930 = vmatpush2.msra.mxu0 0.0
    %2931 = vmatprep.subr.mxu0 0.0
    %2932 = vmatpush2.msra.mxu0 0.0
    %2933 = vmatprep.subr.mxu0 0.0
    %2934 = vmatpush2.msra.mxu0 0.0
    %2935 = vmatprep.subr.mxu0 0.0
    %2936 = vmatpush2.msra.mxu0 0.0
    %2937 = vmatprep.subr.mxu0 0.0
    %2938 = vmatpush2.msra.mxu0 0.0
    %2939 = vmatprep.subr.mxu0 0.0
    %2940 = vmatpush2.msra.mxu0 0.0
    %2941 = vmatprep.subr.mxu0 0.0
    %2942 = vmatpush2.msra.mxu0 0.0
    %2943 = vmatprep.subr.mxu0 0.0
    %2944 = vmatpush2.msra.mxu0 0.0
    %2945 = vmatprep.subr.mxu0 0.0
    %2946 = vmatpush2.msra.mxu0 0.0
    %2947 = vmatprep.subr.mxu0 0.0
    %2948 = vmatpush2.msra.mxu0 0.0
    %2949 = vmatprep.subr.mxu0 0.0
    %2950 = vmatpush2.msra.mxu0 0.0
    %2951 = vmatprep.subr.mxu0 0.0
    %2952 = vmatpush2.msra.mxu0 0.0
    %2953 = vmatprep.subr.mxu0 0.0
    %2954 = vmatpush2.msra.mxu0 0.0
    %2955 = vmatprep.subr.mxu0 0.0
    %2956 = vmatpush2.msra.mxu0 0.0
    %2957 = vmatprep.subr.mxu0 0.0
    %2958 = vmatpush2.msra.mxu0 0.0
    %2959 = vmatprep.subr.mxu0 0.0
    %2960 = vmatpush2.msra.mxu0 0.0
    %2961 = vmatprep.mubr.f32.mxu0 0.0
    %2962 = vmatmul.mubr.f32.gmra.mxu0 %v1308
    %v2963 = vpop.f32.mrf.mxu0
    %v2964 = vadd.f32 %v2806, %v2963
    %v2965 = vpop.f32.mrf.mxu0
    %v2966 = vadd.f32 %v2806, %v2965
    %2967 = vmatprep.mubr.f32.mxu0 0.0
    %2968 = vmatmul.mubr.f32.gmra.mxu0 %v1309
    %v2969 = vpop.f32.mrf.mxu0
    %v2970 = vadd.f32 %v2806, %v2969
    %v2971 = vpop.f32.mrf.mxu0
    %v2972 = vadd.f32 %v2806, %v2971
    %2973 = vmatprep.mubr.f32.mxu0 0.0
    %2974 = vmatmul.mubr.f32.gmra.mxu0 %v1310
    %v2975 = vpop.f32.mrf.mxu0
    %v2976 = vadd.f32 %v2806, %v2975
    %v2977 = vpop.f32.mrf.mxu0
    %v2978 = vadd.f32 %v2806, %v2977
    %2979 = vmatprep.mubr.f32.mxu0 0.0
    %2980 = vmatmul.mubr.f32.gmra.mxu0 %v1311
    %v2981 = vpop.f32.mrf.mxu0
    %v2982 = vadd.f32 %v2806, %v2981
    %v2983 = vpop.f32.mrf.mxu0
    %v2984 = vadd.f32 %v2806, %v2983
    %2985 = vdwg.mxu0
    %2986 = vmatprep.subr.mxu0 %v2793
    %2987 = vmatpush1.msra.mxu0 %v2792
    %2988 = vmatprep.subr.mxu0 %v2784
    %2989 = vmatpush1.msra.mxu0 %v2783
    %2990 = vmatprep.subr.mxu0 %v2775
    %2991 = vmatpush1.msra.mxu0 %v2774
    %2992 = vmatprep.subr.mxu0 %v2766
    %2993 = vmatpush1.msra.mxu0 %v2765
    %2994 = vmatprep.subr.mxu0 %v2757
    %2995 = vmatpush1.msra.mxu0 %v2756
    %2996 = vmatprep.subr.mxu0 %v2748
    %2997 = vmatpush1.msra.mxu0 %v2747
    %2998 = vmatprep.subr.mxu0 %v2739
    %2999 = vmatpush1.msra.mxu0 %v2738
    %3000 = vmatprep.subr.mxu0 %v2730
    %3001 = vmatpush1.msra.mxu0 %v2729
    %3002 = vmatprep.subr.mxu0 %v2721
    %3003 = vmatpush1.msra.mxu0 %v2720
    %3004 = vmatprep.subr.mxu0 %v2712
    %3005 = vmatpush1.msra.mxu0 %v2711
    %3006 = vmatprep.subr.mxu0 %v2703
    %3007 = vmatpush1.msra.mxu0 %v2702
    %3008 = vmatprep.subr.mxu0 %v2694
    %3009 = vmatpush1.msra.mxu0 %v2693
    %3010 = vmatprep.subr.mxu0 %v2685
    %3011 = vmatpush1.msra.mxu0 %v2684
    %3012 = vmatprep.subr.mxu0 %v2676
    %3013 = vmatpush1.msra.mxu0 %v2675
    %3014 = vmatprep.subr.mxu0 %v2667
    %3015 = vmatpush1.msra.mxu0 %v2666
    %3016 = vmatprep.subr.mxu0 %v2658
    %3017 = vmatpush1.msra.mxu0 %v2657
    %3018 = vmatprep.subr.mxu0 0.0
    %3019 = vmatpush2.msra.mxu0 0.0
    %3020 = vmatprep.subr.mxu0 0.0
    %3021 = vmatpush2.msra.mxu0 0.0
    %3022 = vmatprep.subr.mxu0 0.0
    %3023 = vmatpush2.msra.mxu0 0.0
    %3024 = vmatprep.subr.mxu0 0.0
    %3025 = vmatpush2.msra.mxu0 0.0
    %3026 = vmatprep.subr.mxu0 0.0
    %3027 = vmatpush2.msra.mxu0 0.0
    %3028 = vmatprep.subr.mxu0 0.0
    %3029 = vmatpush2.msra.mxu0 0.0
    %3030 = vmatprep.subr.mxu0 0.0
    %3031 = vmatpush2.msra.mxu0 0.0
    %3032 = vmatprep.subr.mxu0 0.0
    %3033 = vmatpush2.msra.mxu0 0.0
    %3034 = vmatprep.subr.mxu0 0.0
    %3035 = vmatpush2.msra.mxu0 0.0
    %3036 = vmatprep.subr.mxu0 0.0
    %3037 = vmatpush2.msra.mxu0 0.0
    %3038 = vmatprep.subr.mxu0 0.0
    %3039 = vmatpush2.msra.mxu0 0.0
    %3040 = vmatprep.subr.mxu0 0.0
    %3041 = vmatpush2.msra.mxu0 0.0
    %3042 = vmatprep.subr.mxu0 0.0
    %3043 = vmatpush2.msra.mxu0 0.0
    %3044 = vmatprep.subr.mxu0 0.0
    %3045 = vmatpush2.msra.mxu0 0.0
    %3046 = vmatprep.subr.mxu0 0.0
    %3047 = vmatpush2.msra.mxu0 0.0
    %3048 = vmatprep.subr.mxu0 0.0
    %3049 = vmatpush2.msra.mxu0 0.0
    %3050 = vmatprep.mubr.f32.mxu0 0.0
    %3051 = vmatmul.mubr.f32.gmra.mxu0 %v1308
    %v3052 = vpop.f32.mrf.mxu0
    %v3053 = vadd.f32 %v2806, %v3052
    %v3054 = vpop.f32.mrf.mxu0
    %v3055 = vadd.f32 %v2806, %v3054
    %3056 = vmatprep.mubr.f32.mxu0 0.0
    %3057 = vmatmul.mubr.f32.gmra.mxu0 %v1309
    %v3058 = vpop.f32.mrf.mxu0
    %v3059 = vadd.f32 %v2806, %v3058
    %v3060 = vpop.f32.mrf.mxu0
    %v3061 = vadd.f32 %v2806, %v3060
    %3062 = vmatprep.mubr.f32.mxu0 0.0
    %3063 = vmatmul.mubr.f32.gmra.mxu0 %v1310
    %v3064 = vpop.f32.mrf.mxu0
    %v3065 = vadd.f32 %v2806, %v3064
    %v3066 = vpop.f32.mrf.mxu0
    %v3067 = vadd.f32 %v2806, %v3066
    %3068 = vmatprep.mubr.f32.mxu0 0.0
    %3069 = vmatmul.mubr.f32.gmra.mxu0 %v1311
    %v3070 = vpop.f32.mrf.mxu0
    %v3071 = vadd.f32 %v2806, %v3070
    %v3072 = vpop.f32.mrf.mxu0
    %v3073 = vadd.f32 %v2806, %v3072
    %3074 = vdwg.mxu0
    %3075 = vmatprep.subr.mxu0 %v2795
    %3076 = vmatpush1.msra.mxu0 %v2794
    %3077 = vmatprep.subr.mxu0 %v2786
    %3078 = vmatpush1.msra.mxu0 %v2785
    %3079 = vmatprep.subr.mxu0 %v2777
    %3080 = vmatpush1.msra.mxu0 %v2776
    %3081 = vmatprep.subr.mxu0 %v2768
    %3082 = vmatpush1.msra.mxu0 %v2767
    %3083 = vmatprep.subr.mxu0 %v2759
    %3084 = vmatpush1.msra.mxu0 %v2758
    %3085 = vmatprep.subr.mxu0 %v2750
    %3086 = vmatpush1.msra.mxu0 %v2749
    %3087 = vmatprep.subr.mxu0 %v2741
    %3088 = vmatpush1.msra.mxu0 %v2740
    %3089 = vmatprep.subr.mxu0 %v2732
    %3090 = vmatpush1.msra.mxu0 %v2731
    %3091 = vmatprep.subr.mxu0 %v2723
    %3092 = vmatpush1.msra.mxu0 %v2722
    %3093 = vmatprep.subr.mxu0 %v2714
    %3094 = vmatpush1.msra.mxu0 %v2713
    %3095 = vmatprep.subr.mxu0 %v2705
    %3096 = vmatpush1.msra.mxu0 %v2704
    %3097 = vmatprep.subr.mxu0 %v2696
    %3098 = vmatpush1.msra.mxu0 %v2695
    %3099 = vmatprep.subr.mxu0 %v2687
    %3100 = vmatpush1.msra.mxu0 %v2686
    %3101 = vmatprep.subr.mxu0 %v2678
    %3102 = vmatpush1.msra.mxu0 %v2677
    %3103 = vmatprep.subr.mxu0 %v2669
    %3104 = vmatpush1.msra.mxu0 %v2668
    %3105 = vmatprep.subr.mxu0 %v2660
    %3106 = vmatpush1.msra.mxu0 %v2659
    %3107 = vmatprep.subr.mxu0 0.0
    %3108 = vmatpush2.msra.mxu0 0.0
    %3109 = vmatprep.subr.mxu0 0.0
    %3110 = vmatpush2.msra.mxu0 0.0
    %3111 = vmatprep.subr.mxu0 0.0
    %3112 = vmatpush2.msra.mxu0 0.0
    %3113 = vmatprep.subr.mxu0 0.0
    %3114 = vmatpush2.msra.mxu0 0.0
    %3115 = vmatprep.subr.mxu0 0.0
    %3116 = vmatpush2.msra.mxu0 0.0
    %3117 = vmatprep.subr.mxu0 0.0
    %3118 = vmatpush2.msra.mxu0 0.0
    %3119 = vmatprep.subr.mxu0 0.0
    %3120 = vmatpush2.msra.mxu0 0.0
    %3121 = vmatprep.subr.mxu0 0.0
    %3122 = vmatpush2.msra.mxu0 0.0
    %3123 = vmatprep.subr.mxu0 0.0
    %3124 = vmatpush2.msra.mxu0 0.0
    %3125 = vmatprep.subr.mxu0 0.0
    %3126 = vmatpush2.msra.mxu0 0.0
    %3127 = vmatprep.subr.mxu0 0.0
    %3128 = vmatpush2.msra.mxu0 0.0
    %3129 = vmatprep.subr.mxu0 0.0
    %3130 = vmatpush2.msra.mxu0 0.0
    %3131 = vmatprep.subr.mxu0 0.0
    %3132 = vmatpush2.msra.mxu0 0.0
    %3133 = vmatprep.subr.mxu0 0.0
    %3134 = vmatpush2.msra.mxu0 0.0
    %3135 = vmatprep.subr.mxu0 0.0
    %3136 = vmatpush2.msra.mxu0 0.0
    %3137 = vmatprep.subr.mxu0 0.0
    %3138 = vmatpush2.msra.mxu0 0.0
    %3139 = vmatprep.mubr.f32.mxu0 0.0
    %3140 = vmatmul.mubr.f32.gmra.mxu0 %v1308
    %v3141 = vpop.f32.mrf.mxu0
    %v3142 = vadd.f32 %v2806, %v3141
    %v3143 = vpop.f32.mrf.mxu0
    %v3144 = vadd.f32 %v2806, %v3143
    %3145 = vmatprep.mubr.f32.mxu0 0.0
    %3146 = vmatmul.mubr.f32.gmra.mxu0 %v1309
    %v3147 = vpop.f32.mrf.mxu0
    %v3148 = vadd.f32 %v2806, %v3147
    %v3149 = vpop.f32.mrf.mxu0
    %v3150 = vadd.f32 %v2806, %v3149
    %3151 = vmatprep.mubr.f32.mxu0 0.0
    %3152 = vmatmul.mubr.f32.gmra.mxu0 %v1310
    %v3153 = vpop.f32.mrf.mxu0
    %v3154 = vadd.f32 %v2806, %v3153
    %v3155 = vpop.f32.mrf.mxu0
    %v3156 = vadd.f32 %v2806, %v3155
    %3157 = vmatprep.mubr.f32.mxu0 0.0
    %3158 = vmatmul.mubr.f32.gmra.mxu0 %v1311
    %v3159 = vpop.f32.mrf.mxu0
    %v3160 = vadd.f32 %v2806, %v3159
    %v3161 = vpop.f32.mrf.mxu0
    %v3162 = vadd.f32 %v2806, %v3161
    %3163 = vdwg.mxu0
    %3164 = vmatprep.subr.mxu0 0.0
    %3165 = vmatpush1.msra.mxu0 %v2796
    %3166 = vmatprep.subr.mxu0 0.0
    %3167 = vmatpush1.msra.mxu0 %v2787
    %3168 = vmatprep.subr.mxu0 0.0
    %3169 = vmatpush1.msra.mxu0 %v2778
    %3170 = vmatprep.subr.mxu0 0.0
    %3171 = vmatpush1.msra.mxu0 %v2769
    %3172 = vmatprep.subr.mxu0 0.0
    %3173 = vmatpush1.msra.mxu0 %v2760
    %3174 = vmatprep.subr.mxu0 0.0
    %3175 = vmatpush1.msra.mxu0 %v2751
    %3176 = vmatprep.subr.mxu0 0.0
    %3177 = vmatpush1.msra.mxu0 %v2742
    %3178 = vmatprep.subr.mxu0 0.0
    %3179 = vmatpush1.msra.mxu0 %v2733
    %3180 = vmatprep.subr.mxu0 0.0
    %3181 = vmatpush1.msra.mxu0 %v2724
    %3182 = vmatprep.subr.mxu0 0.0
    %3183 = vmatpush1.msra.mxu0 %v2715
    %3184 = vmatprep.subr.mxu0 0.0
    %3185 = vmatpush1.msra.mxu0 %v2706
    %3186 = vmatprep.subr.mxu0 0.0
    %3187 = vmatpush1.msra.mxu0 %v2697
    %3188 = vmatprep.subr.mxu0 0.0
    %3189 = vmatpush1.msra.mxu0 %v2688
    %3190 = vmatprep.subr.mxu0 0.0
    %3191 = vmatpush1.msra.mxu0 %v2679
    %3192 = vmatprep.subr.mxu0 0.0
    %3193 = vmatpush1.msra.mxu0 %v2670
    %3194 = vmatprep.subr.mxu0 0.0
    %3195 = vmatpush1.msra.mxu0 %v2661
    %3196 = vmatprep.subr.mxu0 0.0
    %3197 = vmatpush2.msra.mxu0 0.0
    %3198 = vmatprep.subr.mxu0 0.0
    %3199 = vmatpush2.msra.mxu0 0.0
    %3200 = vmatprep.subr.mxu0 0.0
    %3201 = vmatpush2.msra.mxu0 0.0
    %3202 = vmatprep.subr.mxu0 0.0
    %3203 = vmatpush2.msra.mxu0 0.0
    %3204 = vmatprep.subr.mxu0 0.0
    %3205 = vmatpush2.msra.mxu0 0.0
    %3206 = vmatprep.subr.mxu0 0.0
    %3207 = vmatpush2.msra.mxu0 0.0
    %3208 = vmatprep.subr.mxu0 0.0
    %3209 = vmatpush2.msra.mxu0 0.0
    %3210 = vmatprep.subr.mxu0 0.0
    %3211 = vmatpush2.msra.mxu0 0.0
    %3212 = vmatprep.subr.mxu0 0.0
    %3213 = vmatpush2.msra.mxu0 0.0
    %3214 = vmatprep.subr.mxu0 0.0
    %3215 = vmatpush2.msra.mxu0 0.0
    %3216 = vmatprep.subr.mxu0 0.0
    %3217 = vmatpush2.msra.mxu0 0.0
    %3218 = vmatprep.subr.mxu0 0.0
    %3219 = vmatpush2.msra.mxu0 0.0
    %3220 = vmatprep.subr.mxu0 0.0
    %3221 = vmatpush2.msra.mxu0 0.0
    %3222 = vmatprep.subr.mxu0 0.0
    %3223 = vmatpush2.msra.mxu0 0.0
    %3224 = vmatprep.subr.mxu0 0.0
    %3225 = vmatpush2.msra.mxu0 0.0
    %3226 = vmatprep.subr.mxu0 0.0
    %3227 = vmatpush2.msra.mxu0 0.0
    %3228 = vmatprep.mubr.f32.mxu0 0.0
    %3229 = vmatmul.mubr.f32.gmra.mxu0 %v1308
    %v3230 = vpop.f32.mrf.mxu0
    %v3231 = vadd.f32 %v2806, %v3230
    %v3232 = vpop.f32.mrf.mxu0
    %3233 = vmatprep.mubr.f32.mxu0 0.0
    %3234 = vmatmul.mubr.f32.gmra.mxu0 %v1309
    %v3235 = vpop.f32.mrf.mxu0
    %v3236 = vadd.f32 %v2806, %v3235
    %v3237 = vpop.f32.mrf.mxu0
    %3238 = vmatprep.mubr.f32.mxu0 0.0
    %3239 = vmatmul.mubr.f32.gmra.mxu0 %v1310
    %v3240 = vpop.f32.mrf.mxu0
    %v3241 = vadd.f32 %v2806, %v3240
    %v3242 = vpop.f32.mrf.mxu0
    %3243 = vmatprep.mubr.f32.mxu0 0.0
    %3244 = vmatmul.mubr.f32.gmra.mxu0 %v1311
    %v3245 = vpop.f32.mrf.mxu0
    %v3246 = vadd.f32 %v2806, %v3245
    %v3247 = vpop.f32.mrf.mxu0
    %3248 = vdwg.mxu0
    %v3249 = vmax.f32 %v2875, 0.0
    %v3250 = vmax.f32 %v2877, 0.0
    %v3251 = vmax.f32 %v2964, 0.0
    %v3252 = vmax.f32 %v2966, 0.0
    %v3253 = vmax.f32 %v3053, 0.0
    %v3254 = vmax.f32 %v3055, 0.0
    %v3255 = vmax.f32 %v3142, 0.0
    %v3256 = vmax.f32 %v3144, 0.0
    %v3257 = vmax.f32 %v3231, 0.0
    %v3258 = vmax.f32 %v2881, 0.0
    %v3259 = vmax.f32 %v2883, 0.0
    %v3260 = vmax.f32 %v2970, 0.0
    %v3261 = vmax.f32 %v2972, 0.0
    %v3262 = vmax.f32 %v3059, 0.0
    %v3263 = vmax.f32 %v3061, 0.0
    %v3264 = vmax.f32 %v3148, 0.0
    %v3265 = vmax.f32 %v3150, 0.0
    %v3266 = vmax.f32 %v3236, 0.0
    %v3267 = vmax.f32 %v2887, 0.0
    %v3268 = vmax.f32 %v2889, 0.0
    %v3269 = vmax.f32 %v2976, 0.0
    %v3270 = vmax.f32 %v2978, 0.0
    %v3271 = vmax.f32 %v3065, 0.0
    %v3272 = vmax.f32 %v3067, 0.0
    %v3273 = vmax.f32 %v3154, 0.0
    %v3274 = vmax.f32 %v3156, 0.0
    %v3275 = vmax.f32 %v3241, 0.0
    %v3276 = vmax.f32 %v2893, 0.0
    %v3277 = vmax.f32 %v2895, 0.0
    %v3278 = vmax.f32 %v2982, 0.0
    %v3279 = vmax.f32 %v2984, 0.0
    %v3280 = vmax.f32 %v3071, 0.0
    %v3281 = vmax.f32 %v3073, 0.0
    %v3282 = vmax.f32 %v3160, 0.0
    %v3283 = vmax.f32 %v3162, 0.0
    %v3284 = vmax.f32 %v3246, 0.0
    %s3285 = scalar_lea.vmem %s9, 288
    %3286 = vst [vmem:[%s3285] sm:$0xff] %v3249
    %3287 = vst [vmem:[%s3285 + $0x8] sm:$0xff] %v3250
    %3288 = vst [vmem:[%s3285 + $0x10] sm:$0xff] %v3251
    %3289 = vst [vmem:[%s3285 + $0x18] sm:$0xff] %v3252
    %3290 = vst [vmem:[%s3285 + $0x20] sm:$0xff] %v3253
    %3291 = vst [vmem:[%s3285 + $0x28] sm:$0xff] %v3254
    %3292 = vst [vmem:[%s3285 + $0x30] sm:$0xff] %v3255
    %3293 = vst [vmem:[%s3285 + $0x38] sm:$0xff] %v3256
    %3294 = vst.msk [vmem:[%s3285 + $0x40] sm:$0xff] %vm1951, %v3257
    %3295 = vst [vmem:[%s3285 + $0x48] sm:$0xff] %v3258
    %3296 = vst [vmem:[%s3285 + $0x50] sm:$0xff] %v3259
    %3297 = vst [vmem:[%s3285 + $0x58] sm:$0xff] %v3260
    %3298 = vst [vmem:[%s3285 + $0x60] sm:$0xff] %v3261
    %3299 = vst [vmem:[%s3285 + $0x68] sm:$0xff] %v3262
    %3300 = vst [vmem:[%s3285 + $0x70] sm:$0xff] %v3263
    %3301 = vst [vmem:[%s3285 + $0x78] sm:$0xff] %v3264
    %3302 = vst [vmem:[%s3285 + $0x80] sm:$0xff] %v3265
    %3303 = vst.msk [vmem:[%s3285 + $0x88] sm:$0xff] %vm1951, %v3266
    %s3304 = scalar_lea.vmem %s9, 720
    %3305 = vst [vmem:[%s3304] sm:$0xff] %v3267
    %3306 = vst [vmem:[%s3304 + $0x8] sm:$0xff] %v3268
    %3307 = vst [vmem:[%s3304 + $0x10] sm:$0xff] %v3269
    %3308 = vst [vmem:[%s3304 + $0x18] sm:$0xff] %v3270
    %3309 = vst [vmem:[%s3304 + $0x20] sm:$0xff] %v3271
    %3310 = vst [vmem:[%s3304 + $0x28] sm:$0xff] %v3272
    %3311 = vst [vmem:[%s3304 + $0x30] sm:$0xff] %v3273
    %3312 = vst [vmem:[%s3304 + $0x38] sm:$0xff] %v3274
    %3313 = vst.msk [vmem:[%s3304 + $0x40] sm:$0xff] %vm1951, %v3275
    %3314 = vst [vmem:[%s3304 + $0x48] sm:$0xff] %v3276
    %3315 = vst [vmem:[%s3304 + $0x50] sm:$0xff] %v3277
    %3316 = vst [vmem:[%s3304 + $0x58] sm:$0xff] %v3278
    %3317 = vst [vmem:[%s3304 + $0x60] sm:$0xff] %v3279
    %3318 = vst [vmem:[%s3304 + $0x68] sm:$0xff] %v3280
    %3319 = vst [vmem:[%s3304 + $0x70] sm:$0xff] %v3281
    %3320 = vst [vmem:[%s3304 + $0x78] sm:$0xff] %v3282
    %3321 = vst [vmem:[%s3304 + $0x80] sm:$0xff] %v3283
    %3322 = vst.msk [vmem:[%s3304 + $0x88] sm:$0xff] %vm1951, %v3284
    // Predicated region
    $region74: #{_lambda_.1} parent=1 // pred_check
      _
    $region75: #{_lambda_.1} parent=1 // pred_check_branch
      %3324 = sbr.rel (0) target = $region77
    $region76: #{_lambda_.1} parent=1 // pred_region
      _
    $region77: #{_lambda_.1} parent=1 // pred_fallthru
      _
    // Predicated region
    $region78: #{_lambda_.1} parent=1 // pred_check
      _
    $region79: #{_lambda_.1} parent=1 // pred_check_branch
      %3326 = sbr.rel (0) target = $region81
    $region80: #{_lambda_.1} parent=1 // pred_region
      _
    $region81: #{_lambda_.1} parent=1 // pred_fallthru
      _
    %3327 = vsyncpa [#allocation5], 1
    %3328 = vsyncpa [#allocation7], 1
    %3329 = vsyncpa [#allocation10], 1
    %3330 = vsyncpa [#allocation13], 1
    %3331 = vsyncpa [#allocation16], 1

</llo_original>
